<compile_context>
chip_gen: v7x
topology: tpu7x:2x2x1
jax: 0.10.0
libtpu: 0.0.40
codegen_flags: <defaults>
</compile_context>

<pallas_src>
import math
import jax
import jax.numpy as jnp
from jax.experimental import pallas as pl
from jax.experimental.pallas import tpu as pltpu

D_MODEL = 256
NUM_HEADS = 8
D_HEAD = D_MODEL // NUM_HEADS


# ------------------------------ fused kernel -------------------------------

def _mha_kernel(q_ref, k_ref, v_ref,
                wq_ref, wk_ref, wv_ref, wo_ref,
                bq_ref, bk_ref, bv_ref, bo_ref,
                o_ref):
    """One batch element per grid step.
    q/k/v refs: (1, S, D) bf16; wq/wk/wv: (H, D, dh) bf16; wo: (H, dh, D) bf16;
    bq/bk/bv: (H, 1, dh) f32; bo: (1, D) f32; output: (1, S, D) f32."""
    H, D, dh = wq_ref.shape
    S = q_ref.shape[1]
    scale = 1.0 / math.sqrt(dh)
    bmm = (((2,), (1,)), ((0,), (0,)))          # (H,S,K) @ (H,K,N) -> (H,S,N)

    def project(x_ref, w_ref, b_ref):
        x = jnp.broadcast_to(x_ref[0], (H, S, D))                  # (H,S,D) bf16
        y = jax.lax.dot_general(x, w_ref[...], bmm,
                                preferred_element_type=jnp.float32)
        return y + b_ref[...]                                      # (H,S,dh) f32

    qh = project(q_ref, wq_ref, bq_ref) * scale   # fold 1/sqrt(dh) into q
    kh = project(k_ref, wk_ref, bk_ref)
    vh = project(v_ref, wv_ref, bv_ref)

    # TODO(synk): optional attention `mask` of forward() not wired in (call uses mask=None).
    s = jax.lax.dot_general(                       # scores (H, S, S) f32
        qh.astype(jnp.bfloat16), kh.astype(jnp.bfloat16),
        (((2,), (2,)), ((0,), (0,))),              # contract d_head, batch heads
        preferred_element_type=jnp.float32)

    m = jnp.max(s, axis=-1, keepdims=True)         # softmax in f32
    p = jnp.exp(s - m)
    l = jnp.sum(p, axis=-1, keepdims=True)
    p = p * pl.reciprocal(l, approx=True)

    z = jax.lax.dot_general(                       # context (H, S, dh) f32
        p.astype(jnp.bfloat16), vh.astype(jnp.bfloat16), bmm,
        preferred_element_type=jnp.float32)

    out_h = jax.lax.dot_general(                   # per-head output contribution
        z.astype(jnp.bfloat16), wo_ref[...], bmm,
        preferred_element_type=jnp.float32)        # (H, S, D) f32
    out = jnp.sum(out_h, axis=0) + bo_ref[...]     # combine heads + W_o bias -> (S, D)
    o_ref[0] = out.astype(o_ref.dtype)


# --------------------------- host-side wrappers -----------------------------

def _prep_params(params, H, dh):
    """Re-lay PyTorch-convention (out, in) weights into per-head bf16 tensors."""
    wq, bq = params["W_q"]
    wk, bk = params["W_k"]
    wv, bv = params["W_v"]
    wo, bo = params["W_o"]
    D = wq.shape[1]

    def qkv(w, b):
        # y = x @ W.T ; column block h of W.T is head h -> (H, D_in, dh)
        w_h = jnp.transpose(w.T.reshape(D, H, dh), (1, 0, 2)).astype(jnp.bfloat16)
        b_h = b.reshape(H, 1, dh).astype(jnp.float32)
        return w_h, b_h

    wq_h, bq_h = qkv(wq, bq)
    wk_h, bk_h = qkv(wk, bk)
    wv_h, bv_h = qkv(wv, bv)
    # out = sum_h z_h @ W_o.T[h*dh:(h+1)*dh, :]  -> (H, dh, D)
    wo_h = wo.T.reshape(H, dh, D).astype(jnp.bfloat16)
    bo_2 = bo.reshape(1, D).astype(jnp.float32)
    return wq_h, wk_h, wv_h, wo_h, bq_h, bk_h, bv_h, bo_2


def multi_head_attention(params, Q, K, V):
    """Q, K, V: (B, S, d_model) f32 -> (B, S, d_model) f32. Matches forward(mask=None)."""
    B, S, D = Q.shape
    H, dh = NUM_HEADS, D // NUM_HEADS
    wq_h, wk_h, wv_h, wo_h, bq_h, bk_h, bv_h, bo_2 = _prep_params(params, H, dh)

    qb = Q.astype(jnp.bfloat16)
    kb = K.astype(jnp.bfloat16)
    vb = V.astype(jnp.bfloat16)

    act_spec   = pl.BlockSpec((1, S, D),  lambda b: (b, 0, 0))
    w_qkv_spec = pl.BlockSpec((H, D, dh), lambda b: (0, 0, 0))   # VMEM-resident
    w_o_spec   = pl.BlockSpec((H, dh, D), lambda b: (0, 0, 0))
    b_qkv_spec = pl.BlockSpec((H, 1, dh), lambda b: (0, 0, 0))
    b_o_spec   = pl.BlockSpec((1, D),     lambda b: (0, 0))

    return pl.pallas_call(
        _mha_kernel,
        out_shape=jax.ShapeDtypeStruct((B, S, D), jnp.float32),
        grid=(B,),
        in_specs=[act_spec, act_spec, act_spec,
                  w_qkv_spec, w_qkv_spec, w_qkv_spec, w_o_spec,
                  b_qkv_spec, b_qkv_spec, b_qkv_spec, b_o_spec],
        out_specs=pl.BlockSpec((1, S, D), lambda b: (b, 0, 0)),
        compiler_params=pltpu.CompilerParams(
            dimension_semantics=("parallel",)),
    )(qb, kb, vb, wq_h, wk_h, wv_h, wo_h, bq_h, bk_h, bv_h, bo_2)


# ------------------------------ init / reference ----------------------------

def init_params(key, d_model=D_MODEL):
    """Deterministic init mimicking nn.Linear defaults (uniform +-1/sqrt(fan_in))."""
    bound = 1.0 / math.sqrt(d_model)
    keys = jax.random.split(key, 8)

    def lin(kw, kb):
        w = jax.random.uniform(kw, (d_model, d_model), jnp.float32, -bound, bound)
        b = jax.random.uniform(kb, (d_model,), jnp.float32, -bound, bound)
        return w, b

    return {
        "W_q": lin(keys[0], keys[1]),
        "W_k": lin(keys[2], keys[3]),
        "W_v": lin(keys[4], keys[5]),
        "W_o": lin(keys[6], keys[7]),
    }


def multi_head_attention_ref(params, Q, K, V):
    """Pure-JAX f32 reference for correctness checking."""
    B, S, D = Q.shape
    H, dh = NUM_HEADS, D // NUM_HEADS

    def proj(x, wb):
        w, b = wb
        y = x @ w.T + b
        return y.reshape(B, S, H, dh).transpose(0, 2, 1, 3)

    q, k, v = proj(Q, params["W_q"]), proj(K, params["W_k"]), proj(V, params["W_v"])
    s = jnp.einsum("bhqd,bhkd->bhqk", q, k) / math.sqrt(dh)
    p = jax.nn.softmax(s, axis=-1)
    z = jnp.einsum("bhqk,bhkd->bhqd", p, v)
    z = z.transpose(0, 2, 1, 3).reshape(B, S, D)
    wo, bo = params["W_o"]
    return z @ wo.T + bo


if __name__ == "__main__":
    key = jax.random.PRNGKey(0)
    k_params, k_x = jax.random.split(key)

    B, S = 2, 8
    params = init_params(k_params)
    x = jax.random.normal(k_x, (B, S, D_MODEL), jnp.float32)

    out = jax.jit(multi_head_attention)(params, x, x, x)
    out = jax.block_until_ready(out)

    ref = multi_head_attention_ref(params, x, x, x)
    assert out.shape == (B, S, D_MODEL)
    # bf16 MXU operands + approx reciprocal => tolerance loosened vs f32 reference.
    assert jnp.allclose(out, ref, atol=5e-2, rtol=5e-2), "Pallas output mismatch vs reference"

    print("KERNEL_OK")
</pallas_src>

<mosaic_0001>
module attributes {stable_mosaic.version = 11 : i64} {
  func.func @_mha_kernel(%arg0: i32, %arg1: memref<1x8x256xbf16, #tpu.memory_space<vmem>>, %arg2: memref<1x8x256xbf16, #tpu.memory_space<vmem>>, %arg3: memref<1x8x256xbf16, #tpu.memory_space<vmem>>, %arg4: memref<8x256x32xbf16, #tpu.memory_space<vmem>>, %arg5: memref<8x256x32xbf16, #tpu.memory_space<vmem>>, %arg6: memref<8x256x32xbf16, #tpu.memory_space<vmem>>, %arg7: memref<8x32x256xbf16, #tpu.memory_space<vmem>>, %arg8: memref<8x1x32xf32, #tpu.memory_space<vmem>>, %arg9: memref<8x1x32xf32, #tpu.memory_space<vmem>>, %arg10: memref<8x1x32xf32, #tpu.memory_space<vmem>>, %arg11: memref<1x256xf32, #tpu.memory_space<vmem>>, %arg12: memref<1x8x256xf32, #tpu.memory_space<vmem>>) attributes {dimension_semantics = [#tpu.dimension_semantics<parallel>], iteration_bounds = array<i64: 2>, scalar_prefetch = 0 : i64, scratch_operands = 0 : i64, tpu.core_type = #tpu.core_type<tc>, window_params = [{transform_indices = @transform_0, window_bounds = array<i64: 1, 8, 256>}, {transform_indices = @transform_1, window_bounds = array<i64: 1, 8, 256>}, {transform_indices = @transform_2, window_bounds = array<i64: 1, 8, 256>}, {pipeline_mode = #tpu.pipeline_mode<synchronous>, transform_indices = @transform_3, window_bounds = array<i64: 8, 256, 32>}, {pipeline_mode = #tpu.pipeline_mode<synchronous>, transform_indices = @transform_4, window_bounds = array<i64: 8, 256, 32>}, {pipeline_mode = #tpu.pipeline_mode<synchronous>, transform_indices = @transform_5, window_bounds = array<i64: 8, 256, 32>}, {pipeline_mode = #tpu.pipeline_mode<synchronous>, transform_indices = @transform_6, window_bounds = array<i64: 8, 32, 256>}, {pipeline_mode = #tpu.pipeline_mode<synchronous>, transform_indices = @transform_7, window_bounds = array<i64: 8, 1, 32>}, {pipeline_mode = #tpu.pipeline_mode<synchronous>, transform_indices = @transform_8, window_bounds = array<i64: 8, 1, 32>}, {pipeline_mode = #tpu.pipeline_mode<synchronous>, transform_indices = @transform_9, window_bounds = array<i64: 8, 1, 32>}, {pipeline_mode = #tpu.pipeline_mode<synchronous>, transform_indices = @transform_10, window_bounds = array<i64: 1, 256>}, {transform_indices = @transform_11, window_bounds = array<i64: 1, 8, 256>}]} {
    %c0 = arith.constant 0 : index
    %c0_0 = arith.constant 0 : index
    %c0_1 = arith.constant 0 : index
    %0 = vector.load %arg1[%c0, %c0_0, %c0_1] : memref<1x8x256xbf16, #tpu.memory_space<vmem>>, vector<1x8x256xbf16>
    %1 = vector.shape_cast %0 : vector<1x8x256xbf16> to vector<8x256xbf16>
    %2 = vector.shape_cast %1 : vector<8x256xbf16> to vector<1x8x256xbf16>
    %3 = vector.broadcast %2 : vector<1x8x256xbf16> to vector<8x8x256xbf16>
    %c0_2 = arith.constant 0 : index
    %c0_3 = arith.constant 0 : index
    %c0_4 = arith.constant 0 : index
    %4 = vector.load %arg4[%c0_2, %c0_3, %c0_4] : memref<8x256x32xbf16, #tpu.memory_space<vmem>>, vector<8x256x32xbf16>
    %cst = arith.constant dense<0.000000e+00> : vector<8x8x32xf32>
    %5 = tpu.matmul %3, %4, %cst {dimension_numbers = #tpu.dot_dimension_numbers<[2], [1], [1], [2], [0, 0, 0, 1, 1, 2], [0], [0]>} : vector<8x8x256xbf16>, vector<8x256x32xbf16>, vector<8x8x32xf32> -> vector<8x8x32xf32>
    %c0_5 = arith.constant 0 : index
    %c0_6 = arith.constant 0 : index
    %c0_7 = arith.constant 0 : index
    %6 = vector.load %arg8[%c0_5, %c0_6, %c0_7] : memref<8x1x32xf32, #tpu.memory_space<vmem>>, vector<8x1x32xf32>
    %7 = vector.broadcast %6 : vector<8x1x32xf32> to vector<8x8x32xf32>
    %8 = arith.addf %5, %7 : vector<8x8x32xf32>
    %cst_8 = arith.constant 0.176776692 : f32
    %9 = vector.broadcast %cst_8 : f32 to vector<8x8x32xf32>
    %10 = arith.mulf %8, %9 : vector<8x8x32xf32>
    %c0_9 = arith.constant 0 : index
    %c0_10 = arith.constant 0 : index
    %c0_11 = arith.constant 0 : index
    %11 = vector.load %arg2[%c0_9, %c0_10, %c0_11] : memref<1x8x256xbf16, #tpu.memory_space<vmem>>, vector<1x8x256xbf16>
    %12 = vector.shape_cast %11 : vector<1x8x256xbf16> to vector<8x256xbf16>
    %13 = vector.shape_cast %12 : vector<8x256xbf16> to vector<1x8x256xbf16>
    %14 = vector.broadcast %13 : vector<1x8x256xbf16> to vector<8x8x256xbf16>
    %c0_12 = arith.constant 0 : index
    %c0_13 = arith.constant 0 : index
    %c0_14 = arith.constant 0 : index
    %15 = vector.load %arg5[%c0_12, %c0_13, %c0_14] : memref<8x256x32xbf16, #tpu.memory_space<vmem>>, vector<8x256x32xbf16>
    %cst_15 = arith.constant dense<0.000000e+00> : vector<8x8x32xf32>
    %16 = tpu.matmul %14, %15, %cst_15 {dimension_numbers = #tpu.dot_dimension_numbers<[2], [1], [1], [2], [0, 0, 0, 1, 1, 2], [0], [0]>} : vector<8x8x256xbf16>, vector<8x256x32xbf16>, vector<8x8x32xf32> -> vector<8x8x32xf32>
    %c0_16 = arith.constant 0 : index
    %c0_17 = arith.constant 0 : index
    %c0_18 = arith.constant 0 : index
    %17 = vector.load %arg9[%c0_16, %c0_17, %c0_18] : memref<8x1x32xf32, #tpu.memory_space<vmem>>, vector<8x1x32xf32>
    %18 = vector.broadcast %17 : vector<8x1x32xf32> to vector<8x8x32xf32>
    %19 = arith.addf %16, %18 : vector<8x8x32xf32>
    %c0_19 = arith.constant 0 : index
    %c0_20 = arith.constant 0 : index
    %c0_21 = arith.constant 0 : index
    %20 = vector.load %arg3[%c0_19, %c0_20, %c0_21] : memref<1x8x256xbf16, #tpu.memory_space<vmem>>, vector<1x8x256xbf16>
    %21 = vector.shape_cast %20 : vector<1x8x256xbf16> to vector<8x256xbf16>
    %22 = vector.shape_cast %21 : vector<8x256xbf16> to vector<1x8x256xbf16>
    %23 = vector.broadcast %22 : vector<1x8x256xbf16> to vector<8x8x256xbf16>
    %c0_22 = arith.constant 0 : index
    %c0_23 = arith.constant 0 : index
    %c0_24 = arith.constant 0 : index
    %24 = vector.load %arg6[%c0_22, %c0_23, %c0_24] : memref<8x256x32xbf16, #tpu.memory_space<vmem>>, vector<8x256x32xbf16>
    %cst_25 = arith.constant dense<0.000000e+00> : vector<8x8x32xf32>
    %25 = tpu.matmul %23, %24, %cst_25 {dimension_numbers = #tpu.dot_dimension_numbers<[2], [1], [1], [2], [0, 0, 0, 1, 1, 2], [0], [0]>} : vector<8x8x256xbf16>, vector<8x256x32xbf16>, vector<8x8x32xf32> -> vector<8x8x32xf32>
    %c0_26 = arith.constant 0 : index
    %c0_27 = arith.constant 0 : index
    %c0_28 = arith.constant 0 : index
    %26 = vector.load %arg10[%c0_26, %c0_27, %c0_28] : memref<8x1x32xf32, #tpu.memory_space<vmem>>, vector<8x1x32xf32>
    %27 = vector.broadcast %26 : vector<8x1x32xf32> to vector<8x8x32xf32>
    %28 = arith.addf %25, %27 : vector<8x8x32xf32>
    %29 = arith.truncf %10 : vector<8x8x32xf32> to vector<8x8x32xbf16>
    %30 = arith.truncf %19 : vector<8x8x32xf32> to vector<8x8x32xbf16>
    %cst_29 = arith.constant dense<0.000000e+00> : vector<8x8x8xf32>
    %31 = tpu.matmul %29, %30, %cst_29 {dimension_numbers = #tpu.dot_dimension_numbers<[2], [2], [1], [1], [0, 0, 0, 1, 1, 1], [0], [0]>} : vector<8x8x32xbf16>, vector<8x8x32xbf16>, vector<8x8x8xf32> -> vector<8x8x8xf32>
    %cst_30 = arith.constant dense<0xFF800000> : vector<8x8xf32>
    %32 = vector.multi_reduction <maximumf>, %31, %cst_30 [2] : vector<8x8x8xf32> to vector<8x8xf32>
    %33 = vector.shape_cast %32 : vector<8x8xf32> to vector<8x8x1xf32>
    %34 = vector.broadcast %33 : vector<8x8x1xf32> to vector<8x8x8xf32>
    %35 = arith.subf %31, %34 : vector<8x8x8xf32>
    %36 = math.exp %35 : vector<8x8x8xf32>
    %cst_31 = arith.constant dense<0.000000e+00> : vector<8x8xf32>
    %37 = vector.multi_reduction <add>, %36, %cst_31 [2] : vector<8x8x8xf32> to vector<8x8xf32>
    %38 = vector.shape_cast %37 : vector<8x8xf32> to vector<8x8x1xf32>
    %39 = tpu.reciprocal %38 {approx = true} : vector<8x8x1xf32> -> vector<8x8x1xf32>
    %40 = vector.broadcast %39 : vector<8x8x1xf32> to vector<8x8x8xf32>
    %41 = arith.mulf %36, %40 : vector<8x8x8xf32>
    %42 = arith.truncf %41 : vector<8x8x8xf32> to vector<8x8x8xbf16>
    %43 = arith.truncf %28 : vector<8x8x32xf32> to vector<8x8x32xbf16>
    %cst_32 = arith.constant dense<0.000000e+00> : vector<8x8x32xf32>
    %44 = tpu.matmul %42, %43, %cst_32 {dimension_numbers = #tpu.dot_dimension_numbers<[2], [1], [1], [2], [0, 0, 0, 1, 1, 2], [0], [0]>} : vector<8x8x8xbf16>, vector<8x8x32xbf16>, vector<8x8x32xf32> -> vector<8x8x32xf32>
    %45 = arith.truncf %44 : vector<8x8x32xf32> to vector<8x8x32xbf16>
    %c0_33 = arith.constant 0 : index
    %c0_34 = arith.constant 0 : index
    %c0_35 = arith.constant 0 : index
    %46 = vector.load %arg7[%c0_33, %c0_34, %c0_35] : memref<8x32x256xbf16, #tpu.memory_space<vmem>>, vector<8x32x256xbf16>
    %cst_36 = arith.constant dense<0.000000e+00> : vector<8x8x256xf32>
    %47 = tpu.matmul %45, %46, %cst_36 {dimension_numbers = #tpu.dot_dimension_numbers<[2], [1], [1], [2], [0, 0, 0, 1, 1, 2], [0], [0]>} : vector<8x8x32xbf16>, vector<8x32x256xbf16>, vector<8x8x256xf32> -> vector<8x8x256xf32>
    %cst_37 = arith.constant dense<0.000000e+00> : vector<8x256xf32>
    %48 = vector.multi_reduction <add>, %47, %cst_37 [0] : vector<8x8x256xf32> to vector<8x256xf32>
    %c0_38 = arith.constant 0 : index
    %c0_39 = arith.constant 0 : index
    %49 = vector.load %arg11[%c0_38, %c0_39] : memref<1x256xf32, #tpu.memory_space<vmem>>, vector<1x256xf32>
    %50 = vector.broadcast %49 : vector<1x256xf32> to vector<8x256xf32>
    %51 = arith.addf %48, %50 : vector<8x256xf32>
    %c0_40 = arith.constant 0 : index
    %c0_41 = arith.constant 0 : index
    %c0_42 = arith.constant 0 : index
    %52 = vector.load %arg12[%c0_40, %c0_41, %c0_42] : memref<1x8x256xf32, #tpu.memory_space<vmem>>, vector<1x8x256xf32>
    %53 = vector.shape_cast %52 : vector<1x8x256xf32> to vector<8x256xf32>
    %54 = vector.shape_cast %51 : vector<8x256xf32> to vector<1x8x256xf32>
    tpu.vector_store %arg12[%c0_40, %c0_41, %c0_42], %54 {strides = array<i32>} : memref<1x8x256xf32, #tpu.memory_space<vmem>>, vector<1x8x256xf32>,
    return
  }
  func.func @transform_0(%arg0: i32) -> (i32, i32, i32) {
    %c0_i32 = arith.constant 0 : i32
    %c0_i32_0 = arith.constant 0 : i32
    %c0_i32_1 = arith.constant 0 : i32
    return %arg0, %c0_i32, %c0_i32_0 : i32, i32, i32
  }
  func.func @transform_1(%arg0: i32) -> (i32, i32, i32) {
    %c0_i32 = arith.constant 0 : i32
    %c0_i32_0 = arith.constant 0 : i32
    %c0_i32_1 = arith.constant 0 : i32
    return %arg0, %c0_i32, %c0_i32_0 : i32, i32, i32
  }
  func.func @transform_2(%arg0: i32) -> (i32, i32, i32) {
    %c0_i32 = arith.constant 0 : i32
    %c0_i32_0 = arith.constant 0 : i32
    %c0_i32_1 = arith.constant 0 : i32
    return %arg0, %c0_i32, %c0_i32_0 : i32, i32, i32
  }
  func.func @transform_3(%arg0: i32) -> (i32, i32, i32) {
    %c0_i32 = arith.constant 0 : i32
    %c0_i32_0 = arith.constant 0 : i32
    %c0_i32_1 = arith.constant 0 : i32
    %c0_i32_2 = arith.constant 0 : i32
    return %c0_i32, %c0_i32_0, %c0_i32_1 : i32, i32, i32
  }
  func.func @transform_4(%arg0: i32) -> (i32, i32, i32) {
    %c0_i32 = arith.constant 0 : i32
    %c0_i32_0 = arith.constant 0 : i32
    %c0_i32_1 = arith.constant 0 : i32
    %c0_i32_2 = arith.constant 0 : i32
    return %c0_i32, %c0_i32_0, %c0_i32_1 : i32, i32, i32
  }
  func.func @transform_5(%arg0: i32) -> (i32, i32, i32) {
    %c0_i32 = arith.constant 0 : i32
    %c0_i32_0 = arith.constant 0 : i32
    %c0_i32_1 = arith.constant 0 : i32
    %c0_i32_2 = arith.constant 0 : i32
    return %c0_i32, %c0_i32_0, %c0_i32_1 : i32, i32, i32
  }
  func.func @transform_6(%arg0: i32) -> (i32, i32, i32) {
    %c0_i32 = arith.constant 0 : i32
    %c0_i32_0 = arith.constant 0 : i32
    %c0_i32_1 = arith.constant 0 : i32
    %c0_i32_2 = arith.constant 0 : i32
    return %c0_i32, %c0_i32_0, %c0_i32_1 : i32, i32, i32
  }
  func.func @transform_7(%arg0: i32) -> (i32, i32, i32) {
    %c0_i32 = arith.constant 0 : i32
    %c0_i32_0 = arith.constant 0 : i32
    %c0_i32_1 = arith.constant 0 : i32
    %c0_i32_2 = arith.constant 0 : i32
    return %c0_i32, %c0_i32_0, %c0_i32_1 : i32, i32, i32
  }
  func.func @transform_8(%arg0: i32) -> (i32, i32, i32) {
    %c0_i32 = arith.constant 0 : i32
    %c0_i32_0 = arith.constant 0 : i32
    %c0_i32_1 = arith.constant 0 : i32
    %c0_i32_2 = arith.constant 0 : i32
    return %c0_i32, %c0_i32_0, %c0_i32_1 : i32, i32, i32
  }
  func.func @transform_9(%arg0: i32) -> (i32, i32, i32) {
    %c0_i32 = arith.constant 0 : i32
    %c0_i32_0 = arith.constant 0 : i32
    %c0_i32_1 = arith.constant 0 : i32
    %c0_i32_2 = arith.constant 0 : i32
    return %c0_i32, %c0_i32_0, %c0_i32_1 : i32, i32, i32
  }
  func.func @transform_10(%arg0: i32) -> (i32, i32) {
    %c0_i32 = arith.constant 0 : i32
    %c0_i32_0 = arith.constant 0 : i32
    %c0_i32_1 = arith.constant 0 : i32
    return %c0_i32, %c0_i32_0 : i32, i32
  }
  func.func @transform_11(%arg0: i32) -> (i32, i32, i32) {
    %c0_i32 = arith.constant 0 : i32
    %c0_i32_0 = arith.constant 0 : i32
    %c0_i32_1 = arith.constant 0 : i32
    return %arg0, %c0_i32, %c0_i32_0 : i32, i32, i32
  }
}

</mosaic_0001>

<llo_original>
// kernel: multi_head_attention.1
$region0: #{multi_head_attention.1}
  #allocation0 [shape = 'u32[]', space=smem, size = 0x4, offset = 0x4, fixed_abs, tag = 'smem constant byte address 0x4 - core index']
  #allocation1 [shape = 'u32[144,128]{1,0:T(1,128)}', space=vmem, size = 0x12000, scoped, tag = 'internal scratch']
  %s0 = inlined_call_operand.vmem [shape: bf16[2,8,256], index: 0, kind: input, shape index: {}]
  %s1 = inlined_call_operand.vmem [shape: bf16[2,8,256], index: 1, kind: input, shape index: {}]
  %s2 = inlined_call_operand.vmem [shape: bf16[2,8,256], index: 2, kind: input, shape index: {}]
  %s3 = inlined_call_operand.vmem [shape: bf16[8,256,32], index: 3, kind: input, shape index: {}]
  %s4 = inlined_call_operand.vmem [shape: bf16[8,256,32], index: 4, kind: input, shape index: {}]
  %s5 = inlined_call_operand.vmem [shape: bf16[8,256,32], index: 5, kind: input, shape index: {}]
  %s6 = inlined_call_operand.vmem [shape: bf16[8,32,256], index: 6, kind: input, shape index: {}]
  %s7 = inlined_call_operand.vmem [shape: f32[8,1,32], index: 7, kind: input, shape index: {}]
  %s8 = inlined_call_operand.vmem [shape: f32[8,1,32], index: 8, kind: input, shape index: {}]
  %s9 = inlined_call_operand.vmem [shape: f32[8,1,32], index: 9, kind: input, shape index: {}]
  %s10 = inlined_call_operand.vmem [shape: f32[1,256], index: 10, kind: input, shape index: {}]
  %s11 = inlined_call_operand.hbm [shape: f32[2,8,256], index: 11, kind: output, shape index: {}]
  %s12 = sld [smem:[#allocation0]]
  $region77: #{multi_head_attention.1} parent=0
    _
  %s14 = ssub.s32 1, %s12
  %s15 = scalar_select 0, %s14, %s12
  $region1: #{multi_head_attention.1} parent=0
    #allocation2 [shape = 'u8[16384]{0}', space=vmem, size = 0x4000, scoped, tag = 'output window, operand 0']
    #allocation3 [shape = 's32[2]{0}', space=sflag, size = 0x8, scoped, tag = 'scoped memory for multi_head_attention.1']
    %16 = vsyncpa [#allocation3], 0
    %s17 = scalar_lea.sflag [#allocation3], 1
    %18 = vsyncpa %s17, 0
    loop: start=0, step=1, limit=4
    $region2: #{multi_head_attention.1} parent=1 // loop_pre_header
      _
    $region3: #{multi_head_attention.1} parent=1 // loop_header
      %s20 = sphi 0, %s24
      %p21 = scmp.ge.s32.totalorder %s20, 4
      %s30 = sphi 0, %s32
      %s33 = sphi 0, %s30
      %s34 = sphi 0, %s33
      %s50 = sphi 0, %s34
      %s56 = sphi 0, %s58
      %s59 = sphi 0, %s56
      %s60 = sphi 0, %s59
      %s76 = sphi 0, %s60
      %s82 = sphi 0, %s84
      %s85 = sphi 0, %s82
      %s86 = sphi 0, %s85
      %s102 = sphi 0, %s86
      %s106 = sphi 0, %s106
      %s108 = sphi 0, %s106
      %s109 = sphi 0, %s108
      %s123 = sphi 0, %s109
      %s127 = sphi 0, %s127
      %s129 = sphi 0, %s127
      %s130 = sphi 0, %s129
      %s144 = sphi 0, %s130
      %s148 = sphi 0, %s148
      %s150 = sphi 0, %s148
      %s151 = sphi 0, %s150
      %s165 = sphi 0, %s151
      %s169 = sphi 0, %s169
      %s171 = sphi 0, %s169
      %s172 = sphi 0, %s171
      %s186 = sphi 0, %s172
      %s190 = sphi 0, %s190
      %s192 = sphi 0, %s190
      %s193 = sphi 0, %s192
      %s207 = sphi 0, %s193
      %s211 = sphi 0, %s211
      %s213 = sphi 0, %s211
      %s214 = sphi 0, %s213
      %s228 = sphi 0, %s214
      %s232 = sphi 0, %s232
      %s234 = sphi 0, %s232
      %s235 = sphi 0, %s234
      %s249 = sphi 0, %s235
      %s253 = sphi 0, %s253
      %s255 = sphi 0, %s253
      %s256 = sphi 0, %s255
      %s270 = sphi 0, %s256
      %s276 = sphi 0, %s278
      %s279 = sphi 0, %s276
      %s280 = sphi 0, %s279
      %s296 = sphi 0, %s280
    $region4: #{multi_head_attention.1} parent=1 // loop_header_branch
      %23 = sbr.rel (%p21) target = $region8
    $region5: #{multi_head_attention.1} parent=1 // loop_body
      %s25 = ssub.s32 %s20, 1
      %s26 = ssub.s32 %s20, 2
      %s27 = sadd.s32 %s20, 1
      %s28 = ssub.s32 %s20, %s27
      %p29 = scmp.eq.s32.totalorder %s28, 0
      %s31 = sadd.s32 %s30, 1
      %s32 = scalar_select %p29, %s30, %s31
      %p35 = pneg %p29
      %p36 = scmp.eq.s32.totalorder %s20, 1
      %p37 = por %p35, %p36
      %p38 = scmp.ne.s32.totalorder %s30, %s33
      %p39 = scmp.eq.s32.totalorder %s20, 0
      %p40 = por %p38, %p39
      %p41 = scmp.ne.s32.totalorder %s30, %s33
      %p42 = scmp.eq.s32.totalorder %s25, 1
      %p43 = por %p41, %p42
      %p44 = scmp.ne.s32.totalorder %s33, %s34
      %p45 = scmp.eq.s32.totalorder %s25, 0
      %p46 = por %p44, %p45
      %p47 = scmp.ne.s32.totalorder %s33, %s34
      %p48 = scmp.eq.s32.totalorder %s26, 1
      %p49 = por %p47, %p48
      %p51 = scmp.ne.s32.totalorder %s34, %s50
      %p52 = scmp.eq.s32.totalorder %s26, 0
      %p53 = por %p51, %p52
      %s54 = ssub.s32 %s20, %s27
      %p55 = scmp.eq.s32.totalorder %s54, 0
      %s57 = sadd.s32 %s56, 1
      %s58 = scalar_select %p55, %s56, %s57
      %p61 = pneg %p55
      %p62 = scmp.eq.s32.totalorder %s20, 1
      %p63 = por %p61, %p62
      %p64 = scmp.ne.s32.totalorder %s56, %s59
      %p65 = scmp.eq.s32.totalorder %s20, 0
      %p66 = por %p64, %p65
      %p67 = scmp.ne.s32.totalorder %s56, %s59
      %p68 = scmp.eq.s32.totalorder %s25, 1
      %p69 = por %p67, %p68
      %p70 = scmp.ne.s32.totalorder %s59, %s60
      %p71 = scmp.eq.s32.totalorder %s25, 0
      %p72 = por %p70, %p71
      %p73 = scmp.ne.s32.totalorder %s59, %s60
      %p74 = scmp.eq.s32.totalorder %s26, 1
      %p75 = por %p73, %p74
      %p77 = scmp.ne.s32.totalorder %s60, %s76
      %p78 = scmp.eq.s32.totalorder %s26, 0
      %p79 = por %p77, %p78
      %s80 = ssub.s32 %s20, %s27
      %p81 = scmp.eq.s32.totalorder %s80, 0
      %s83 = sadd.s32 %s82, 1
      %s84 = scalar_select %p81, %s82, %s83
      %p87 = pneg %p81
      %p88 = scmp.eq.s32.totalorder %s20, 1
      %p89 = por %p87, %p88
      %p90 = scmp.ne.s32.totalorder %s82, %s85
      %p91 = scmp.eq.s32.totalorder %s20, 0
      %p92 = por %p90, %p91
      %p93 = scmp.ne.s32.totalorder %s82, %s85
      %p94 = scmp.eq.s32.totalorder %s25, 1
      %p95 = por %p93, %p94
      %p96 = scmp.ne.s32.totalorder %s85, %s86
      %p97 = scmp.eq.s32.totalorder %s25, 0
      %p98 = por %p96, %p97
      %p99 = scmp.ne.s32.totalorder %s85, %s86
      %p100 = scmp.eq.s32.totalorder %s26, 1
      %p101 = por %p99, %p100
      %p103 = scmp.ne.s32.totalorder %s86, %s102
      %p104 = scmp.eq.s32.totalorder %s26, 0
      %p105 = por %p103, %p104
      %s107 = sadd.s32 %s106, 1
      %p110 = scmp.eq.s32.totalorder %s20, 1
      %p111 = scmp.ne.s32.totalorder %s106, %s108
      %p112 = scmp.eq.s32.totalorder %s20, 0
      %p113 = por %p111, %p112
      %p114 = scmp.ne.s32.totalorder %s106, %s108
      %p115 = scmp.eq.s32.totalorder %s25, 1
      %p116 = por %p114, %p115
      %p117 = scmp.ne.s32.totalorder %s108, %s109
      %p118 = scmp.eq.s32.totalorder %s25, 0
      %p119 = por %p117, %p118
      %p120 = scmp.ne.s32.totalorder %s108, %s109
      %p121 = scmp.eq.s32.totalorder %s26, 1
      %p122 = por %p120, %p121
      %p124 = scmp.ne.s32.totalorder %s109, %s123
      %p125 = scmp.eq.s32.totalorder %s26, 0
      %p126 = por %p124, %p125
      %s128 = sadd.s32 %s127, 1
      %p131 = scmp.eq.s32.totalorder %s20, 1
      %p132 = scmp.ne.s32.totalorder %s127, %s129
      %p133 = scmp.eq.s32.totalorder %s20, 0
      %p134 = por %p132, %p133
      %p135 = scmp.ne.s32.totalorder %s127, %s129
      %p136 = scmp.eq.s32.totalorder %s25, 1
      %p137 = por %p135, %p136
      %p138 = scmp.ne.s32.totalorder %s129, %s130
      %p139 = scmp.eq.s32.totalorder %s25, 0
      %p140 = por %p138, %p139
      %p141 = scmp.ne.s32.totalorder %s129, %s130
      %p142 = scmp.eq.s32.totalorder %s26, 1
      %p143 = por %p141, %p142
      %p145 = scmp.ne.s32.totalorder %s130, %s144
      %p146 = scmp.eq.s32.totalorder %s26, 0
      %p147 = por %p145, %p146
      %s149 = sadd.s32 %s148, 1
      %p152 = scmp.eq.s32.totalorder %s20, 1
      %p153 = scmp.ne.s32.totalorder %s148, %s150
      %p154 = scmp.eq.s32.totalorder %s20, 0
      %p155 = por %p153, %p154
      %p156 = scmp.ne.s32.totalorder %s148, %s150
      %p157 = scmp.eq.s32.totalorder %s25, 1
      %p158 = por %p156, %p157
      %p159 = scmp.ne.s32.totalorder %s150, %s151
      %p160 = scmp.eq.s32.totalorder %s25, 0
      %p161 = por %p159, %p160
      %p162 = scmp.ne.s32.totalorder %s150, %s151
      %p163 = scmp.eq.s32.totalorder %s26, 1
      %p164 = por %p162, %p163
      %p166 = scmp.ne.s32.totalorder %s151, %s165
      %p167 = scmp.eq.s32.totalorder %s26, 0
      %p168 = por %p166, %p167
      %s170 = sadd.s32 %s169, 1
      %p173 = scmp.eq.s32.totalorder %s20, 1
      %p174 = scmp.ne.s32.totalorder %s169, %s171
      %p175 = scmp.eq.s32.totalorder %s20, 0
      %p176 = por %p174, %p175
      %p177 = scmp.ne.s32.totalorder %s169, %s171
      %p178 = scmp.eq.s32.totalorder %s25, 1
      %p179 = por %p177, %p178
      %p180 = scmp.ne.s32.totalorder %s171, %s172
      %p181 = scmp.eq.s32.totalorder %s25, 0
      %p182 = por %p180, %p181
      %p183 = scmp.ne.s32.totalorder %s171, %s172
      %p184 = scmp.eq.s32.totalorder %s26, 1
      %p185 = por %p183, %p184
      %p187 = scmp.ne.s32.totalorder %s172, %s186
      %p188 = scmp.eq.s32.totalorder %s26, 0
      %p189 = por %p187, %p188
      %s191 = sadd.s32 %s190, 1
      %p194 = scmp.eq.s32.totalorder %s20, 1
      %p195 = scmp.ne.s32.totalorder %s190, %s192
      %p196 = scmp.eq.s32.totalorder %s20, 0
      %p197 = por %p195, %p196
      %p198 = scmp.ne.s32.totalorder %s190, %s192
      %p199 = scmp.eq.s32.totalorder %s25, 1
      %p200 = por %p198, %p199
      %p201 = scmp.ne.s32.totalorder %s192, %s193
      %p202 = scmp.eq.s32.totalorder %s25, 0
      %p203 = por %p201, %p202
      %p204 = scmp.ne.s32.totalorder %s192, %s193
      %p205 = scmp.eq.s32.totalorder %s26, 1
      %p206 = por %p204, %p205
      %p208 = scmp.ne.s32.totalorder %s193, %s207
      %p209 = scmp.eq.s32.totalorder %s26, 0
      %p210 = por %p208, %p209
      %s212 = sadd.s32 %s211, 1
      %p215 = scmp.eq.s32.totalorder %s20, 1
      %p216 = scmp.ne.s32.totalorder %s211, %s213
      %p217 = scmp.eq.s32.totalorder %s20, 0
      %p218 = por %p216, %p217
      %p219 = scmp.ne.s32.totalorder %s211, %s213
      %p220 = scmp.eq.s32.totalorder %s25, 1
      %p221 = por %p219, %p220
      %p222 = scmp.ne.s32.totalorder %s213, %s214
      %p223 = scmp.eq.s32.totalorder %s25, 0
      %p224 = por %p222, %p223
      %p225 = scmp.ne.s32.totalorder %s213, %s214
      %p226 = scmp.eq.s32.totalorder %s26, 1
      %p227 = por %p225, %p226
      %p229 = scmp.ne.s32.totalorder %s214, %s228
      %p230 = scmp.eq.s32.totalorder %s26, 0
      %p231 = por %p229, %p230
      %s233 = sadd.s32 %s232, 1
      %p236 = scmp.eq.s32.totalorder %s20, 1
      %p237 = scmp.ne.s32.totalorder %s232, %s234
      %p238 = scmp.eq.s32.totalorder %s20, 0
      %p239 = por %p237, %p238
      %p240 = scmp.ne.s32.totalorder %s232, %s234
      %p241 = scmp.eq.s32.totalorder %s25, 1
      %p242 = por %p240, %p241
      %p243 = scmp.ne.s32.totalorder %s234, %s235
      %p244 = scmp.eq.s32.totalorder %s25, 0
      %p245 = por %p243, %p244
      %p246 = scmp.ne.s32.totalorder %s234, %s235
      %p247 = scmp.eq.s32.totalorder %s26, 1
      %p248 = por %p246, %p247
      %p250 = scmp.ne.s32.totalorder %s235, %s249
      %p251 = scmp.eq.s32.totalorder %s26, 0
      %p252 = por %p250, %p251
      %s254 = sadd.s32 %s253, 1
      %p257 = scmp.eq.s32.totalorder %s20, 1
      %p258 = scmp.ne.s32.totalorder %s253, %s255
      %p259 = scmp.eq.s32.totalorder %s20, 0
      %p260 = por %p258, %p259
      %p261 = scmp.ne.s32.totalorder %s253, %s255
      %p262 = scmp.eq.s32.totalorder %s25, 1
      %p263 = por %p261, %p262
      %p264 = scmp.ne.s32.totalorder %s255, %s256
      %p265 = scmp.eq.s32.totalorder %s25, 0
      %p266 = por %p264, %p265
      %p267 = scmp.ne.s32.totalorder %s255, %s256
      %p268 = scmp.eq.s32.totalorder %s26, 1
      %p269 = por %p267, %p268
      %p271 = scmp.ne.s32.totalorder %s256, %s270
      %p272 = scmp.eq.s32.totalorder %s26, 0
      %p273 = por %p271, %p272
      %s274 = ssub.s32 %s20, %s27
      %p275 = scmp.eq.s32.totalorder %s274, 0
      %s277 = sadd.s32 %s276, 1
      %s278 = scalar_select %p275, %s276, %s277
      %p281 = pneg %p275
      %p282 = scmp.eq.s32.totalorder %s20, 1
      %p283 = por %p281, %p282
      %p284 = scmp.ne.s32.totalorder %s276, %s279
      %p285 = scmp.eq.s32.totalorder %s20, 0
      %p286 = por %p284, %p285
      %p287 = scmp.ne.s32.totalorder %s276, %s279
      %p288 = scmp.eq.s32.totalorder %s25, 1
      %p289 = por %p287, %p288
      %p290 = scmp.ne.s32.totalorder %s279, %s280
      %p291 = scmp.eq.s32.totalorder %s25, 0
      %p292 = por %p290, %p291
      %p293 = scmp.ne.s32.totalorder %s279, %s280
      %p294 = scmp.eq.s32.totalorder %s26, 1
      %p295 = por %p293, %p294
      %p297 = scmp.ne.s32.totalorder %s280, %s296
      %p298 = scmp.eq.s32.totalorder %s26, 0
      %p299 = por %p297, %p298
      %p300 = scmp.le.s32.totalorder 1, %s20
      %p301 = scmp.lt.s32.totalorder %s20, 3
      %p302 = pnand %p300, %p301
      %p303 = pneg %p302
      // Predicated region
      $region9: #{multi_head_attention.1} parent=5 // pred_check
        _
      $region10: #{multi_head_attention.1} parent=5 // pred_check_branch
        %305 = sbr.rel (%p302) target = $region12
      $region11: #{multi_head_attention.1} parent=5 // pred_region
        %s306 = ssub.s32 %s20, 1
        // Predicated region
        $region13: #{multi_head_attention.1} parent=11 // pred_check
          %p307 = pneg %p119
        $region14: #{multi_head_attention.1} parent=11 // pred_check_branch
          %309 = sbr.rel (%p307) target = $region16
        $region15: #{multi_head_attention.1} parent=11 // pred_region
          _
        $region16: #{multi_head_attention.1} parent=11 // pred_fallthru
          _
        // Predicated region
        $region17: #{multi_head_attention.1} parent=11 // pred_check
          %p310 = pneg %p140
        $region18: #{multi_head_attention.1} parent=11 // pred_check_branch
          %312 = sbr.rel (%p310) target = $region20
        $region19: #{multi_head_attention.1} parent=11 // pred_region
          _
        $region20: #{multi_head_attention.1} parent=11 // pred_fallthru
          _
        // Predicated region
        $region21: #{multi_head_attention.1} parent=11 // pred_check
          %p313 = pneg %p161
        $region22: #{multi_head_attention.1} parent=11 // pred_check_branch
          %315 = sbr.rel (%p313) target = $region24
        $region23: #{multi_head_attention.1} parent=11 // pred_region
          _
        $region24: #{multi_head_attention.1} parent=11 // pred_fallthru
          _
        // Predicated region
        $region25: #{multi_head_attention.1} parent=11 // pred_check
          %p316 = pneg %p182
        $region26: #{multi_head_attention.1} parent=11 // pred_check_branch
          %318 = sbr.rel (%p316) target = $region28
        $region27: #{multi_head_attention.1} parent=11 // pred_region
          _
        $region28: #{multi_head_attention.1} parent=11 // pred_fallthru
          _
        // Predicated region
        $region29: #{multi_head_attention.1} parent=11 // pred_check
          %p319 = pneg %p203
        $region30: #{multi_head_attention.1} parent=11 // pred_check_branch
          %321 = sbr.rel (%p319) target = $region32
        $region31: #{multi_head_attention.1} parent=11 // pred_region
          _
        $region32: #{multi_head_attention.1} parent=11 // pred_fallthru
          _
        // Predicated region
        $region33: #{multi_head_attention.1} parent=11 // pred_check
          %p322 = pneg %p224
        $region34: #{multi_head_attention.1} parent=11 // pred_check_branch
          %324 = sbr.rel (%p322) target = $region36
        $region35: #{multi_head_attention.1} parent=11 // pred_region
          _
        $region36: #{multi_head_attention.1} parent=11 // pred_fallthru
          _
        // Predicated region
        $region37: #{multi_head_attention.1} parent=11 // pred_check
          %p325 = pneg %p245
        $region38: #{multi_head_attention.1} parent=11 // pred_check_branch
          %327 = sbr.rel (%p325) target = $region40
        $region39: #{multi_head_attention.1} parent=11 // pred_region
          _
        $region40: #{multi_head_attention.1} parent=11 // pred_fallthru
          _
        // Predicated region
        $region41: #{multi_head_attention.1} parent=11 // pred_check
          %p328 = pneg %p266
        $region42: #{multi_head_attention.1} parent=11 // pred_check_branch
          %330 = sbr.rel (%p328) target = $region44
        $region43: #{multi_head_attention.1} parent=11 // pred_region
          _
        $region44: #{multi_head_attention.1} parent=11 // pred_fallthru
          _
      $region12: #{multi_head_attention.1} parent=5 // pred_fallthru
        _
      %p331 = scmp.lt.s32.totalorder %s20, 2
      // Predicated region
      $region45: #{multi_head_attention.1} parent=5 // pred_check
        %p332 = pneg %p331
      $region46: #{multi_head_attention.1} parent=5 // pred_check_branch
        %334 = sbr.rel (%p332) target = $region48
      $region47: #{multi_head_attention.1} parent=5 // pred_region
        // Predicated region
        $region49: #{multi_head_attention.1} parent=47 // pred_check
          %p335 = pneg %p40
        $region50: #{multi_head_attention.1} parent=47 // pred_check_branch
          %337 = sbr.rel (%p335) target = $region52
        $region51: #{multi_head_attention.1} parent=47 // pred_region
          %p338 = scmp.lt.s32.totalorder %s20, 1
          %s339 = scalar_select %p338, %s20, 1
          %s340 = smul.addr %s339, 2
          %s341 = smul.addr %s340, 4
          %s342 = scalar_lea.vmem %s0, %s341
        $region52: #{multi_head_attention.1} parent=47 // pred_fallthru
          _
        // Predicated region
        $region53: #{multi_head_attention.1} parent=47 // pred_check
          %p343 = pneg %p66
        $region54: #{multi_head_attention.1} parent=47 // pred_check_branch
          %345 = sbr.rel (%p343) target = $region56
        $region55: #{multi_head_attention.1} parent=47 // pred_region
          %p346 = scmp.lt.s32.totalorder %s20, 1
          %s347 = scalar_select %p346, %s20, 1
          %s348 = smul.addr %s347, 2
          %s349 = smul.addr %s348, 4
          %s350 = scalar_lea.vmem %s1, %s349
        $region56: #{multi_head_attention.1} parent=47 // pred_fallthru
          _
        // Predicated region
        $region57: #{multi_head_attention.1} parent=47 // pred_check
          %p351 = pneg %p92
        $region58: #{multi_head_attention.1} parent=47 // pred_check_branch
          %353 = sbr.rel (%p351) target = $region60
        $region59: #{multi_head_attention.1} parent=47 // pred_region
          %p354 = scmp.lt.s32.totalorder %s20, 1
          %s355 = scalar_select %p354, %s20, 1
          %s356 = smul.addr %s355, 2
          %s357 = smul.addr %s356, 4
          %s358 = scalar_lea.vmem %s2, %s357
        $region60: #{multi_head_attention.1} parent=47 // pred_fallthru
          _
      $region48: #{multi_head_attention.1} parent=5 // pred_fallthru
        _
      %p359 = scmp.le.s32.totalorder 1, %s20
      %p360 = scmp.lt.s32.totalorder %s20, 3
      %p361 = pnand %p359, %p360
      %p362 = pneg %p361
      // Predicated region
      $region61: #{multi_head_attention.1} parent=5 // pred_check
        _
      $region62: #{multi_head_attention.1} parent=5 // pred_check_branch
        %364 = sbr.rel (%p361) target = $region64
      $region63: #{multi_head_attention.1} parent=5 // pred_region
        %s365 = ssub.s32 %s20, 1
        %p366 = scmp.lt.s32.totalorder %s25, 1
        %s367 = scalar_select %p366, %s25, 1
        %s368 = smul.addr %s367, 2
        %s369 = smul.addr %s368, 4
        %s370 = scalar_lea.vmem %s0, %s369
        %p371 = pneg %p46
        %p372 = pneg %p43
        %p373 = scmp.lt.s32.totalorder %s25, 1
        %s374 = scalar_select %p373, %s25, 1
        %s375 = smul.addr %s374, 2
        %s376 = smul.addr %s375, 4
        %s377 = scalar_lea.vmem %s1, %s376
        %p378 = pneg %p72
        %p379 = pneg %p69
        %p380 = scmp.lt.s32.totalorder %s25, 1
        %s381 = scalar_select %p380, %s25, 1
        %s382 = smul.addr %s381, 2
        %s383 = smul.addr %s382, 4
        %s384 = scalar_lea.vmem %s2, %s383
        %p385 = pneg %p98
        %p386 = pneg %p95
        %p387 = pneg %p119
        %p388 = pneg %p116
        %p389 = pneg %p140
        %p390 = pneg %p137
        %p391 = pneg %p161
        %p392 = pneg %p158
        %p393 = pneg %p182
        %p394 = pneg %p179
        %p395 = pneg %p203
        %p396 = pneg %p200
        %p397 = pneg %p224
        %p398 = pneg %p221
        %p399 = pneg %p245
        %p400 = pneg %p242
        %p401 = pneg %p266
        %p402 = pneg %p263
        %p403 = pneg %p292
        %p404 = pneg %p289
        %s405 = sand.u32 %s279, 1
        %s406 = scalar_lea.sflag [#allocation3], %s405
        %s407 = sand.u32 %s279, 1
        %s408 = smul.addr %s407, 16
        %s409 = scalar_lea.vmem [#allocation2], %s408
        %p410 = scmp.lt.s32.totalorder %s25, 1
        %s411 = scalar_select %p410, %s25, 1
        %s412 = smul.addr %s411, 2
        %s413 = smul.addr %s412, 4
        %s414 = scalar_lea.vmem %s0, %s413
        %p415 = scmp.lt.s32.totalorder %s25, 1
        %s416 = scalar_select %p415, %s25, 1
        %s417 = smul.addr %s416, 2
        %s418 = smul.addr %s417, 4
        %s419 = scalar_lea.vmem %s1, %s418
        %p420 = scmp.lt.s32.totalorder %s25, 1
        %s421 = scalar_select %p420, %s25, 1
        %s422 = smul.addr %s421, 2
        %s423 = smul.addr %s422, 4
        %s424 = scalar_lea.vmem %s2, %s423
        %v426 = vld [vmem:[%s414] sm:$0xff]
        %v427 = vld [vmem:[%s3] sm:$0xf]
        %v428 = vld [vmem:[%s3 + $0x4] sm:$0xf]
        %v429 = vld [vmem:[%s3 + $0x8] sm:$0xf]
        %v430 = vld [vmem:[%s3 + $0xc] sm:$0xf]
        %v431 = vld [vmem:[%s3 + $0x10] sm:$0xf]
        %v432 = vld [vmem:[%s3 + $0x14] sm:$0xf]
        %v433 = vld [vmem:[%s3 + $0x18] sm:$0xf]
        %v434 = vld [vmem:[%s3 + $0x1c] sm:$0xf]
        %v435 = vld [vmem:[%s3 + $0x20] sm:$0xf]
        %v436 = vld [vmem:[%s3 + $0x24] sm:$0xf]
        %v437 = vld [vmem:[%s3 + $0x28] sm:$0xf]
        %v438 = vld [vmem:[%s3 + $0x2c] sm:$0xf]
        %v439 = vld [vmem:[%s3 + $0x30] sm:$0xf]
        %v440 = vld [vmem:[%s3 + $0x34] sm:$0xf]
        %v441 = vld [vmem:[%s3 + $0x38] sm:$0xf]
        %v442 = vld [vmem:[%s3 + $0x3c] sm:$0xf]
        %v443 = vld [vmem:[%s3 + $0x40] sm:$0xf]
        %v444 = vld [vmem:[%s3 + $0x44] sm:$0xf]
        %v445 = vld [vmem:[%s3 + $0x48] sm:$0xf]
        %v446 = vld [vmem:[%s3 + $0x4c] sm:$0xf]
        %v447 = vld [vmem:[%s3 + $0x50] sm:$0xf]
        %v448 = vld [vmem:[%s3 + $0x54] sm:$0xf]
        %v449 = vld [vmem:[%s3 + $0x58] sm:$0xf]
        %v450 = vld [vmem:[%s3 + $0x5c] sm:$0xf]
        %v451 = vld [vmem:[%s3 + $0x60] sm:$0xf]
        %v452 = vld [vmem:[%s3 + $0x64] sm:$0xf]
        %v453 = vld [vmem:[%s3 + $0x68] sm:$0xf]
        %v454 = vld [vmem:[%s3 + $0x6c] sm:$0xf]
        %v455 = vld [vmem:[%s3 + $0x70] sm:$0xf]
        %v456 = vld [vmem:[%s3 + $0x74] sm:$0xf]
        %v457 = vld [vmem:[%s3 + $0x78] sm:$0xf]
        %v458 = vld [vmem:[%s3 + $0x7c] sm:$0xf]
        %v459 = vld [vmem:[%s3 + $0x80] sm:$0xf]
        %v460 = vld [vmem:[%s3 + $0x84] sm:$0xf]
        %v461 = vld [vmem:[%s3 + $0x88] sm:$0xf]
        %v462 = vld [vmem:[%s3 + $0x8c] sm:$0xf]
        %v463 = vld [vmem:[%s3 + $0x90] sm:$0xf]
        %v464 = vld [vmem:[%s3 + $0x94] sm:$0xf]
        %v465 = vld [vmem:[%s3 + $0x98] sm:$0xf]
        %v466 = vld [vmem:[%s3 + $0x9c] sm:$0xf]
        %v467 = vld [vmem:[%s3 + $0xa0] sm:$0xf]
        %v468 = vld [vmem:[%s3 + $0xa4] sm:$0xf]
        %v469 = vld [vmem:[%s3 + $0xa8] sm:$0xf]
        %v470 = vld [vmem:[%s3 + $0xac] sm:$0xf]
        %v471 = vld [vmem:[%s3 + $0xb0] sm:$0xf]
        %v472 = vld [vmem:[%s3 + $0xb4] sm:$0xf]
        %v473 = vld [vmem:[%s3 + $0xb8] sm:$0xf]
        %v474 = vld [vmem:[%s3 + $0xbc] sm:$0xf]
        %v475 = vld [vmem:[%s3 + $0xc0] sm:$0xf]
        %v476 = vld [vmem:[%s3 + $0xc4] sm:$0xf]
        %v477 = vld [vmem:[%s3 + $0xc8] sm:$0xf]
        %v478 = vld [vmem:[%s3 + $0xcc] sm:$0xf]
        %v479 = vld [vmem:[%s3 + $0xd0] sm:$0xf]
        %v480 = vld [vmem:[%s3 + $0xd4] sm:$0xf]
        %v481 = vld [vmem:[%s3 + $0xd8] sm:$0xf]
        %v482 = vld [vmem:[%s3 + $0xdc] sm:$0xf]
        %v483 = vld [vmem:[%s3 + $0xe0] sm:$0xf]
        %v484 = vld [vmem:[%s3 + $0xe4] sm:$0xf]
        %v485 = vld [vmem:[%s3 + $0xe8] sm:$0xf]
        %v486 = vld [vmem:[%s3 + $0xec] sm:$0xf]
        %v487 = vld [vmem:[%s3 + $0xf0] sm:$0xf]
        %v488 = vld [vmem:[%s3 + $0xf4] sm:$0xf]
        %v489 = vld [vmem:[%s3 + $0xf8] sm:$0xf]
        %v490 = vld [vmem:[%s3 + $0xfc] sm:$0xf]
        %v491 = vld [vmem:[%s3 + $0x100] sm:$0xf]
        %v492 = vld [vmem:[%s3 + $0x104] sm:$0xf]
        %v493 = vld [vmem:[%s3 + $0x108] sm:$0xf]
        %v494 = vld [vmem:[%s3 + $0x10c] sm:$0xf]
        %v495 = vld [vmem:[%s3 + $0x110] sm:$0xf]
        %v496 = vld [vmem:[%s3 + $0x114] sm:$0xf]
        %v497 = vld [vmem:[%s3 + $0x118] sm:$0xf]
        %v498 = vld [vmem:[%s3 + $0x11c] sm:$0xf]
        %v499 = vld [vmem:[%s3 + $0x120] sm:$0xf]
        %v500 = vld [vmem:[%s3 + $0x124] sm:$0xf]
        %v501 = vld [vmem:[%s3 + $0x128] sm:$0xf]
        %v502 = vld [vmem:[%s3 + $0x12c] sm:$0xf]
        %v503 = vld [vmem:[%s3 + $0x130] sm:$0xf]
        %v504 = vld [vmem:[%s3 + $0x134] sm:$0xf]
        %v505 = vld [vmem:[%s3 + $0x138] sm:$0xf]
        %v506 = vld [vmem:[%s3 + $0x13c] sm:$0xf]
        %v507 = vld [vmem:[%s3 + $0x140] sm:$0xf]
        %v508 = vld [vmem:[%s3 + $0x144] sm:$0xf]
        %v509 = vld [vmem:[%s3 + $0x148] sm:$0xf]
        %v510 = vld [vmem:[%s3 + $0x14c] sm:$0xf]
        %v511 = vld [vmem:[%s3 + $0x150] sm:$0xf]
        %v512 = vld [vmem:[%s3 + $0x154] sm:$0xf]
        %v513 = vld [vmem:[%s3 + $0x158] sm:$0xf]
        %v514 = vld [vmem:[%s3 + $0x15c] sm:$0xf]
        %v515 = vld [vmem:[%s3 + $0x160] sm:$0xf]
        %v516 = vld [vmem:[%s3 + $0x164] sm:$0xf]
        %v517 = vld [vmem:[%s3 + $0x168] sm:$0xf]
        %v518 = vld [vmem:[%s3 + $0x16c] sm:$0xf]
        %v519 = vld [vmem:[%s3 + $0x170] sm:$0xf]
        %v520 = vld [vmem:[%s3 + $0x174] sm:$0xf]
        %v521 = vld [vmem:[%s3 + $0x178] sm:$0xf]
        %v522 = vld [vmem:[%s3 + $0x17c] sm:$0xf]
        %v523 = vld [vmem:[%s3 + $0x180] sm:$0xf]
        %v524 = vld [vmem:[%s3 + $0x184] sm:$0xf]
        %v525 = vld [vmem:[%s3 + $0x188] sm:$0xf]
        %v526 = vld [vmem:[%s3 + $0x18c] sm:$0xf]
        %v527 = vld [vmem:[%s3 + $0x190] sm:$0xf]
        %v528 = vld [vmem:[%s3 + $0x194] sm:$0xf]
        %v529 = vld [vmem:[%s3 + $0x198] sm:$0xf]
        %v530 = vld [vmem:[%s3 + $0x19c] sm:$0xf]
        %v531 = vld [vmem:[%s3 + $0x1a0] sm:$0xf]
        %v532 = vld [vmem:[%s3 + $0x1a4] sm:$0xf]
        %v533 = vld [vmem:[%s3 + $0x1a8] sm:$0xf]
        %v534 = vld [vmem:[%s3 + $0x1ac] sm:$0xf]
        %v535 = vld [vmem:[%s3 + $0x1b0] sm:$0xf]
        %v536 = vld [vmem:[%s3 + $0x1b4] sm:$0xf]
        %v537 = vld [vmem:[%s3 + $0x1b8] sm:$0xf]
        %v538 = vld [vmem:[%s3 + $0x1bc] sm:$0xf]
        %v539 = vld [vmem:[%s3 + $0x1c0] sm:$0xf]
        %v540 = vld [vmem:[%s3 + $0x1c4] sm:$0xf]
        %v541 = vld [vmem:[%s3 + $0x1c8] sm:$0xf]
        %v542 = vld [vmem:[%s3 + $0x1cc] sm:$0xf]
        %v543 = vld [vmem:[%s3 + $0x1d0] sm:$0xf]
        %v544 = vld [vmem:[%s3 + $0x1d4] sm:$0xf]
        %v545 = vld [vmem:[%s3 + $0x1d8] sm:$0xf]
        %v546 = vld [vmem:[%s3 + $0x1dc] sm:$0xf]
        %v547 = vld [vmem:[%s3 + $0x1e0] sm:$0xf]
        %v548 = vld [vmem:[%s3 + $0x1e4] sm:$0xf]
        %v549 = vld [vmem:[%s3 + $0x1e8] sm:$0xf]
        %v550 = vld [vmem:[%s3 + $0x1ec] sm:$0xf]
        %v551 = vld [vmem:[%s3 + $0x1f0] sm:$0xf]
        %v552 = vld [vmem:[%s3 + $0x1f4] sm:$0xf]
        %v553 = vld [vmem:[%s3 + $0x1f8] sm:$0xf]
        %v554 = vld [vmem:[%s3 + $0x1fc] sm:$0xf]
        %v555 = vld [vmem:[%s3 + $0x200] sm:$0xf]
        %v556 = vld [vmem:[%s3 + $0x204] sm:$0xf]
        %v557 = vld [vmem:[%s3 + $0x208] sm:$0xf]
        %v558 = vld [vmem:[%s3 + $0x20c] sm:$0xf]
        %v559 = vld [vmem:[%s3 + $0x210] sm:$0xf]
        %v560 = vld [vmem:[%s3 + $0x214] sm:$0xf]
        %v561 = vld [vmem:[%s3 + $0x218] sm:$0xf]
        %v562 = vld [vmem:[%s3 + $0x21c] sm:$0xf]
        %v563 = vld [vmem:[%s3 + $0x220] sm:$0xf]
        %v564 = vld [vmem:[%s3 + $0x224] sm:$0xf]
        %v565 = vld [vmem:[%s3 + $0x228] sm:$0xf]
        %v566 = vld [vmem:[%s3 + $0x22c] sm:$0xf]
        %v567 = vld [vmem:[%s3 + $0x230] sm:$0xf]
        %v568 = vld [vmem:[%s3 + $0x234] sm:$0xf]
        %v569 = vld [vmem:[%s3 + $0x238] sm:$0xf]
        %v570 = vld [vmem:[%s3 + $0x23c] sm:$0xf]
        %v571 = vld [vmem:[%s3 + $0x240] sm:$0xf]
        %v572 = vld [vmem:[%s3 + $0x244] sm:$0xf]
        %v573 = vld [vmem:[%s3 + $0x248] sm:$0xf]
        %v574 = vld [vmem:[%s3 + $0x24c] sm:$0xf]
        %v575 = vld [vmem:[%s3 + $0x250] sm:$0xf]
        %v576 = vld [vmem:[%s3 + $0x254] sm:$0xf]
        %v577 = vld [vmem:[%s3 + $0x258] sm:$0xf]
        %v578 = vld [vmem:[%s3 + $0x25c] sm:$0xf]
        %v579 = vld [vmem:[%s3 + $0x260] sm:$0xf]
        %v580 = vld [vmem:[%s3 + $0x264] sm:$0xf]
        %v581 = vld [vmem:[%s3 + $0x268] sm:$0xf]
        %v582 = vld [vmem:[%s3 + $0x26c] sm:$0xf]
        %v583 = vld [vmem:[%s3 + $0x270] sm:$0xf]
        %v584 = vld [vmem:[%s3 + $0x274] sm:$0xf]
        %v585 = vld [vmem:[%s3 + $0x278] sm:$0xf]
        %v586 = vld [vmem:[%s3 + $0x27c] sm:$0xf]
        %v587 = vld [vmem:[%s3 + $0x280] sm:$0xf]
        %v588 = vld [vmem:[%s3 + $0x284] sm:$0xf]
        %v589 = vld [vmem:[%s3 + $0x288] sm:$0xf]
        %v590 = vld [vmem:[%s3 + $0x28c] sm:$0xf]
        %v591 = vld [vmem:[%s3 + $0x290] sm:$0xf]
        %v592 = vld [vmem:[%s3 + $0x294] sm:$0xf]
        %v593 = vld [vmem:[%s3 + $0x298] sm:$0xf]
        %v594 = vld [vmem:[%s3 + $0x29c] sm:$0xf]
        %v595 = vld [vmem:[%s3 + $0x2a0] sm:$0xf]
        %v596 = vld [vmem:[%s3 + $0x2a4] sm:$0xf]
        %v597 = vld [vmem:[%s3 + $0x2a8] sm:$0xf]
        %v598 = vld [vmem:[%s3 + $0x2ac] sm:$0xf]
        %v599 = vld [vmem:[%s3 + $0x2b0] sm:$0xf]
        %v600 = vld [vmem:[%s3 + $0x2b4] sm:$0xf]
        %v601 = vld [vmem:[%s3 + $0x2b8] sm:$0xf]
        %v602 = vld [vmem:[%s3 + $0x2bc] sm:$0xf]
        %v603 = vld [vmem:[%s3 + $0x2c0] sm:$0xf]
        %v604 = vld [vmem:[%s3 + $0x2c4] sm:$0xf]
        %v605 = vld [vmem:[%s3 + $0x2c8] sm:$0xf]
        %v606 = vld [vmem:[%s3 + $0x2cc] sm:$0xf]
        %v607 = vld [vmem:[%s3 + $0x2d0] sm:$0xf]
        %v608 = vld [vmem:[%s3 + $0x2d4] sm:$0xf]
        %v609 = vld [vmem:[%s3 + $0x2d8] sm:$0xf]
        %v610 = vld [vmem:[%s3 + $0x2dc] sm:$0xf]
        %v611 = vld [vmem:[%s3 + $0x2e0] sm:$0xf]
        %v612 = vld [vmem:[%s3 + $0x2e4] sm:$0xf]
        %v613 = vld [vmem:[%s3 + $0x2e8] sm:$0xf]
        %v614 = vld [vmem:[%s3 + $0x2ec] sm:$0xf]
        %v615 = vld [vmem:[%s3 + $0x2f0] sm:$0xf]
        %v616 = vld [vmem:[%s3 + $0x2f4] sm:$0xf]
        %v617 = vld [vmem:[%s3 + $0x2f8] sm:$0xf]
        %v618 = vld [vmem:[%s3 + $0x2fc] sm:$0xf]
        %v619 = vld [vmem:[%s3 + $0x300] sm:$0xf]
        %v620 = vld [vmem:[%s3 + $0x304] sm:$0xf]
        %v621 = vld [vmem:[%s3 + $0x308] sm:$0xf]
        %v622 = vld [vmem:[%s3 + $0x30c] sm:$0xf]
        %v623 = vld [vmem:[%s3 + $0x310] sm:$0xf]
        %v624 = vld [vmem:[%s3 + $0x314] sm:$0xf]
        %v625 = vld [vmem:[%s3 + $0x318] sm:$0xf]
        %v626 = vld [vmem:[%s3 + $0x31c] sm:$0xf]
        %v627 = vld [vmem:[%s3 + $0x320] sm:$0xf]
        %v628 = vld [vmem:[%s3 + $0x324] sm:$0xf]
        %v629 = vld [vmem:[%s3 + $0x328] sm:$0xf]
        %v630 = vld [vmem:[%s3 + $0x32c] sm:$0xf]
        %v631 = vld [vmem:[%s3 + $0x330] sm:$0xf]
        %v632 = vld [vmem:[%s3 + $0x334] sm:$0xf]
        %v633 = vld [vmem:[%s3 + $0x338] sm:$0xf]
        %v634 = vld [vmem:[%s3 + $0x33c] sm:$0xf]
        %v635 = vld [vmem:[%s3 + $0x340] sm:$0xf]
        %v636 = vld [vmem:[%s3 + $0x344] sm:$0xf]
        %v637 = vld [vmem:[%s3 + $0x348] sm:$0xf]
        %v638 = vld [vmem:[%s3 + $0x34c] sm:$0xf]
        %v639 = vld [vmem:[%s3 + $0x350] sm:$0xf]
        %v640 = vld [vmem:[%s3 + $0x354] sm:$0xf]
        %v641 = vld [vmem:[%s3 + $0x358] sm:$0xf]
        %v642 = vld [vmem:[%s3 + $0x35c] sm:$0xf]
        %v643 = vld [vmem:[%s3 + $0x360] sm:$0xf]
        %v644 = vld [vmem:[%s3 + $0x364] sm:$0xf]
        %v645 = vld [vmem:[%s3 + $0x368] sm:$0xf]
        %v646 = vld [vmem:[%s3 + $0x36c] sm:$0xf]
        %v647 = vld [vmem:[%s3 + $0x370] sm:$0xf]
        %v648 = vld [vmem:[%s3 + $0x374] sm:$0xf]
        %v649 = vld [vmem:[%s3 + $0x378] sm:$0xf]
        %v650 = vld [vmem:[%s3 + $0x37c] sm:$0xf]
        %v651 = vld [vmem:[%s3 + $0x380] sm:$0xf]
        %v652 = vld [vmem:[%s3 + $0x384] sm:$0xf]
        %v653 = vld [vmem:[%s3 + $0x388] sm:$0xf]
        %v654 = vld [vmem:[%s3 + $0x38c] sm:$0xf]
        %v655 = vld [vmem:[%s3 + $0x390] sm:$0xf]
        %v656 = vld [vmem:[%s3 + $0x394] sm:$0xf]
        %v657 = vld [vmem:[%s3 + $0x398] sm:$0xf]
        %v658 = vld [vmem:[%s3 + $0x39c] sm:$0xf]
        %v659 = vld [vmem:[%s3 + $0x3a0] sm:$0xf]
        %v660 = vld [vmem:[%s3 + $0x3a4] sm:$0xf]
        %v661 = vld [vmem:[%s3 + $0x3a8] sm:$0xf]
        %v662 = vld [vmem:[%s3 + $0x3ac] sm:$0xf]
        %v663 = vld [vmem:[%s3 + $0x3b0] sm:$0xf]
        %v664 = vld [vmem:[%s3 + $0x3b4] sm:$0xf]
        %v665 = vld [vmem:[%s3 + $0x3b8] sm:$0xf]
        %v666 = vld [vmem:[%s3 + $0x3bc] sm:$0xf]
        %v667 = vld [vmem:[%s3 + $0x3c0] sm:$0xf]
        %v668 = vld [vmem:[%s3 + $0x3c4] sm:$0xf]
        %v669 = vld [vmem:[%s3 + $0x3c8] sm:$0xf]
        %v670 = vld [vmem:[%s3 + $0x3cc] sm:$0xf]
        %v671 = vld [vmem:[%s3 + $0x3d0] sm:$0xf]
        %v672 = vld [vmem:[%s3 + $0x3d4] sm:$0xf]
        %v673 = vld [vmem:[%s3 + $0x3d8] sm:$0xf]
        %v674 = vld [vmem:[%s3 + $0x3dc] sm:$0xf]
        %v675 = vld [vmem:[%s3 + $0x3e0] sm:$0xf]
        %v676 = vld [vmem:[%s3 + $0x3e4] sm:$0xf]
        %v677 = vld [vmem:[%s3 + $0x3e8] sm:$0xf]
        %v678 = vld [vmem:[%s3 + $0x3ec] sm:$0xf]
        %v679 = vld [vmem:[%s3 + $0x3f0] sm:$0xf]
        %v680 = vld [vmem:[%s3 + $0x3f4] sm:$0xf]
        %v681 = vld [vmem:[%s3 + $0x3f8] sm:$0xf]
        %v682 = vld [vmem:[%s3 + $0x3fc] sm:$0xf]
        %v683 = vld [vmem:[%s7] sm:$0x1]
        %v684 = vld [vmem:[%s7 + $0x1] sm:$0x1]
        %v685 = vld [vmem:[%s7 + $0x2] sm:$0x1]
        %v686 = vld [vmem:[%s7 + $0x3] sm:$0x1]
        %v687 = vld [vmem:[%s7 + $0x4] sm:$0x1]
        %v688 = vld [vmem:[%s7 + $0x5] sm:$0x1]
        %v689 = vld [vmem:[%s7 + $0x6] sm:$0x1]
        %v690 = vld [vmem:[%s7 + $0x7] sm:$0x1]
        %v699 = vlaneseq
        %v700 = vshrl.u32 %v699, 7
        %v701 = vsub.s32 0, %v700
        %v702 = vrot.slane %v683, %v701
        %v703 = vlaneseq
        %v704 = vshrl.u32 %v703, 7
        %v705 = vsub.s32 0, %v704
        %v706 = vrot.slane %v684, %v705
        %v707 = vlaneseq
        %v708 = vshrl.u32 %v707, 7
        %v709 = vsub.s32 0, %v708
        %v710 = vrot.slane %v685, %v709
        %v711 = vlaneseq
        %v712 = vshrl.u32 %v711, 7
        %v713 = vsub.s32 0, %v712
        %v714 = vrot.slane %v686, %v713
        %v715 = vlaneseq
        %v716 = vshrl.u32 %v715, 7
        %v717 = vsub.s32 0, %v716
        %v718 = vrot.slane %v687, %v717
        %v719 = vlaneseq
        %v720 = vshrl.u32 %v719, 7
        %v721 = vsub.s32 0, %v720
        %v722 = vrot.slane %v688, %v721
        %v723 = vlaneseq
        %v724 = vshrl.u32 %v723, 7
        %v725 = vsub.s32 0, %v724
        %v726 = vrot.slane %v689, %v725
        %v727 = vlaneseq
        %v728 = vshrl.u32 %v727, 7
        %v729 = vsub.s32 0, %v728
        %v730 = vrot.slane %v690, %v729
        %v740 = vunpack.c.l.b16 %v426
        %v741 = vunpack.c.h.b16 %v426
        %v742 = vpack.c.b16 %v740, %v740
        %v743 = vpack.c.b16 %v741, %v741
        %v778 = vunpack.c.l.b16 %v427
        %v779 = vunpack.c.l.b16 %v428
        %v780 = vunpack.c.l.b16 %v429
        %v781 = vunpack.c.l.b16 %v430
        %v782 = vunpack.c.l.b16 %v431
        %v783 = vunpack.c.l.b16 %v432
        %v784 = vunpack.c.l.b16 %v433
        %v785 = vunpack.c.l.b16 %v434
        %v786 = vunpack.c.l.b16 %v435
        %v787 = vunpack.c.l.b16 %v436
        %v788 = vunpack.c.l.b16 %v437
        %v789 = vunpack.c.l.b16 %v438
        %v790 = vunpack.c.l.b16 %v439
        %v791 = vunpack.c.l.b16 %v440
        %v792 = vunpack.c.l.b16 %v441
        %v793 = vunpack.c.l.b16 %v442
        %v794 = vunpack.c.l.b16 %v443
        %v795 = vunpack.c.l.b16 %v444
        %v796 = vunpack.c.l.b16 %v445
        %v797 = vunpack.c.l.b16 %v446
        %v798 = vunpack.c.l.b16 %v447
        %v799 = vunpack.c.l.b16 %v448
        %v800 = vunpack.c.l.b16 %v449
        %v801 = vunpack.c.l.b16 %v450
        %v802 = vunpack.c.l.b16 %v451
        %v803 = vunpack.c.l.b16 %v452
        %v804 = vunpack.c.l.b16 %v453
        %v805 = vunpack.c.l.b16 %v454
        %v806 = vunpack.c.l.b16 %v455
        %v807 = vunpack.c.l.b16 %v456
        %v808 = vunpack.c.l.b16 %v457
        %v809 = vunpack.c.l.b16 %v458
        %v810 = vpack.c.b16 %v779, %v778
        %v811 = vpack.c.b16 %v781, %v780
        %v812 = vpack.c.b16 %v783, %v782
        %v813 = vpack.c.b16 %v785, %v784
        %v814 = vpack.c.b16 %v787, %v786
        %v815 = vpack.c.b16 %v789, %v788
        %v816 = vpack.c.b16 %v791, %v790
        %v817 = vpack.c.b16 %v793, %v792
        %v818 = vpack.c.b16 %v795, %v794
        %v819 = vpack.c.b16 %v797, %v796
        %v820 = vpack.c.b16 %v799, %v798
        %v821 = vpack.c.b16 %v801, %v800
        %v822 = vpack.c.b16 %v803, %v802
        %v823 = vpack.c.b16 %v805, %v804
        %v824 = vpack.c.b16 %v807, %v806
        %v825 = vpack.c.b16 %v809, %v808
        %842 = vmatprep.subr.bf16.mxu0 0
        %843 = vmatpush1.bf16.msra.mxu0 %v810
        %844 = vmatprep.subr.bf16.mxu0 0
        %845 = vmatpush1.bf16.msra.mxu0 %v811
        %846 = vmatprep.subr.bf16.mxu0 0
        %847 = vmatpush1.bf16.msra.mxu0 %v812
        %848 = vmatprep.subr.bf16.mxu0 0
        %849 = vmatpush1.bf16.msra.mxu0 %v813
        %850 = vmatprep.subr.bf16.mxu0 0
        %851 = vmatpush1.bf16.msra.mxu0 %v814
        %852 = vmatprep.subr.bf16.mxu0 0
        %853 = vmatpush1.bf16.msra.mxu0 %v815
        %854 = vmatprep.subr.bf16.mxu0 0
        %855 = vmatpush1.bf16.msra.mxu0 %v816
        %856 = vmatprep.subr.bf16.mxu0 0
        %857 = vmatpush1.bf16.msra.mxu0 %v817
        %858 = vmatprep.subr.bf16.mxu0 0
        %859 = vmatpush1.bf16.msra.mxu0 %v818
        %860 = vmatprep.subr.bf16.mxu0 0
        %861 = vmatpush1.bf16.msra.mxu0 %v819
        %862 = vmatprep.subr.bf16.mxu0 0
        %863 = vmatpush1.bf16.msra.mxu0 %v820
        %864 = vmatprep.subr.bf16.mxu0 0
        %865 = vmatpush1.bf16.msra.mxu0 %v821
        %866 = vmatprep.subr.bf16.mxu0 0
        %867 = vmatpush1.bf16.msra.mxu0 %v822
        %868 = vmatprep.subr.bf16.mxu0 0
        %869 = vmatpush1.bf16.msra.mxu0 %v823
        %870 = vmatprep.subr.bf16.mxu0 0
        %871 = vmatpush1.bf16.msra.mxu0 %v824
        %872 = vmatprep.subr.bf16.mxu0 0
        %873 = vmatpush1.bf16.msra.mxu0 %v825
        %874 = vmatprep.mubr.bf16.mxu0 %v743
        %875 = vmatmul.mubr.bf16.gmra.mrb[0].mxu0 %v742
        %v876 = vpop.f32.mrb[0].mxu0
        %v877 = vadd.f32 %v702, %v876
        %v878 = vpop.f32.mrb[0].mxu0
        %v879 = vpop.f32.mrb[0].mxu0
        %v880 = vpop.f32.mrb[0].mxu0
        %881 = vdwg.mxu0
        %v914 = vunpack.c.l.b16 %v459
        %v915 = vunpack.c.l.b16 %v460
        %v916 = vunpack.c.l.b16 %v461
        %v917 = vunpack.c.l.b16 %v462
        %v918 = vunpack.c.l.b16 %v463
        %v919 = vunpack.c.l.b16 %v464
        %v920 = vunpack.c.l.b16 %v465
        %v921 = vunpack.c.l.b16 %v466
        %v922 = vunpack.c.l.b16 %v467
        %v923 = vunpack.c.l.b16 %v468
        %v924 = vunpack.c.l.b16 %v469
        %v925 = vunpack.c.l.b16 %v470
        %v926 = vunpack.c.l.b16 %v471
        %v927 = vunpack.c.l.b16 %v472
        %v928 = vunpack.c.l.b16 %v473
        %v929 = vunpack.c.l.b16 %v474
        %v930 = vunpack.c.l.b16 %v475
        %v931 = vunpack.c.l.b16 %v476
        %v932 = vunpack.c.l.b16 %v477
        %v933 = vunpack.c.l.b16 %v478
        %v934 = vunpack.c.l.b16 %v479
        %v935 = vunpack.c.l.b16 %v480
        %v936 = vunpack.c.l.b16 %v481
        %v937 = vunpack.c.l.b16 %v482
        %v938 = vunpack.c.l.b16 %v483
        %v939 = vunpack.c.l.b16 %v484
        %v940 = vunpack.c.l.b16 %v485
        %v941 = vunpack.c.l.b16 %v486
        %v942 = vunpack.c.l.b16 %v487
        %v943 = vunpack.c.l.b16 %v488
        %v944 = vunpack.c.l.b16 %v489
        %v945 = vunpack.c.l.b16 %v490
        %v946 = vpack.c.b16 %v915, %v914
        %v947 = vpack.c.b16 %v917, %v916
        %v948 = vpack.c.b16 %v919, %v918
        %v949 = vpack.c.b16 %v921, %v920
        %v950 = vpack.c.b16 %v923, %v922
        %v951 = vpack.c.b16 %v925, %v924
        %v952 = vpack.c.b16 %v927, %v926
        %v953 = vpack.c.b16 %v929, %v928
        %v954 = vpack.c.b16 %v931, %v930
        %v955 = vpack.c.b16 %v933, %v932
        %v956 = vpack.c.b16 %v935, %v934
        %v957 = vpack.c.b16 %v937, %v936
        %v958 = vpack.c.b16 %v939, %v938
        %v959 = vpack.c.b16 %v941, %v940
        %v960 = vpack.c.b16 %v943, %v942
        %v961 = vpack.c.b16 %v945, %v944
        %978 = vmatprep.subr.bf16.mxu0 0
        %979 = vmatpush1.bf16.msra.mxu0 %v946
        %980 = vmatprep.subr.bf16.mxu0 0
        %981 = vmatpush1.bf16.msra.mxu0 %v947
        %982 = vmatprep.subr.bf16.mxu0 0
        %983 = vmatpush1.bf16.msra.mxu0 %v948
        %984 = vmatprep.subr.bf16.mxu0 0
        %985 = vmatpush1.bf16.msra.mxu0 %v949
        %986 = vmatprep.subr.bf16.mxu0 0
        %987 = vmatpush1.bf16.msra.mxu0 %v950
        %988 = vmatprep.subr.bf16.mxu0 0
        %989 = vmatpush1.bf16.msra.mxu0 %v951
        %990 = vmatprep.subr.bf16.mxu0 0
        %991 = vmatpush1.bf16.msra.mxu0 %v952
        %992 = vmatprep.subr.bf16.mxu0 0
        %993 = vmatpush1.bf16.msra.mxu0 %v953
        %994 = vmatprep.subr.bf16.mxu0 0
        %995 = vmatpush1.bf16.msra.mxu0 %v954
        %996 = vmatprep.subr.bf16.mxu0 0
        %997 = vmatpush1.bf16.msra.mxu0 %v955
        %998 = vmatprep.subr.bf16.mxu0 0
        %999 = vmatpush1.bf16.msra.mxu0 %v956
        %1000 = vmatprep.subr.bf16.mxu0 0
        %1001 = vmatpush1.bf16.msra.mxu0 %v957
        %1002 = vmatprep.subr.bf16.mxu0 0
        %1003 = vmatpush1.bf16.msra.mxu0 %v958
        %1004 = vmatprep.subr.bf16.mxu0 0
        %1005 = vmatpush1.bf16.msra.mxu0 %v959
        %1006 = vmatprep.subr.bf16.mxu0 0
        %1007 = vmatpush1.bf16.msra.mxu0 %v960
        %1008 = vmatprep.subr.bf16.mxu0 0
        %1009 = vmatpush1.bf16.msra.mxu0 %v961
        %1010 = vmatprep.mubr.bf16.mxu0 %v743
        %1011 = vmatmul.mubr.bf16.gmra.mrb[0].mxu0 %v742
        %v1012 = vpop.f32.mrb[0].mxu0
        %v1013 = vadd.f32 %v706, %v1012
        %v1014 = vpop.f32.mrb[0].mxu0
        %v1015 = vpop.f32.mrb[0].mxu0
        %v1016 = vpop.f32.mrb[0].mxu0
        %1017 = vdwg.mxu0
        %v1050 = vunpack.c.l.b16 %v491
        %v1051 = vunpack.c.l.b16 %v492
        %v1052 = vunpack.c.l.b16 %v493
        %v1053 = vunpack.c.l.b16 %v494
        %v1054 = vunpack.c.l.b16 %v495
        %v1055 = vunpack.c.l.b16 %v496
        %v1056 = vunpack.c.l.b16 %v497
        %v1057 = vunpack.c.l.b16 %v498
        %v1058 = vunpack.c.l.b16 %v499
        %v1059 = vunpack.c.l.b16 %v500
        %v1060 = vunpack.c.l.b16 %v501
        %v1061 = vunpack.c.l.b16 %v502
        %v1062 = vunpack.c.l.b16 %v503
        %v1063 = vunpack.c.l.b16 %v504
        %v1064 = vunpack.c.l.b16 %v505
        %v1065 = vunpack.c.l.b16 %v506
        %v1066 = vunpack.c.l.b16 %v507
        %v1067 = vunpack.c.l.b16 %v508
        %v1068 = vunpack.c.l.b16 %v509
        %v1069 = vunpack.c.l.b16 %v510
        %v1070 = vunpack.c.l.b16 %v511
        %v1071 = vunpack.c.l.b16 %v512
        %v1072 = vunpack.c.l.b16 %v513
        %v1073 = vunpack.c.l.b16 %v514
        %v1074 = vunpack.c.l.b16 %v515
        %v1075 = vunpack.c.l.b16 %v516
        %v1076 = vunpack.c.l.b16 %v517
        %v1077 = vunpack.c.l.b16 %v518
        %v1078 = vunpack.c.l.b16 %v519
        %v1079 = vunpack.c.l.b16 %v520
        %v1080 = vunpack.c.l.b16 %v521
        %v1081 = vunpack.c.l.b16 %v522
        %v1082 = vpack.c.b16 %v1051, %v1050
        %v1083 = vpack.c.b16 %v1053, %v1052
        %v1084 = vpack.c.b16 %v1055, %v1054
        %v1085 = vpack.c.b16 %v1057, %v1056
        %v1086 = vpack.c.b16 %v1059, %v1058
        %v1087 = vpack.c.b16 %v1061, %v1060
        %v1088 = vpack.c.b16 %v1063, %v1062
        %v1089 = vpack.c.b16 %v1065, %v1064
        %v1090 = vpack.c.b16 %v1067, %v1066
        %v1091 = vpack.c.b16 %v1069, %v1068
        %v1092 = vpack.c.b16 %v1071, %v1070
        %v1093 = vpack.c.b16 %v1073, %v1072
        %v1094 = vpack.c.b16 %v1075, %v1074
        %v1095 = vpack.c.b16 %v1077, %v1076
        %v1096 = vpack.c.b16 %v1079, %v1078
        %v1097 = vpack.c.b16 %v1081, %v1080
        %1114 = vmatprep.subr.bf16.mxu0 0
        %1115 = vmatpush1.bf16.msra.mxu0 %v1082
        %1116 = vmatprep.subr.bf16.mxu0 0
        %1117 = vmatpush1.bf16.msra.mxu0 %v1083
        %1118 = vmatprep.subr.bf16.mxu0 0
        %1119 = vmatpush1.bf16.msra.mxu0 %v1084
        %1120 = vmatprep.subr.bf16.mxu0 0
        %1121 = vmatpush1.bf16.msra.mxu0 %v1085
        %1122 = vmatprep.subr.bf16.mxu0 0
        %1123 = vmatpush1.bf16.msra.mxu0 %v1086
        %1124 = vmatprep.subr.bf16.mxu0 0
        %1125 = vmatpush1.bf16.msra.mxu0 %v1087
        %1126 = vmatprep.subr.bf16.mxu0 0
        %1127 = vmatpush1.bf16.msra.mxu0 %v1088
        %1128 = vmatprep.subr.bf16.mxu0 0
        %1129 = vmatpush1.bf16.msra.mxu0 %v1089
        %1130 = vmatprep.subr.bf16.mxu0 0
        %1131 = vmatpush1.bf16.msra.mxu0 %v1090
        %1132 = vmatprep.subr.bf16.mxu0 0
        %1133 = vmatpush1.bf16.msra.mxu0 %v1091
        %1134 = vmatprep.subr.bf16.mxu0 0
        %1135 = vmatpush1.bf16.msra.mxu0 %v1092
        %1136 = vmatprep.subr.bf16.mxu0 0
        %1137 = vmatpush1.bf16.msra.mxu0 %v1093
        %1138 = vmatprep.subr.bf16.mxu0 0
        %1139 = vmatpush1.bf16.msra.mxu0 %v1094
        %1140 = vmatprep.subr.bf16.mxu0 0
        %1141 = vmatpush1.bf16.msra.mxu0 %v1095
        %1142 = vmatprep.subr.bf16.mxu0 0
        %1143 = vmatpush1.bf16.msra.mxu0 %v1096
        %1144 = vmatprep.subr.bf16.mxu0 0
        %1145 = vmatpush1.bf16.msra.mxu0 %v1097
        %1146 = vmatprep.mubr.bf16.mxu0 %v743
        %1147 = vmatmul.mubr.bf16.gmra.mrb[0].mxu0 %v742
        %v1148 = vpop.f32.mrb[0].mxu0
        %v1149 = vadd.f32 %v710, %v1148
        %v1150 = vpop.f32.mrb[0].mxu0
        %v1151 = vpop.f32.mrb[0].mxu0
        %v1152 = vpop.f32.mrb[0].mxu0
        %1153 = vdwg.mxu0
        %v1186 = vunpack.c.l.b16 %v523
        %v1187 = vunpack.c.l.b16 %v524
        %v1188 = vunpack.c.l.b16 %v525
        %v1189 = vunpack.c.l.b16 %v526
        %v1190 = vunpack.c.l.b16 %v527
        %v1191 = vunpack.c.l.b16 %v528
        %v1192 = vunpack.c.l.b16 %v529
        %v1193 = vunpack.c.l.b16 %v530
        %v1194 = vunpack.c.l.b16 %v531
        %v1195 = vunpack.c.l.b16 %v532
        %v1196 = vunpack.c.l.b16 %v533
        %v1197 = vunpack.c.l.b16 %v534
        %v1198 = vunpack.c.l.b16 %v535
        %v1199 = vunpack.c.l.b16 %v536
        %v1200 = vunpack.c.l.b16 %v537
        %v1201 = vunpack.c.l.b16 %v538
        %v1202 = vunpack.c.l.b16 %v539
        %v1203 = vunpack.c.l.b16 %v540
        %v1204 = vunpack.c.l.b16 %v541
        %v1205 = vunpack.c.l.b16 %v542
        %v1206 = vunpack.c.l.b16 %v543
        %v1207 = vunpack.c.l.b16 %v544
        %v1208 = vunpack.c.l.b16 %v545
        %v1209 = vunpack.c.l.b16 %v546
        %v1210 = vunpack.c.l.b16 %v547
        %v1211 = vunpack.c.l.b16 %v548
        %v1212 = vunpack.c.l.b16 %v549
        %v1213 = vunpack.c.l.b16 %v550
        %v1214 = vunpack.c.l.b16 %v551
        %v1215 = vunpack.c.l.b16 %v552
        %v1216 = vunpack.c.l.b16 %v553
        %v1217 = vunpack.c.l.b16 %v554
        %v1218 = vpack.c.b16 %v1187, %v1186
        %v1219 = vpack.c.b16 %v1189, %v1188
        %v1220 = vpack.c.b16 %v1191, %v1190
        %v1221 = vpack.c.b16 %v1193, %v1192
        %v1222 = vpack.c.b16 %v1195, %v1194
        %v1223 = vpack.c.b16 %v1197, %v1196
        %v1224 = vpack.c.b16 %v1199, %v1198
        %v1225 = vpack.c.b16 %v1201, %v1200
        %v1226 = vpack.c.b16 %v1203, %v1202
        %v1227 = vpack.c.b16 %v1205, %v1204
        %v1228 = vpack.c.b16 %v1207, %v1206
        %v1229 = vpack.c.b16 %v1209, %v1208
        %v1230 = vpack.c.b16 %v1211, %v1210
        %v1231 = vpack.c.b16 %v1213, %v1212
        %v1232 = vpack.c.b16 %v1215, %v1214
        %v1233 = vpack.c.b16 %v1217, %v1216
        %1250 = vmatprep.subr.bf16.mxu0 0
        %1251 = vmatpush1.bf16.msra.mxu0 %v1218
        %1252 = vmatprep.subr.bf16.mxu0 0
        %1253 = vmatpush1.bf16.msra.mxu0 %v1219
        %1254 = vmatprep.subr.bf16.mxu0 0
        %1255 = vmatpush1.bf16.msra.mxu0 %v1220
        %1256 = vmatprep.subr.bf16.mxu0 0
        %1257 = vmatpush1.bf16.msra.mxu0 %v1221
        %1258 = vmatprep.subr.bf16.mxu0 0
        %1259 = vmatpush1.bf16.msra.mxu0 %v1222
        %1260 = vmatprep.subr.bf16.mxu0 0
        %1261 = vmatpush1.bf16.msra.mxu0 %v1223
        %1262 = vmatprep.subr.bf16.mxu0 0
        %1263 = vmatpush1.bf16.msra.mxu0 %v1224
        %1264 = vmatprep.subr.bf16.mxu0 0
        %1265 = vmatpush1.bf16.msra.mxu0 %v1225
        %1266 = vmatprep.subr.bf16.mxu0 0
        %1267 = vmatpush1.bf16.msra.mxu0 %v1226
        %1268 = vmatprep.subr.bf16.mxu0 0
        %1269 = vmatpush1.bf16.msra.mxu0 %v1227
        %1270 = vmatprep.subr.bf16.mxu0 0
        %1271 = vmatpush1.bf16.msra.mxu0 %v1228
        %1272 = vmatprep.subr.bf16.mxu0 0
        %1273 = vmatpush1.bf16.msra.mxu0 %v1229
        %1274 = vmatprep.subr.bf16.mxu0 0
        %1275 = vmatpush1.bf16.msra.mxu0 %v1230
        %1276 = vmatprep.subr.bf16.mxu0 0
        %1277 = vmatpush1.bf16.msra.mxu0 %v1231
        %1278 = vmatprep.subr.bf16.mxu0 0
        %1279 = vmatpush1.bf16.msra.mxu0 %v1232
        %1280 = vmatprep.subr.bf16.mxu0 0
        %1281 = vmatpush1.bf16.msra.mxu0 %v1233
        %1282 = vmatprep.mubr.bf16.mxu0 %v743
        %1283 = vmatmul.mubr.bf16.gmra.mrb[0].mxu0 %v742
        %v1284 = vpop.f32.mrb[0].mxu0
        %v1285 = vadd.f32 %v714, %v1284
        %v1286 = vpop.f32.mrb[0].mxu0
        %v1287 = vpop.f32.mrb[0].mxu0
        %v1288 = vpop.f32.mrb[0].mxu0
        %1289 = vdwg.mxu0
        %v1322 = vunpack.c.l.b16 %v555
        %v1323 = vunpack.c.l.b16 %v556
        %v1324 = vunpack.c.l.b16 %v557
        %v1325 = vunpack.c.l.b16 %v558
        %v1326 = vunpack.c.l.b16 %v559
        %v1327 = vunpack.c.l.b16 %v560
        %v1328 = vunpack.c.l.b16 %v561
        %v1329 = vunpack.c.l.b16 %v562
        %v1330 = vunpack.c.l.b16 %v563
        %v1331 = vunpack.c.l.b16 %v564
        %v1332 = vunpack.c.l.b16 %v565
        %v1333 = vunpack.c.l.b16 %v566
        %v1334 = vunpack.c.l.b16 %v567
        %v1335 = vunpack.c.l.b16 %v568
        %v1336 = vunpack.c.l.b16 %v569
        %v1337 = vunpack.c.l.b16 %v570
        %v1338 = vunpack.c.l.b16 %v571
        %v1339 = vunpack.c.l.b16 %v572
        %v1340 = vunpack.c.l.b16 %v573
        %v1341 = vunpack.c.l.b16 %v574
        %v1342 = vunpack.c.l.b16 %v575
        %v1343 = vunpack.c.l.b16 %v576
        %v1344 = vunpack.c.l.b16 %v577
        %v1345 = vunpack.c.l.b16 %v578
        %v1346 = vunpack.c.l.b16 %v579
        %v1347 = vunpack.c.l.b16 %v580
        %v1348 = vunpack.c.l.b16 %v581
        %v1349 = vunpack.c.l.b16 %v582
        %v1350 = vunpack.c.l.b16 %v583
        %v1351 = vunpack.c.l.b16 %v584
        %v1352 = vunpack.c.l.b16 %v585
        %v1353 = vunpack.c.l.b16 %v586
        %v1354 = vpack.c.b16 %v1323, %v1322
        %v1355 = vpack.c.b16 %v1325, %v1324
        %v1356 = vpack.c.b16 %v1327, %v1326
        %v1357 = vpack.c.b16 %v1329, %v1328
        %v1358 = vpack.c.b16 %v1331, %v1330
        %v1359 = vpack.c.b16 %v1333, %v1332
        %v1360 = vpack.c.b16 %v1335, %v1334
        %v1361 = vpack.c.b16 %v1337, %v1336
        %v1362 = vpack.c.b16 %v1339, %v1338
        %v1363 = vpack.c.b16 %v1341, %v1340
        %v1364 = vpack.c.b16 %v1343, %v1342
        %v1365 = vpack.c.b16 %v1345, %v1344
        %v1366 = vpack.c.b16 %v1347, %v1346
        %v1367 = vpack.c.b16 %v1349, %v1348
        %v1368 = vpack.c.b16 %v1351, %v1350
        %v1369 = vpack.c.b16 %v1353, %v1352
        %1386 = vmatprep.subr.bf16.mxu0 0
        %1387 = vmatpush1.bf16.msra.mxu0 %v1354
        %1388 = vmatprep.subr.bf16.mxu0 0
        %1389 = vmatpush1.bf16.msra.mxu0 %v1355
        %1390 = vmatprep.subr.bf16.mxu0 0
        %1391 = vmatpush1.bf16.msra.mxu0 %v1356
        %1392 = vmatprep.subr.bf16.mxu0 0
        %1393 = vmatpush1.bf16.msra.mxu0 %v1357
        %1394 = vmatprep.subr.bf16.mxu0 0
        %1395 = vmatpush1.bf16.msra.mxu0 %v1358
        %1396 = vmatprep.subr.bf16.mxu0 0
        %1397 = vmatpush1.bf16.msra.mxu0 %v1359
        %1398 = vmatprep.subr.bf16.mxu0 0
        %1399 = vmatpush1.bf16.msra.mxu0 %v1360
        %1400 = vmatprep.subr.bf16.mxu0 0
        %1401 = vmatpush1.bf16.msra.mxu0 %v1361
        %1402 = vmatprep.subr.bf16.mxu0 0
        %1403 = vmatpush1.bf16.msra.mxu0 %v1362
        %1404 = vmatprep.subr.bf16.mxu0 0
        %1405 = vmatpush1.bf16.msra.mxu0 %v1363
        %1406 = vmatprep.subr.bf16.mxu0 0
        %1407 = vmatpush1.bf16.msra.mxu0 %v1364
        %1408 = vmatprep.subr.bf16.mxu0 0
        %1409 = vmatpush1.bf16.msra.mxu0 %v1365
        %1410 = vmatprep.subr.bf16.mxu0 0
        %1411 = vmatpush1.bf16.msra.mxu0 %v1366
        %1412 = vmatprep.subr.bf16.mxu0 0
        %1413 = vmatpush1.bf16.msra.mxu0 %v1367
        %1414 = vmatprep.subr.bf16.mxu0 0
        %1415 = vmatpush1.bf16.msra.mxu0 %v1368
        %1416 = vmatprep.subr.bf16.mxu0 0
        %1417 = vmatpush1.bf16.msra.mxu0 %v1369
        %1418 = vmatprep.mubr.bf16.mxu0 %v743
        %1419 = vmatmul.mubr.bf16.gmra.mrb[0].mxu0 %v742
        %v1420 = vpop.f32.mrb[0].mxu0
        %v1421 = vadd.f32 %v718, %v1420
        %v1422 = vpop.f32.mrb[0].mxu0
        %v1423 = vpop.f32.mrb[0].mxu0
        %v1424 = vpop.f32.mrb[0].mxu0
        %1425 = vdwg.mxu0
        %v1458 = vunpack.c.l.b16 %v587
        %v1459 = vunpack.c.l.b16 %v588
        %v1460 = vunpack.c.l.b16 %v589
        %v1461 = vunpack.c.l.b16 %v590
        %v1462 = vunpack.c.l.b16 %v591
        %v1463 = vunpack.c.l.b16 %v592
        %v1464 = vunpack.c.l.b16 %v593
        %v1465 = vunpack.c.l.b16 %v594
        %v1466 = vunpack.c.l.b16 %v595
        %v1467 = vunpack.c.l.b16 %v596
        %v1468 = vunpack.c.l.b16 %v597
        %v1469 = vunpack.c.l.b16 %v598
        %v1470 = vunpack.c.l.b16 %v599
        %v1471 = vunpack.c.l.b16 %v600
        %v1472 = vunpack.c.l.b16 %v601
        %v1473 = vunpack.c.l.b16 %v602
        %v1474 = vunpack.c.l.b16 %v603
        %v1475 = vunpack.c.l.b16 %v604
        %v1476 = vunpack.c.l.b16 %v605
        %v1477 = vunpack.c.l.b16 %v606
        %v1478 = vunpack.c.l.b16 %v607
        %v1479 = vunpack.c.l.b16 %v608
        %v1480 = vunpack.c.l.b16 %v609
        %v1481 = vunpack.c.l.b16 %v610
        %v1482 = vunpack.c.l.b16 %v611
        %v1483 = vunpack.c.l.b16 %v612
        %v1484 = vunpack.c.l.b16 %v613
        %v1485 = vunpack.c.l.b16 %v614
        %v1486 = vunpack.c.l.b16 %v615
        %v1487 = vunpack.c.l.b16 %v616
        %v1488 = vunpack.c.l.b16 %v617
        %v1489 = vunpack.c.l.b16 %v618
        %v1490 = vpack.c.b16 %v1459, %v1458
        %v1491 = vpack.c.b16 %v1461, %v1460
        %v1492 = vpack.c.b16 %v1463, %v1462
        %v1493 = vpack.c.b16 %v1465, %v1464
        %v1494 = vpack.c.b16 %v1467, %v1466
        %v1495 = vpack.c.b16 %v1469, %v1468
        %v1496 = vpack.c.b16 %v1471, %v1470
        %v1497 = vpack.c.b16 %v1473, %v1472
        %v1498 = vpack.c.b16 %v1475, %v1474
        %v1499 = vpack.c.b16 %v1477, %v1476
        %v1500 = vpack.c.b16 %v1479, %v1478
        %v1501 = vpack.c.b16 %v1481, %v1480
        %v1502 = vpack.c.b16 %v1483, %v1482
        %v1503 = vpack.c.b16 %v1485, %v1484
        %v1504 = vpack.c.b16 %v1487, %v1486
        %v1505 = vpack.c.b16 %v1489, %v1488
        %1522 = vmatprep.subr.bf16.mxu0 0
        %1523 = vmatpush1.bf16.msra.mxu0 %v1490
        %1524 = vmatprep.subr.bf16.mxu0 0
        %1525 = vmatpush1.bf16.msra.mxu0 %v1491
        %1526 = vmatprep.subr.bf16.mxu0 0
        %1527 = vmatpush1.bf16.msra.mxu0 %v1492
        %1528 = vmatprep.subr.bf16.mxu0 0
        %1529 = vmatpush1.bf16.msra.mxu0 %v1493
        %1530 = vmatprep.subr.bf16.mxu0 0
        %1531 = vmatpush1.bf16.msra.mxu0 %v1494
        %1532 = vmatprep.subr.bf16.mxu0 0
        %1533 = vmatpush1.bf16.msra.mxu0 %v1495
        %1534 = vmatprep.subr.bf16.mxu0 0
        %1535 = vmatpush1.bf16.msra.mxu0 %v1496
        %1536 = vmatprep.subr.bf16.mxu0 0
        %1537 = vmatpush1.bf16.msra.mxu0 %v1497
        %1538 = vmatprep.subr.bf16.mxu0 0
        %1539 = vmatpush1.bf16.msra.mxu0 %v1498
        %1540 = vmatprep.subr.bf16.mxu0 0
        %1541 = vmatpush1.bf16.msra.mxu0 %v1499
        %1542 = vmatprep.subr.bf16.mxu0 0
        %1543 = vmatpush1.bf16.msra.mxu0 %v1500
        %1544 = vmatprep.subr.bf16.mxu0 0
        %1545 = vmatpush1.bf16.msra.mxu0 %v1501
        %1546 = vmatprep.subr.bf16.mxu0 0
        %1547 = vmatpush1.bf16.msra.mxu0 %v1502
        %1548 = vmatprep.subr.bf16.mxu0 0
        %1549 = vmatpush1.bf16.msra.mxu0 %v1503
        %1550 = vmatprep.subr.bf16.mxu0 0
        %1551 = vmatpush1.bf16.msra.mxu0 %v1504
        %1552 = vmatprep.subr.bf16.mxu0 0
        %1553 = vmatpush1.bf16.msra.mxu0 %v1505
        %1554 = vmatprep.mubr.bf16.mxu0 %v743
        %1555 = vmatmul.mubr.bf16.gmra.mrb[0].mxu0 %v742
        %v1556 = vpop.f32.mrb[0].mxu0
        %v1557 = vadd.f32 %v722, %v1556
        %v1558 = vpop.f32.mrb[0].mxu0
        %v1559 = vpop.f32.mrb[0].mxu0
        %v1560 = vpop.f32.mrb[0].mxu0
        %1561 = vdwg.mxu0
        %v1594 = vunpack.c.l.b16 %v619
        %v1595 = vunpack.c.l.b16 %v620
        %v1596 = vunpack.c.l.b16 %v621
        %v1597 = vunpack.c.l.b16 %v622
        %v1598 = vunpack.c.l.b16 %v623
        %v1599 = vunpack.c.l.b16 %v624
        %v1600 = vunpack.c.l.b16 %v625
        %v1601 = vunpack.c.l.b16 %v626
        %v1602 = vunpack.c.l.b16 %v627
        %v1603 = vunpack.c.l.b16 %v628
        %v1604 = vunpack.c.l.b16 %v629
        %v1605 = vunpack.c.l.b16 %v630
        %v1606 = vunpack.c.l.b16 %v631
        %v1607 = vunpack.c.l.b16 %v632
        %v1608 = vunpack.c.l.b16 %v633
        %v1609 = vunpack.c.l.b16 %v634
        %v1610 = vunpack.c.l.b16 %v635
        %v1611 = vunpack.c.l.b16 %v636
        %v1612 = vunpack.c.l.b16 %v637
        %v1613 = vunpack.c.l.b16 %v638
        %v1614 = vunpack.c.l.b16 %v639
        %v1615 = vunpack.c.l.b16 %v640
        %v1616 = vunpack.c.l.b16 %v641
        %v1617 = vunpack.c.l.b16 %v642
        %v1618 = vunpack.c.l.b16 %v643
        %v1619 = vunpack.c.l.b16 %v644
        %v1620 = vunpack.c.l.b16 %v645
        %v1621 = vunpack.c.l.b16 %v646
        %v1622 = vunpack.c.l.b16 %v647
        %v1623 = vunpack.c.l.b16 %v648
        %v1624 = vunpack.c.l.b16 %v649
        %v1625 = vunpack.c.l.b16 %v650
        %v1626 = vpack.c.b16 %v1595, %v1594
        %v1627 = vpack.c.b16 %v1597, %v1596
        %v1628 = vpack.c.b16 %v1599, %v1598
        %v1629 = vpack.c.b16 %v1601, %v1600
        %v1630 = vpack.c.b16 %v1603, %v1602
        %v1631 = vpack.c.b16 %v1605, %v1604
        %v1632 = vpack.c.b16 %v1607, %v1606
        %v1633 = vpack.c.b16 %v1609, %v1608
        %v1634 = vpack.c.b16 %v1611, %v1610
        %v1635 = vpack.c.b16 %v1613, %v1612
        %v1636 = vpack.c.b16 %v1615, %v1614
        %v1637 = vpack.c.b16 %v1617, %v1616
        %v1638 = vpack.c.b16 %v1619, %v1618
        %v1639 = vpack.c.b16 %v1621, %v1620
        %v1640 = vpack.c.b16 %v1623, %v1622
        %v1641 = vpack.c.b16 %v1625, %v1624
        %1658 = vmatprep.subr.bf16.mxu0 0
        %1659 = vmatpush1.bf16.msra.mxu0 %v1626
        %1660 = vmatprep.subr.bf16.mxu0 0
        %1661 = vmatpush1.bf16.msra.mxu0 %v1627
        %1662 = vmatprep.subr.bf16.mxu0 0
        %1663 = vmatpush1.bf16.msra.mxu0 %v1628
        %1664 = vmatprep.subr.bf16.mxu0 0
        %1665 = vmatpush1.bf16.msra.mxu0 %v1629
        %1666 = vmatprep.subr.bf16.mxu0 0
        %1667 = vmatpush1.bf16.msra.mxu0 %v1630
        %1668 = vmatprep.subr.bf16.mxu0 0
        %1669 = vmatpush1.bf16.msra.mxu0 %v1631
        %1670 = vmatprep.subr.bf16.mxu0 0
        %1671 = vmatpush1.bf16.msra.mxu0 %v1632
        %1672 = vmatprep.subr.bf16.mxu0 0
        %1673 = vmatpush1.bf16.msra.mxu0 %v1633
        %1674 = vmatprep.subr.bf16.mxu0 0
        %1675 = vmatpush1.bf16.msra.mxu0 %v1634
        %1676 = vmatprep.subr.bf16.mxu0 0
        %1677 = vmatpush1.bf16.msra.mxu0 %v1635
        %1678 = vmatprep.subr.bf16.mxu0 0
        %1679 = vmatpush1.bf16.msra.mxu0 %v1636
        %1680 = vmatprep.subr.bf16.mxu0 0
        %1681 = vmatpush1.bf16.msra.mxu0 %v1637
        %1682 = vmatprep.subr.bf16.mxu0 0
        %1683 = vmatpush1.bf16.msra.mxu0 %v1638
        %1684 = vmatprep.subr.bf16.mxu0 0
        %1685 = vmatpush1.bf16.msra.mxu0 %v1639
        %1686 = vmatprep.subr.bf16.mxu0 0
        %1687 = vmatpush1.bf16.msra.mxu0 %v1640
        %1688 = vmatprep.subr.bf16.mxu0 0
        %1689 = vmatpush1.bf16.msra.mxu0 %v1641
        %1690 = vmatprep.mubr.bf16.mxu0 %v743
        %1691 = vmatmul.mubr.bf16.gmra.mrb[0].mxu0 %v742
        %v1692 = vpop.f32.mrb[0].mxu0
        %v1693 = vadd.f32 %v726, %v1692
        %v1694 = vpop.f32.mrb[0].mxu0
        %v1695 = vpop.f32.mrb[0].mxu0
        %v1696 = vpop.f32.mrb[0].mxu0
        %1697 = vdwg.mxu0
        %v1730 = vunpack.c.l.b16 %v651
        %v1731 = vunpack.c.l.b16 %v652
        %v1732 = vunpack.c.l.b16 %v653
        %v1733 = vunpack.c.l.b16 %v654
        %v1734 = vunpack.c.l.b16 %v655
        %v1735 = vunpack.c.l.b16 %v656
        %v1736 = vunpack.c.l.b16 %v657
        %v1737 = vunpack.c.l.b16 %v658
        %v1738 = vunpack.c.l.b16 %v659
        %v1739 = vunpack.c.l.b16 %v660
        %v1740 = vunpack.c.l.b16 %v661
        %v1741 = vunpack.c.l.b16 %v662
        %v1742 = vunpack.c.l.b16 %v663
        %v1743 = vunpack.c.l.b16 %v664
        %v1744 = vunpack.c.l.b16 %v665
        %v1745 = vunpack.c.l.b16 %v666
        %v1746 = vunpack.c.l.b16 %v667
        %v1747 = vunpack.c.l.b16 %v668
        %v1748 = vunpack.c.l.b16 %v669
        %v1749 = vunpack.c.l.b16 %v670
        %v1750 = vunpack.c.l.b16 %v671
        %v1751 = vunpack.c.l.b16 %v672
        %v1752 = vunpack.c.l.b16 %v673
        %v1753 = vunpack.c.l.b16 %v674
        %v1754 = vunpack.c.l.b16 %v675
        %v1755 = vunpack.c.l.b16 %v676
        %v1756 = vunpack.c.l.b16 %v677
        %v1757 = vunpack.c.l.b16 %v678
        %v1758 = vunpack.c.l.b16 %v679
        %v1759 = vunpack.c.l.b16 %v680
        %v1760 = vunpack.c.l.b16 %v681
        %v1761 = vunpack.c.l.b16 %v682
        %v1762 = vpack.c.b16 %v1731, %v1730
        %v1763 = vpack.c.b16 %v1733, %v1732
        %v1764 = vpack.c.b16 %v1735, %v1734
        %v1765 = vpack.c.b16 %v1737, %v1736
        %v1766 = vpack.c.b16 %v1739, %v1738
        %v1767 = vpack.c.b16 %v1741, %v1740
        %v1768 = vpack.c.b16 %v1743, %v1742
        %v1769 = vpack.c.b16 %v1745, %v1744
        %v1770 = vpack.c.b16 %v1747, %v1746
        %v1771 = vpack.c.b16 %v1749, %v1748
        %v1772 = vpack.c.b16 %v1751, %v1750
        %v1773 = vpack.c.b16 %v1753, %v1752
        %v1774 = vpack.c.b16 %v1755, %v1754
        %v1775 = vpack.c.b16 %v1757, %v1756
        %v1776 = vpack.c.b16 %v1759, %v1758
        %v1777 = vpack.c.b16 %v1761, %v1760
        %1794 = vmatprep.subr.bf16.mxu0 0
        %1795 = vmatpush1.bf16.msra.mxu0 %v1762
        %1796 = vmatprep.subr.bf16.mxu0 0
        %1797 = vmatpush1.bf16.msra.mxu0 %v1763
        %1798 = vmatprep.subr.bf16.mxu0 0
        %1799 = vmatpush1.bf16.msra.mxu0 %v1764
        %1800 = vmatprep.subr.bf16.mxu0 0
        %1801 = vmatpush1.bf16.msra.mxu0 %v1765
        %1802 = vmatprep.subr.bf16.mxu0 0
        %1803 = vmatpush1.bf16.msra.mxu0 %v1766
        %1804 = vmatprep.subr.bf16.mxu0 0
        %1805 = vmatpush1.bf16.msra.mxu0 %v1767
        %1806 = vmatprep.subr.bf16.mxu0 0
        %1807 = vmatpush1.bf16.msra.mxu0 %v1768
        %1808 = vmatprep.subr.bf16.mxu0 0
        %1809 = vmatpush1.bf16.msra.mxu0 %v1769
        %1810 = vmatprep.subr.bf16.mxu0 0
        %1811 = vmatpush1.bf16.msra.mxu0 %v1770
        %1812 = vmatprep.subr.bf16.mxu0 0
        %1813 = vmatpush1.bf16.msra.mxu0 %v1771
        %1814 = vmatprep.subr.bf16.mxu0 0
        %1815 = vmatpush1.bf16.msra.mxu0 %v1772
        %1816 = vmatprep.subr.bf16.mxu0 0
        %1817 = vmatpush1.bf16.msra.mxu0 %v1773
        %1818 = vmatprep.subr.bf16.mxu0 0
        %1819 = vmatpush1.bf16.msra.mxu0 %v1774
        %1820 = vmatprep.subr.bf16.mxu0 0
        %1821 = vmatpush1.bf16.msra.mxu0 %v1775
        %1822 = vmatprep.subr.bf16.mxu0 0
        %1823 = vmatpush1.bf16.msra.mxu0 %v1776
        %1824 = vmatprep.subr.bf16.mxu0 0
        %1825 = vmatpush1.bf16.msra.mxu0 %v1777
        %1826 = vmatprep.mubr.bf16.mxu0 %v743
        %1827 = vmatmul.mubr.bf16.gmra.mrb[0].mxu0 %v742
        %v1828 = vpop.f32.mrb[0].mxu0
        %v1829 = vadd.f32 %v730, %v1828
        %v1830 = vpop.f32.mrb[0].mxu0
        %v1831 = vpop.f32.mrb[0].mxu0
        %v1832 = vpop.f32.mrb[0].mxu0
        %1833 = vdwg.mxu0
        %v1834 = vmul.f32 %v877, 0.17677669
        %v1835 = vmul.f32 %v1013, 0.17677669
        %v1836 = vmul.f32 %v1149, 0.17677669
        %v1837 = vmul.f32 %v1285, 0.17677669
        %v1838 = vmul.f32 %v1421, 0.17677669
        %v1839 = vmul.f32 %v1557, 0.17677669
        %v1840 = vmul.f32 %v1693, 0.17677669
        %v1841 = vmul.f32 %v1829, 0.17677669
        %v1842 = vld [vmem:[%s419] sm:$0xff]
        %v1843 = vld [vmem:[%s4] sm:$0xf]
        %v1844 = vld [vmem:[%s4 + $0x4] sm:$0xf]
        %v1845 = vld [vmem:[%s4 + $0x8] sm:$0xf]
        %v1846 = vld [vmem:[%s4 + $0xc] sm:$0xf]
        %v1847 = vld [vmem:[%s4 + $0x10] sm:$0xf]
        %v1848 = vld [vmem:[%s4 + $0x14] sm:$0xf]
        %v1849 = vld [vmem:[%s4 + $0x18] sm:$0xf]
        %v1850 = vld [vmem:[%s4 + $0x1c] sm:$0xf]
        %v1851 = vld [vmem:[%s4 + $0x20] sm:$0xf]
        %v1852 = vld [vmem:[%s4 + $0x24] sm:$0xf]
        %v1853 = vld [vmem:[%s4 + $0x28] sm:$0xf]
        %v1854 = vld [vmem:[%s4 + $0x2c] sm:$0xf]
        %v1855 = vld [vmem:[%s4 + $0x30] sm:$0xf]
        %v1856 = vld [vmem:[%s4 + $0x34] sm:$0xf]
        %v1857 = vld [vmem:[%s4 + $0x38] sm:$0xf]
        %v1858 = vld [vmem:[%s4 + $0x3c] sm:$0xf]
        %v1859 = vld [vmem:[%s4 + $0x40] sm:$0xf]
        %v1860 = vld [vmem:[%s4 + $0x44] sm:$0xf]
        %v1861 = vld [vmem:[%s4 + $0x48] sm:$0xf]
        %v1862 = vld [vmem:[%s4 + $0x4c] sm:$0xf]
        %v1863 = vld [vmem:[%s4 + $0x50] sm:$0xf]
        %v1864 = vld [vmem:[%s4 + $0x54] sm:$0xf]
        %v1865 = vld [vmem:[%s4 + $0x58] sm:$0xf]
        %v1866 = vld [vmem:[%s4 + $0x5c] sm:$0xf]
        %v1867 = vld [vmem:[%s4 + $0x60] sm:$0xf]
        %v1868 = vld [vmem:[%s4 + $0x64] sm:$0xf]
        %v1869 = vld [vmem:[%s4 + $0x68] sm:$0xf]
        %v1870 = vld [vmem:[%s4 + $0x6c] sm:$0xf]
        %v1871 = vld [vmem:[%s4 + $0x70] sm:$0xf]
        %v1872 = vld [vmem:[%s4 + $0x74] sm:$0xf]
        %v1873 = vld [vmem:[%s4 + $0x78] sm:$0xf]
        %v1874 = vld [vmem:[%s4 + $0x7c] sm:$0xf]
        %v1875 = vld [vmem:[%s4 + $0x80] sm:$0xf]
        %v1876 = vld [vmem:[%s4 + $0x84] sm:$0xf]
        %v1877 = vld [vmem:[%s4 + $0x88] sm:$0xf]
        %v1878 = vld [vmem:[%s4 + $0x8c] sm:$0xf]
        %v1879 = vld [vmem:[%s4 + $0x90] sm:$0xf]
        %v1880 = vld [vmem:[%s4 + $0x94] sm:$0xf]
        %v1881 = vld [vmem:[%s4 + $0x98] sm:$0xf]
        %v1882 = vld [vmem:[%s4 + $0x9c] sm:$0xf]
        %v1883 = vld [vmem:[%s4 + $0xa0] sm:$0xf]
        %v1884 = vld [vmem:[%s4 + $0xa4] sm:$0xf]
        %v1885 = vld [vmem:[%s4 + $0xa8] sm:$0xf]
        %v1886 = vld [vmem:[%s4 + $0xac] sm:$0xf]
        %v1887 = vld [vmem:[%s4 + $0xb0] sm:$0xf]
        %v1888 = vld [vmem:[%s4 + $0xb4] sm:$0xf]
        %v1889 = vld [vmem:[%s4 + $0xb8] sm:$0xf]
        %v1890 = vld [vmem:[%s4 + $0xbc] sm:$0xf]
        %v1891 = vld [vmem:[%s4 + $0xc0] sm:$0xf]
        %v1892 = vld [vmem:[%s4 + $0xc4] sm:$0xf]
        %v1893 = vld [vmem:[%s4 + $0xc8] sm:$0xf]
        %v1894 = vld [vmem:[%s4 + $0xcc] sm:$0xf]
        %v1895 = vld [vmem:[%s4 + $0xd0] sm:$0xf]
        %v1896 = vld [vmem:[%s4 + $0xd4] sm:$0xf]
        %v1897 = vld [vmem:[%s4 + $0xd8] sm:$0xf]
        %v1898 = vld [vmem:[%s4 + $0xdc] sm:$0xf]
        %v1899 = vld [vmem:[%s4 + $0xe0] sm:$0xf]
        %v1900 = vld [vmem:[%s4 + $0xe4] sm:$0xf]
        %v1901 = vld [vmem:[%s4 + $0xe8] sm:$0xf]
        %v1902 = vld [vmem:[%s4 + $0xec] sm:$0xf]
        %v1903 = vld [vmem:[%s4 + $0xf0] sm:$0xf]
        %v1904 = vld [vmem:[%s4 + $0xf4] sm:$0xf]
        %v1905 = vld [vmem:[%s4 + $0xf8] sm:$0xf]
        %v1906 = vld [vmem:[%s4 + $0xfc] sm:$0xf]
        %v1907 = vld [vmem:[%s4 + $0x100] sm:$0xf]
        %v1908 = vld [vmem:[%s4 + $0x104] sm:$0xf]
        %v1909 = vld [vmem:[%s4 + $0x108] sm:$0xf]
        %v1910 = vld [vmem:[%s4 + $0x10c] sm:$0xf]
        %v1911 = vld [vmem:[%s4 + $0x110] sm:$0xf]
        %v1912 = vld [vmem:[%s4 + $0x114] sm:$0xf]
        %v1913 = vld [vmem:[%s4 + $0x118] sm:$0xf]
        %v1914 = vld [vmem:[%s4 + $0x11c] sm:$0xf]
        %v1915 = vld [vmem:[%s4 + $0x120] sm:$0xf]
        %v1916 = vld [vmem:[%s4 + $0x124] sm:$0xf]
        %v1917 = vld [vmem:[%s4 + $0x128] sm:$0xf]
        %v1918 = vld [vmem:[%s4 + $0x12c] sm:$0xf]
        %v1919 = vld [vmem:[%s4 + $0x130] sm:$0xf]
        %v1920 = vld [vmem:[%s4 + $0x134] sm:$0xf]
        %v1921 = vld [vmem:[%s4 + $0x138] sm:$0xf]
        %v1922 = vld [vmem:[%s4 + $0x13c] sm:$0xf]
        %v1923 = vld [vmem:[%s4 + $0x140] sm:$0xf]
        %v1924 = vld [vmem:[%s4 + $0x144] sm:$0xf]
        %v1925 = vld [vmem:[%s4 + $0x148] sm:$0xf]
        %v1926 = vld [vmem:[%s4 + $0x14c] sm:$0xf]
        %v1927 = vld [vmem:[%s4 + $0x150] sm:$0xf]
        %v1928 = vld [vmem:[%s4 + $0x154] sm:$0xf]
        %v1929 = vld [vmem:[%s4 + $0x158] sm:$0xf]
        %v1930 = vld [vmem:[%s4 + $0x15c] sm:$0xf]
        %v1931 = vld [vmem:[%s4 + $0x160] sm:$0xf]
        %v1932 = vld [vmem:[%s4 + $0x164] sm:$0xf]
        %v1933 = vld [vmem:[%s4 + $0x168] sm:$0xf]
        %v1934 = vld [vmem:[%s4 + $0x16c] sm:$0xf]
        %v1935 = vld [vmem:[%s4 + $0x170] sm:$0xf]
        %v1936 = vld [vmem:[%s4 + $0x174] sm:$0xf]
        %v1937 = vld [vmem:[%s4 + $0x178] sm:$0xf]
        %v1938 = vld [vmem:[%s4 + $0x17c] sm:$0xf]
        %v1939 = vld [vmem:[%s4 + $0x180] sm:$0xf]
        %v1940 = vld [vmem:[%s4 + $0x184] sm:$0xf]
        %v1941 = vld [vmem:[%s4 + $0x188] sm:$0xf]
        %v1942 = vld [vmem:[%s4 + $0x18c] sm:$0xf]
        %v1943 = vld [vmem:[%s4 + $0x190] sm:$0xf]
        %v1944 = vld [vmem:[%s4 + $0x194] sm:$0xf]
        %v1945 = vld [vmem:[%s4 + $0x198] sm:$0xf]
        %v1946 = vld [vmem:[%s4 + $0x19c] sm:$0xf]
        %v1947 = vld [vmem:[%s4 + $0x1a0] sm:$0xf]
        %v1948 = vld [vmem:[%s4 + $0x1a4] sm:$0xf]
        %v1949 = vld [vmem:[%s4 + $0x1a8] sm:$0xf]
        %v1950 = vld [vmem:[%s4 + $0x1ac] sm:$0xf]
        %v1951 = vld [vmem:[%s4 + $0x1b0] sm:$0xf]
        %v1952 = vld [vmem:[%s4 + $0x1b4] sm:$0xf]
        %v1953 = vld [vmem:[%s4 + $0x1b8] sm:$0xf]
        %v1954 = vld [vmem:[%s4 + $0x1bc] sm:$0xf]
        %v1955 = vld [vmem:[%s4 + $0x1c0] sm:$0xf]
        %v1956 = vld [vmem:[%s4 + $0x1c4] sm:$0xf]
        %v1957 = vld [vmem:[%s4 + $0x1c8] sm:$0xf]
        %v1958 = vld [vmem:[%s4 + $0x1cc] sm:$0xf]
        %v1959 = vld [vmem:[%s4 + $0x1d0] sm:$0xf]
        %v1960 = vld [vmem:[%s4 + $0x1d4] sm:$0xf]
        %v1961 = vld [vmem:[%s4 + $0x1d8] sm:$0xf]
        %v1962 = vld [vmem:[%s4 + $0x1dc] sm:$0xf]
        %v1963 = vld [vmem:[%s4 + $0x1e0] sm:$0xf]
        %v1964 = vld [vmem:[%s4 + $0x1e4] sm:$0xf]
        %v1965 = vld [vmem:[%s4 + $0x1e8] sm:$0xf]
        %v1966 = vld [vmem:[%s4 + $0x1ec] sm:$0xf]
        %v1967 = vld [vmem:[%s4 + $0x1f0] sm:$0xf]
        %v1968 = vld [vmem:[%s4 + $0x1f4] sm:$0xf]
        %v1969 = vld [vmem:[%s4 + $0x1f8] sm:$0xf]
        %v1970 = vld [vmem:[%s4 + $0x1fc] sm:$0xf]
        %v1971 = vld [vmem:[%s4 + $0x200] sm:$0xf]
        %v1972 = vld [vmem:[%s4 + $0x204] sm:$0xf]
        %v1973 = vld [vmem:[%s4 + $0x208] sm:$0xf]
        %v1974 = vld [vmem:[%s4 + $0x20c] sm:$0xf]
        %v1975 = vld [vmem:[%s4 + $0x210] sm:$0xf]
        %v1976 = vld [vmem:[%s4 + $0x214] sm:$0xf]
        %v1977 = vld [vmem:[%s4 + $0x218] sm:$0xf]
        %v1978 = vld [vmem:[%s4 + $0x21c] sm:$0xf]
        %v1979 = vld [vmem:[%s4 + $0x220] sm:$0xf]
        %v1980 = vld [vmem:[%s4 + $0x224] sm:$0xf]
        %v1981 = vld [vmem:[%s4 + $0x228] sm:$0xf]
        %v1982 = vld [vmem:[%s4 + $0x22c] sm:$0xf]
        %v1983 = vld [vmem:[%s4 + $0x230] sm:$0xf]
        %v1984 = vld [vmem:[%s4 + $0x234] sm:$0xf]
        %v1985 = vld [vmem:[%s4 + $0x238] sm:$0xf]
        %v1986 = vld [vmem:[%s4 + $0x23c] sm:$0xf]
        %v1987 = vld [vmem:[%s4 + $0x240] sm:$0xf]
        %v1988 = vld [vmem:[%s4 + $0x244] sm:$0xf]
        %v1989 = vld [vmem:[%s4 + $0x248] sm:$0xf]
        %v1990 = vld [vmem:[%s4 + $0x24c] sm:$0xf]
        %v1991 = vld [vmem:[%s4 + $0x250] sm:$0xf]
        %v1992 = vld [vmem:[%s4 + $0x254] sm:$0xf]
        %v1993 = vld [vmem:[%s4 + $0x258] sm:$0xf]
        %v1994 = vld [vmem:[%s4 + $0x25c] sm:$0xf]
        %v1995 = vld [vmem:[%s4 + $0x260] sm:$0xf]
        %v1996 = vld [vmem:[%s4 + $0x264] sm:$0xf]
        %v1997 = vld [vmem:[%s4 + $0x268] sm:$0xf]
        %v1998 = vld [vmem:[%s4 + $0x26c] sm:$0xf]
        %v1999 = vld [vmem:[%s4 + $0x270] sm:$0xf]
        %v2000 = vld [vmem:[%s4 + $0x274] sm:$0xf]
        %v2001 = vld [vmem:[%s4 + $0x278] sm:$0xf]
        %v2002 = vld [vmem:[%s4 + $0x27c] sm:$0xf]
        %v2003 = vld [vmem:[%s4 + $0x280] sm:$0xf]
        %v2004 = vld [vmem:[%s4 + $0x284] sm:$0xf]
        %v2005 = vld [vmem:[%s4 + $0x288] sm:$0xf]
        %v2006 = vld [vmem:[%s4 + $0x28c] sm:$0xf]
        %v2007 = vld [vmem:[%s4 + $0x290] sm:$0xf]
        %v2008 = vld [vmem:[%s4 + $0x294] sm:$0xf]
        %v2009 = vld [vmem:[%s4 + $0x298] sm:$0xf]
        %v2010 = vld [vmem:[%s4 + $0x29c] sm:$0xf]
        %v2011 = vld [vmem:[%s4 + $0x2a0] sm:$0xf]
        %v2012 = vld [vmem:[%s4 + $0x2a4] sm:$0xf]
        %v2013 = vld [vmem:[%s4 + $0x2a8] sm:$0xf]
        %v2014 = vld [vmem:[%s4 + $0x2ac] sm:$0xf]
        %v2015 = vld [vmem:[%s4 + $0x2b0] sm:$0xf]
        %v2016 = vld [vmem:[%s4 + $0x2b4] sm:$0xf]
        %v2017 = vld [vmem:[%s4 + $0x2b8] sm:$0xf]
        %v2018 = vld [vmem:[%s4 + $0x2bc] sm:$0xf]
        %v2019 = vld [vmem:[%s4 + $0x2c0] sm:$0xf]
        %v2020 = vld [vmem:[%s4 + $0x2c4] sm:$0xf]
        %v2021 = vld [vmem:[%s4 + $0x2c8] sm:$0xf]
        %v2022 = vld [vmem:[%s4 + $0x2cc] sm:$0xf]
        %v2023 = vld [vmem:[%s4 + $0x2d0] sm:$0xf]
        %v2024 = vld [vmem:[%s4 + $0x2d4] sm:$0xf]
        %v2025 = vld [vmem:[%s4 + $0x2d8] sm:$0xf]
        %v2026 = vld [vmem:[%s4 + $0x2dc] sm:$0xf]
        %v2027 = vld [vmem:[%s4 + $0x2e0] sm:$0xf]
        %v2028 = vld [vmem:[%s4 + $0x2e4] sm:$0xf]
        %v2029 = vld [vmem:[%s4 + $0x2e8] sm:$0xf]
        %v2030 = vld [vmem:[%s4 + $0x2ec] sm:$0xf]
        %v2031 = vld [vmem:[%s4 + $0x2f0] sm:$0xf]
        %v2032 = vld [vmem:[%s4 + $0x2f4] sm:$0xf]
        %v2033 = vld [vmem:[%s4 + $0x2f8] sm:$0xf]
        %v2034 = vld [vmem:[%s4 + $0x2fc] sm:$0xf]
        %v2035 = vld [vmem:[%s4 + $0x300] sm:$0xf]
        %v2036 = vld [vmem:[%s4 + $0x304] sm:$0xf]
        %v2037 = vld [vmem:[%s4 + $0x308] sm:$0xf]
        %v2038 = vld [vmem:[%s4 + $0x30c] sm:$0xf]
        %v2039 = vld [vmem:[%s4 + $0x310] sm:$0xf]
        %v2040 = vld [vmem:[%s4 + $0x314] sm:$0xf]
        %v2041 = vld [vmem:[%s4 + $0x318] sm:$0xf]
        %v2042 = vld [vmem:[%s4 + $0x31c] sm:$0xf]
        %v2043 = vld [vmem:[%s4 + $0x320] sm:$0xf]
        %v2044 = vld [vmem:[%s4 + $0x324] sm:$0xf]
        %v2045 = vld [vmem:[%s4 + $0x328] sm:$0xf]
        %v2046 = vld [vmem:[%s4 + $0x32c] sm:$0xf]
        %v2047 = vld [vmem:[%s4 + $0x330] sm:$0xf]
        %v2048 = vld [vmem:[%s4 + $0x334] sm:$0xf]
        %v2049 = vld [vmem:[%s4 + $0x338] sm:$0xf]
        %v2050 = vld [vmem:[%s4 + $0x33c] sm:$0xf]
        %v2051 = vld [vmem:[%s4 + $0x340] sm:$0xf]
        %v2052 = vld [vmem:[%s4 + $0x344] sm:$0xf]
        %v2053 = vld [vmem:[%s4 + $0x348] sm:$0xf]
        %v2054 = vld [vmem:[%s4 + $0x34c] sm:$0xf]
        %v2055 = vld [vmem:[%s4 + $0x350] sm:$0xf]
        %v2056 = vld [vmem:[%s4 + $0x354] sm:$0xf]
        %v2057 = vld [vmem:[%s4 + $0x358] sm:$0xf]
        %v2058 = vld [vmem:[%s4 + $0x35c] sm:$0xf]
        %v2059 = vld [vmem:[%s4 + $0x360] sm:$0xf]
        %v2060 = vld [vmem:[%s4 + $0x364] sm:$0xf]
        %v2061 = vld [vmem:[%s4 + $0x368] sm:$0xf]
        %v2062 = vld [vmem:[%s4 + $0x36c] sm:$0xf]
        %v2063 = vld [vmem:[%s4 + $0x370] sm:$0xf]
        %v2064 = vld [vmem:[%s4 + $0x374] sm:$0xf]
        %v2065 = vld [vmem:[%s4 + $0x378] sm:$0xf]
        %v2066 = vld [vmem:[%s4 + $0x37c] sm:$0xf]
        %v2067 = vld [vmem:[%s4 + $0x380] sm:$0xf]
        %v2068 = vld [vmem:[%s4 + $0x384] sm:$0xf]
        %v2069 = vld [vmem:[%s4 + $0x388] sm:$0xf]
        %v2070 = vld [vmem:[%s4 + $0x38c] sm:$0xf]
        %v2071 = vld [vmem:[%s4 + $0x390] sm:$0xf]
        %v2072 = vld [vmem:[%s4 + $0x394] sm:$0xf]
        %v2073 = vld [vmem:[%s4 + $0x398] sm:$0xf]
        %v2074 = vld [vmem:[%s4 + $0x39c] sm:$0xf]
        %v2075 = vld [vmem:[%s4 + $0x3a0] sm:$0xf]
        %v2076 = vld [vmem:[%s4 + $0x3a4] sm:$0xf]
        %v2077 = vld [vmem:[%s4 + $0x3a8] sm:$0xf]
        %v2078 = vld [vmem:[%s4 + $0x3ac] sm:$0xf]
        %v2079 = vld [vmem:[%s4 + $0x3b0] sm:$0xf]
        %v2080 = vld [vmem:[%s4 + $0x3b4] sm:$0xf]
        %v2081 = vld [vmem:[%s4 + $0x3b8] sm:$0xf]
        %v2082 = vld [vmem:[%s4 + $0x3bc] sm:$0xf]
        %v2083 = vld [vmem:[%s4 + $0x3c0] sm:$0xf]
        %v2084 = vld [vmem:[%s4 + $0x3c4] sm:$0xf]
        %v2085 = vld [vmem:[%s4 + $0x3c8] sm:$0xf]
        %v2086 = vld [vmem:[%s4 + $0x3cc] sm:$0xf]
        %v2087 = vld [vmem:[%s4 + $0x3d0] sm:$0xf]
        %v2088 = vld [vmem:[%s4 + $0x3d4] sm:$0xf]
        %v2089 = vld [vmem:[%s4 + $0x3d8] sm:$0xf]
        %v2090 = vld [vmem:[%s4 + $0x3dc] sm:$0xf]
        %v2091 = vld [vmem:[%s4 + $0x3e0] sm:$0xf]
        %v2092 = vld [vmem:[%s4 + $0x3e4] sm:$0xf]
        %v2093 = vld [vmem:[%s4 + $0x3e8] sm:$0xf]
        %v2094 = vld [vmem:[%s4 + $0x3ec] sm:$0xf]
        %v2095 = vld [vmem:[%s4 + $0x3f0] sm:$0xf]
        %v2096 = vld [vmem:[%s4 + $0x3f4] sm:$0xf]
        %v2097 = vld [vmem:[%s4 + $0x3f8] sm:$0xf]
        %v2098 = vld [vmem:[%s4 + $0x3fc] sm:$0xf]
        %v2099 = vld [vmem:[%s8] sm:$0x1]
        %v2100 = vld [vmem:[%s8 + $0x1] sm:$0x1]
        %v2101 = vld [vmem:[%s8 + $0x2] sm:$0x1]
        %v2102 = vld [vmem:[%s8 + $0x3] sm:$0x1]
        %v2103 = vld [vmem:[%s8 + $0x4] sm:$0x1]
        %v2104 = vld [vmem:[%s8 + $0x5] sm:$0x1]
        %v2105 = vld [vmem:[%s8 + $0x6] sm:$0x1]
        %v2106 = vld [vmem:[%s8 + $0x7] sm:$0x1]
        %v2115 = vlaneseq
        %v2116 = vshrl.u32 %v2115, 7
        %v2117 = vsub.s32 0, %v2116
        %v2118 = vrot.slane %v2099, %v2117
        %v2119 = vlaneseq
        %v2120 = vshrl.u32 %v2119, 7
        %v2121 = vsub.s32 0, %v2120
        %v2122 = vrot.slane %v2100, %v2121
        %v2123 = vlaneseq
        %v2124 = vshrl.u32 %v2123, 7
        %v2125 = vsub.s32 0, %v2124
        %v2126 = vrot.slane %v2101, %v2125
        %v2127 = vlaneseq
        %v2128 = vshrl.u32 %v2127, 7
        %v2129 = vsub.s32 0, %v2128
        %v2130 = vrot.slane %v2102, %v2129
        %v2131 = vlaneseq
        %v2132 = vshrl.u32 %v2131, 7
        %v2133 = vsub.s32 0, %v2132
        %v2134 = vrot.slane %v2103, %v2133
        %v2135 = vlaneseq
        %v2136 = vshrl.u32 %v2135, 7
        %v2137 = vsub.s32 0, %v2136
        %v2138 = vrot.slane %v2104, %v2137
        %v2139 = vlaneseq
        %v2140 = vshrl.u32 %v2139, 7
        %v2141 = vsub.s32 0, %v2140
        %v2142 = vrot.slane %v2105, %v2141
        %v2143 = vlaneseq
        %v2144 = vshrl.u32 %v2143, 7
        %v2145 = vsub.s32 0, %v2144
        %v2146 = vrot.slane %v2106, %v2145
        %v2156 = vunpack.c.l.b16 %v1842
        %v2157 = vunpack.c.h.b16 %v1842
        %v2158 = vpack.c.b16 %v2156, %v2156
        %v2159 = vpack.c.b16 %v2157, %v2157
        %v2194 = vunpack.c.l.b16 %v1843
        %v2195 = vunpack.c.l.b16 %v1844
        %v2196 = vunpack.c.l.b16 %v1845
        %v2197 = vunpack.c.l.b16 %v1846
        %v2198 = vunpack.c.l.b16 %v1847
        %v2199 = vunpack.c.l.b16 %v1848
        %v2200 = vunpack.c.l.b16 %v1849
        %v2201 = vunpack.c.l.b16 %v1850
        %v2202 = vunpack.c.l.b16 %v1851
        %v2203 = vunpack.c.l.b16 %v1852
        %v2204 = vunpack.c.l.b16 %v1853
        %v2205 = vunpack.c.l.b16 %v1854
        %v2206 = vunpack.c.l.b16 %v1855
        %v2207 = vunpack.c.l.b16 %v1856
        %v2208 = vunpack.c.l.b16 %v1857
        %v2209 = vunpack.c.l.b16 %v1858
        %v2210 = vunpack.c.l.b16 %v1859
        %v2211 = vunpack.c.l.b16 %v1860
        %v2212 = vunpack.c.l.b16 %v1861
        %v2213 = vunpack.c.l.b16 %v1862
        %v2214 = vunpack.c.l.b16 %v1863
        %v2215 = vunpack.c.l.b16 %v1864
        %v2216 = vunpack.c.l.b16 %v1865
        %v2217 = vunpack.c.l.b16 %v1866
        %v2218 = vunpack.c.l.b16 %v1867
        %v2219 = vunpack.c.l.b16 %v1868
        %v2220 = vunpack.c.l.b16 %v1869
        %v2221 = vunpack.c.l.b16 %v1870
        %v2222 = vunpack.c.l.b16 %v1871
        %v2223 = vunpack.c.l.b16 %v1872
        %v2224 = vunpack.c.l.b16 %v1873
        %v2225 = vunpack.c.l.b16 %v1874
        %v2226 = vpack.c.b16 %v2195, %v2194
        %v2227 = vpack.c.b16 %v2197, %v2196
        %v2228 = vpack.c.b16 %v2199, %v2198
        %v2229 = vpack.c.b16 %v2201, %v2200
        %v2230 = vpack.c.b16 %v2203, %v2202
        %v2231 = vpack.c.b16 %v2205, %v2204
        %v2232 = vpack.c.b16 %v2207, %v2206
        %v2233 = vpack.c.b16 %v2209, %v2208
        %v2234 = vpack.c.b16 %v2211, %v2210
        %v2235 = vpack.c.b16 %v2213, %v2212
        %v2236 = vpack.c.b16 %v2215, %v2214
        %v2237 = vpack.c.b16 %v2217, %v2216
        %v2238 = vpack.c.b16 %v2219, %v2218
        %v2239 = vpack.c.b16 %v2221, %v2220
        %v2240 = vpack.c.b16 %v2223, %v2222
        %v2241 = vpack.c.b16 %v2225, %v2224
        %2258 = vmatprep.subr.bf16.mxu0 0
        %2259 = vmatpush1.bf16.msra.mxu0 %v2226
        %2260 = vmatprep.subr.bf16.mxu0 0
        %2261 = vmatpush1.bf16.msra.mxu0 %v2227
        %2262 = vmatprep.subr.bf16.mxu0 0
        %2263 = vmatpush1.bf16.msra.mxu0 %v2228
        %2264 = vmatprep.subr.bf16.mxu0 0
        %2265 = vmatpush1.bf16.msra.mxu0 %v2229
        %2266 = vmatprep.subr.bf16.mxu0 0
        %2267 = vmatpush1.bf16.msra.mxu0 %v2230
        %2268 = vmatprep.subr.bf16.mxu0 0
        %2269 = vmatpush1.bf16.msra.mxu0 %v2231
        %2270 = vmatprep.subr.bf16.mxu0 0
        %2271 = vmatpush1.bf16.msra.mxu0 %v2232
        %2272 = vmatprep.subr.bf16.mxu0 0
        %2273 = vmatpush1.bf16.msra.mxu0 %v2233
        %2274 = vmatprep.subr.bf16.mxu0 0
        %2275 = vmatpush1.bf16.msra.mxu0 %v2234
        %2276 = vmatprep.subr.bf16.mxu0 0
        %2277 = vmatpush1.bf16.msra.mxu0 %v2235
        %2278 = vmatprep.subr.bf16.mxu0 0
        %2279 = vmatpush1.bf16.msra.mxu0 %v2236
        %2280 = vmatprep.subr.bf16.mxu0 0
        %2281 = vmatpush1.bf16.msra.mxu0 %v2237
        %2282 = vmatprep.subr.bf16.mxu0 0
        %2283 = vmatpush1.bf16.msra.mxu0 %v2238
        %2284 = vmatprep.subr.bf16.mxu0 0
        %2285 = vmatpush1.bf16.msra.mxu0 %v2239
        %2286 = vmatprep.subr.bf16.mxu0 0
        %2287 = vmatpush1.bf16.msra.mxu0 %v2240
        %2288 = vmatprep.subr.bf16.mxu0 0
        %2289 = vmatpush1.bf16.msra.mxu0 %v2241
        %2290 = vmatprep.mubr.bf16.mxu0 %v2159
        %2291 = vmatmul.mubr.bf16.gmra.mrb[0].mxu0 %v2158
        %v2292 = vpop.f32.mrb[0].mxu0
        %v2293 = vadd.f32 %v2118, %v2292
        %v2294 = vpop.f32.mrb[0].mxu0
        %v2295 = vpop.f32.mrb[0].mxu0
        %v2296 = vpop.f32.mrb[0].mxu0
        %2297 = vdwg.mxu0
        %v2330 = vunpack.c.l.b16 %v1875
        %v2331 = vunpack.c.l.b16 %v1876
        %v2332 = vunpack.c.l.b16 %v1877
        %v2333 = vunpack.c.l.b16 %v1878
        %v2334 = vunpack.c.l.b16 %v1879
        %v2335 = vunpack.c.l.b16 %v1880
        %v2336 = vunpack.c.l.b16 %v1881
        %v2337 = vunpack.c.l.b16 %v1882
        %v2338 = vunpack.c.l.b16 %v1883
        %v2339 = vunpack.c.l.b16 %v1884
        %v2340 = vunpack.c.l.b16 %v1885
        %v2341 = vunpack.c.l.b16 %v1886
        %v2342 = vunpack.c.l.b16 %v1887
        %v2343 = vunpack.c.l.b16 %v1888
        %v2344 = vunpack.c.l.b16 %v1889
        %v2345 = vunpack.c.l.b16 %v1890
        %v2346 = vunpack.c.l.b16 %v1891
        %v2347 = vunpack.c.l.b16 %v1892
        %v2348 = vunpack.c.l.b16 %v1893
        %v2349 = vunpack.c.l.b16 %v1894
        %v2350 = vunpack.c.l.b16 %v1895
        %v2351 = vunpack.c.l.b16 %v1896
        %v2352 = vunpack.c.l.b16 %v1897
        %v2353 = vunpack.c.l.b16 %v1898
        %v2354 = vunpack.c.l.b16 %v1899
        %v2355 = vunpack.c.l.b16 %v1900
        %v2356 = vunpack.c.l.b16 %v1901
        %v2357 = vunpack.c.l.b16 %v1902
        %v2358 = vunpack.c.l.b16 %v1903
        %v2359 = vunpack.c.l.b16 %v1904
        %v2360 = vunpack.c.l.b16 %v1905
        %v2361 = vunpack.c.l.b16 %v1906
        %v2362 = vpack.c.b16 %v2331, %v2330
        %v2363 = vpack.c.b16 %v2333, %v2332
        %v2364 = vpack.c.b16 %v2335, %v2334
        %v2365 = vpack.c.b16 %v2337, %v2336
        %v2366 = vpack.c.b16 %v2339, %v2338
        %v2367 = vpack.c.b16 %v2341, %v2340
        %v2368 = vpack.c.b16 %v2343, %v2342
        %v2369 = vpack.c.b16 %v2345, %v2344
        %v2370 = vpack.c.b16 %v2347, %v2346
        %v2371 = vpack.c.b16 %v2349, %v2348
        %v2372 = vpack.c.b16 %v2351, %v2350
        %v2373 = vpack.c.b16 %v2353, %v2352
        %v2374 = vpack.c.b16 %v2355, %v2354
        %v2375 = vpack.c.b16 %v2357, %v2356
        %v2376 = vpack.c.b16 %v2359, %v2358
        %v2377 = vpack.c.b16 %v2361, %v2360
        %2394 = vmatprep.subr.bf16.mxu0 0
        %2395 = vmatpush1.bf16.msra.mxu0 %v2362
        %2396 = vmatprep.subr.bf16.mxu0 0
        %2397 = vmatpush1.bf16.msra.mxu0 %v2363
        %2398 = vmatprep.subr.bf16.mxu0 0
        %2399 = vmatpush1.bf16.msra.mxu0 %v2364
        %2400 = vmatprep.subr.bf16.mxu0 0
        %2401 = vmatpush1.bf16.msra.mxu0 %v2365
        %2402 = vmatprep.subr.bf16.mxu0 0
        %2403 = vmatpush1.bf16.msra.mxu0 %v2366
        %2404 = vmatprep.subr.bf16.mxu0 0
        %2405 = vmatpush1.bf16.msra.mxu0 %v2367
        %2406 = vmatprep.subr.bf16.mxu0 0
        %2407 = vmatpush1.bf16.msra.mxu0 %v2368
        %2408 = vmatprep.subr.bf16.mxu0 0
        %2409 = vmatpush1.bf16.msra.mxu0 %v2369
        %2410 = vmatprep.subr.bf16.mxu0 0
        %2411 = vmatpush1.bf16.msra.mxu0 %v2370
        %2412 = vmatprep.subr.bf16.mxu0 0
        %2413 = vmatpush1.bf16.msra.mxu0 %v2371
        %2414 = vmatprep.subr.bf16.mxu0 0
        %2415 = vmatpush1.bf16.msra.mxu0 %v2372
        %2416 = vmatprep.subr.bf16.mxu0 0
        %2417 = vmatpush1.bf16.msra.mxu0 %v2373
        %2418 = vmatprep.subr.bf16.mxu0 0
        %2419 = vmatpush1.bf16.msra.mxu0 %v2374
        %2420 = vmatprep.subr.bf16.mxu0 0
        %2421 = vmatpush1.bf16.msra.mxu0 %v2375
        %2422 = vmatprep.subr.bf16.mxu0 0
        %2423 = vmatpush1.bf16.msra.mxu0 %v2376
        %2424 = vmatprep.subr.bf16.mxu0 0
        %2425 = vmatpush1.bf16.msra.mxu0 %v2377
        %2426 = vmatprep.mubr.bf16.mxu0 %v2159
        %2427 = vmatmul.mubr.bf16.gmra.mrb[0].mxu0 %v2158
        %v2428 = vpop.f32.mrb[0].mxu0
        %v2429 = vadd.f32 %v2122, %v2428
        %v2430 = vpop.f32.mrb[0].mxu0
        %v2431 = vpop.f32.mrb[0].mxu0
        %v2432 = vpop.f32.mrb[0].mxu0
        %2433 = vdwg.mxu0
        %v2466 = vunpack.c.l.b16 %v1907
        %v2467 = vunpack.c.l.b16 %v1908
        %v2468 = vunpack.c.l.b16 %v1909
        %v2469 = vunpack.c.l.b16 %v1910
        %v2470 = vunpack.c.l.b16 %v1911
        %v2471 = vunpack.c.l.b16 %v1912
        %v2472 = vunpack.c.l.b16 %v1913
        %v2473 = vunpack.c.l.b16 %v1914
        %v2474 = vunpack.c.l.b16 %v1915
        %v2475 = vunpack.c.l.b16 %v1916
        %v2476 = vunpack.c.l.b16 %v1917
        %v2477 = vunpack.c.l.b16 %v1918
        %v2478 = vunpack.c.l.b16 %v1919
        %v2479 = vunpack.c.l.b16 %v1920
        %v2480 = vunpack.c.l.b16 %v1921
        %v2481 = vunpack.c.l.b16 %v1922
        %v2482 = vunpack.c.l.b16 %v1923
        %v2483 = vunpack.c.l.b16 %v1924
        %v2484 = vunpack.c.l.b16 %v1925
        %v2485 = vunpack.c.l.b16 %v1926
        %v2486 = vunpack.c.l.b16 %v1927
        %v2487 = vunpack.c.l.b16 %v1928
        %v2488 = vunpack.c.l.b16 %v1929
        %v2489 = vunpack.c.l.b16 %v1930
        %v2490 = vunpack.c.l.b16 %v1931
        %v2491 = vunpack.c.l.b16 %v1932
        %v2492 = vunpack.c.l.b16 %v1933
        %v2493 = vunpack.c.l.b16 %v1934
        %v2494 = vunpack.c.l.b16 %v1935
        %v2495 = vunpack.c.l.b16 %v1936
        %v2496 = vunpack.c.l.b16 %v1937
        %v2497 = vunpack.c.l.b16 %v1938
        %v2498 = vpack.c.b16 %v2467, %v2466
        %v2499 = vpack.c.b16 %v2469, %v2468
        %v2500 = vpack.c.b16 %v2471, %v2470
        %v2501 = vpack.c.b16 %v2473, %v2472
        %v2502 = vpack.c.b16 %v2475, %v2474
        %v2503 = vpack.c.b16 %v2477, %v2476
        %v2504 = vpack.c.b16 %v2479, %v2478
        %v2505 = vpack.c.b16 %v2481, %v2480
        %v2506 = vpack.c.b16 %v2483, %v2482
        %v2507 = vpack.c.b16 %v2485, %v2484
        %v2508 = vpack.c.b16 %v2487, %v2486
        %v2509 = vpack.c.b16 %v2489, %v2488
        %v2510 = vpack.c.b16 %v2491, %v2490
        %v2511 = vpack.c.b16 %v2493, %v2492
        %v2512 = vpack.c.b16 %v2495, %v2494
        %v2513 = vpack.c.b16 %v2497, %v2496
        %2530 = vmatprep.subr.bf16.mxu0 0
        %2531 = vmatpush1.bf16.msra.mxu0 %v2498
        %2532 = vmatprep.subr.bf16.mxu0 0
        %2533 = vmatpush1.bf16.msra.mxu0 %v2499
        %2534 = vmatprep.subr.bf16.mxu0 0
        %2535 = vmatpush1.bf16.msra.mxu0 %v2500
        %2536 = vmatprep.subr.bf16.mxu0 0
        %2537 = vmatpush1.bf16.msra.mxu0 %v2501
        %2538 = vmatprep.subr.bf16.mxu0 0
        %2539 = vmatpush1.bf16.msra.mxu0 %v2502
        %2540 = vmatprep.subr.bf16.mxu0 0
        %2541 = vmatpush1.bf16.msra.mxu0 %v2503
        %2542 = vmatprep.subr.bf16.mxu0 0
        %2543 = vmatpush1.bf16.msra.mxu0 %v2504
        %2544 = vmatprep.subr.bf16.mxu0 0
        %2545 = vmatpush1.bf16.msra.mxu0 %v2505
        %2546 = vmatprep.subr.bf16.mxu0 0
        %2547 = vmatpush1.bf16.msra.mxu0 %v2506
        %2548 = vmatprep.subr.bf16.mxu0 0
        %2549 = vmatpush1.bf16.msra.mxu0 %v2507
        %2550 = vmatprep.subr.bf16.mxu0 0
        %2551 = vmatpush1.bf16.msra.mxu0 %v2508
        %2552 = vmatprep.subr.bf16.mxu0 0
        %2553 = vmatpush1.bf16.msra.mxu0 %v2509
        %2554 = vmatprep.subr.bf16.mxu0 0
        %2555 = vmatpush1.bf16.msra.mxu0 %v2510
        %2556 = vmatprep.subr.bf16.mxu0 0
        %2557 = vmatpush1.bf16.msra.mxu0 %v2511
        %2558 = vmatprep.subr.bf16.mxu0 0
        %2559 = vmatpush1.bf16.msra.mxu0 %v2512
        %2560 = vmatprep.subr.bf16.mxu0 0
        %2561 = vmatpush1.bf16.msra.mxu0 %v2513
        %2562 = vmatprep.mubr.bf16.mxu0 %v2159
        %2563 = vmatmul.mubr.bf16.gmra.mrb[0].mxu0 %v2158
        %v2564 = vpop.f32.mrb[0].mxu0
        %v2565 = vadd.f32 %v2126, %v2564
        %v2566 = vpop.f32.mrb[0].mxu0
        %v2567 = vpop.f32.mrb[0].mxu0
        %v2568 = vpop.f32.mrb[0].mxu0
        %2569 = vdwg.mxu0
        %v2602 = vunpack.c.l.b16 %v1939
        %v2603 = vunpack.c.l.b16 %v1940
        %v2604 = vunpack.c.l.b16 %v1941
        %v2605 = vunpack.c.l.b16 %v1942
        %v2606 = vunpack.c.l.b16 %v1943
        %v2607 = vunpack.c.l.b16 %v1944
        %v2608 = vunpack.c.l.b16 %v1945
        %v2609 = vunpack.c.l.b16 %v1946
        %v2610 = vunpack.c.l.b16 %v1947
        %v2611 = vunpack.c.l.b16 %v1948
        %v2612 = vunpack.c.l.b16 %v1949
        %v2613 = vunpack.c.l.b16 %v1950
        %v2614 = vunpack.c.l.b16 %v1951
        %v2615 = vunpack.c.l.b16 %v1952
        %v2616 = vunpack.c.l.b16 %v1953
        %v2617 = vunpack.c.l.b16 %v1954
        %v2618 = vunpack.c.l.b16 %v1955
        %v2619 = vunpack.c.l.b16 %v1956
        %v2620 = vunpack.c.l.b16 %v1957
        %v2621 = vunpack.c.l.b16 %v1958
        %v2622 = vunpack.c.l.b16 %v1959
        %v2623 = vunpack.c.l.b16 %v1960
        %v2624 = vunpack.c.l.b16 %v1961
        %v2625 = vunpack.c.l.b16 %v1962
        %v2626 = vunpack.c.l.b16 %v1963
        %v2627 = vunpack.c.l.b16 %v1964
        %v2628 = vunpack.c.l.b16 %v1965
        %v2629 = vunpack.c.l.b16 %v1966
        %v2630 = vunpack.c.l.b16 %v1967
        %v2631 = vunpack.c.l.b16 %v1968
        %v2632 = vunpack.c.l.b16 %v1969
        %v2633 = vunpack.c.l.b16 %v1970
        %v2634 = vpack.c.b16 %v2603, %v2602
        %v2635 = vpack.c.b16 %v2605, %v2604
        %v2636 = vpack.c.b16 %v2607, %v2606
        %v2637 = vpack.c.b16 %v2609, %v2608
        %v2638 = vpack.c.b16 %v2611, %v2610
        %v2639 = vpack.c.b16 %v2613, %v2612
        %v2640 = vpack.c.b16 %v2615, %v2614
        %v2641 = vpack.c.b16 %v2617, %v2616
        %v2642 = vpack.c.b16 %v2619, %v2618
        %v2643 = vpack.c.b16 %v2621, %v2620
        %v2644 = vpack.c.b16 %v2623, %v2622
        %v2645 = vpack.c.b16 %v2625, %v2624
        %v2646 = vpack.c.b16 %v2627, %v2626
        %v2647 = vpack.c.b16 %v2629, %v2628
        %v2648 = vpack.c.b16 %v2631, %v2630
        %v2649 = vpack.c.b16 %v2633, %v2632
        %2666 = vmatprep.subr.bf16.mxu0 0
        %2667 = vmatpush1.bf16.msra.mxu0 %v2634
        %2668 = vmatprep.subr.bf16.mxu0 0
        %2669 = vmatpush1.bf16.msra.mxu0 %v2635
        %2670 = vmatprep.subr.bf16.mxu0 0
        %2671 = vmatpush1.bf16.msra.mxu0 %v2636
        %2672 = vmatprep.subr.bf16.mxu0 0
        %2673 = vmatpush1.bf16.msra.mxu0 %v2637
        %2674 = vmatprep.subr.bf16.mxu0 0
        %2675 = vmatpush1.bf16.msra.mxu0 %v2638
        %2676 = vmatprep.subr.bf16.mxu0 0
        %2677 = vmatpush1.bf16.msra.mxu0 %v2639
        %2678 = vmatprep.subr.bf16.mxu0 0
        %2679 = vmatpush1.bf16.msra.mxu0 %v2640
        %2680 = vmatprep.subr.bf16.mxu0 0
        %2681 = vmatpush1.bf16.msra.mxu0 %v2641
        %2682 = vmatprep.subr.bf16.mxu0 0
        %2683 = vmatpush1.bf16.msra.mxu0 %v2642
        %2684 = vmatprep.subr.bf16.mxu0 0
        %2685 = vmatpush1.bf16.msra.mxu0 %v2643
        %2686 = vmatprep.subr.bf16.mxu0 0
        %2687 = vmatpush1.bf16.msra.mxu0 %v2644
        %2688 = vmatprep.subr.bf16.mxu0 0
        %2689 = vmatpush1.bf16.msra.mxu0 %v2645
        %2690 = vmatprep.subr.bf16.mxu0 0
        %2691 = vmatpush1.bf16.msra.mxu0 %v2646
        %2692 = vmatprep.subr.bf16.mxu0 0
        %2693 = vmatpush1.bf16.msra.mxu0 %v2647
        %2694 = vmatprep.subr.bf16.mxu0 0
        %2695 = vmatpush1.bf16.msra.mxu0 %v2648
        %2696 = vmatprep.subr.bf16.mxu0 0
        %2697 = vmatpush1.bf16.msra.mxu0 %v2649
        %2698 = vmatprep.mubr.bf16.mxu0 %v2159
        %2699 = vmatmul.mubr.bf16.gmra.mrb[0].mxu0 %v2158
        %v2700 = vpop.f32.mrb[0].mxu0
        %v2701 = vadd.f32 %v2130, %v2700
        %v2702 = vpop.f32.mrb[0].mxu0
        %v2703 = vpop.f32.mrb[0].mxu0
        %v2704 = vpop.f32.mrb[0].mxu0
        %2705 = vdwg.mxu0
        %v2738 = vunpack.c.l.b16 %v1971
        %v2739 = vunpack.c.l.b16 %v1972
        %v2740 = vunpack.c.l.b16 %v1973
        %v2741 = vunpack.c.l.b16 %v1974
        %v2742 = vunpack.c.l.b16 %v1975
        %v2743 = vunpack.c.l.b16 %v1976
        %v2744 = vunpack.c.l.b16 %v1977
        %v2745 = vunpack.c.l.b16 %v1978
        %v2746 = vunpack.c.l.b16 %v1979
        %v2747 = vunpack.c.l.b16 %v1980
        %v2748 = vunpack.c.l.b16 %v1981
        %v2749 = vunpack.c.l.b16 %v1982
        %v2750 = vunpack.c.l.b16 %v1983
        %v2751 = vunpack.c.l.b16 %v1984
        %v2752 = vunpack.c.l.b16 %v1985
        %v2753 = vunpack.c.l.b16 %v1986
        %v2754 = vunpack.c.l.b16 %v1987
        %v2755 = vunpack.c.l.b16 %v1988
        %v2756 = vunpack.c.l.b16 %v1989
        %v2757 = vunpack.c.l.b16 %v1990
        %v2758 = vunpack.c.l.b16 %v1991
        %v2759 = vunpack.c.l.b16 %v1992
        %v2760 = vunpack.c.l.b16 %v1993
        %v2761 = vunpack.c.l.b16 %v1994
        %v2762 = vunpack.c.l.b16 %v1995
        %v2763 = vunpack.c.l.b16 %v1996
        %v2764 = vunpack.c.l.b16 %v1997
        %v2765 = vunpack.c.l.b16 %v1998
        %v2766 = vunpack.c.l.b16 %v1999
        %v2767 = vunpack.c.l.b16 %v2000
        %v2768 = vunpack.c.l.b16 %v2001
        %v2769 = vunpack.c.l.b16 %v2002
        %v2770 = vpack.c.b16 %v2739, %v2738
        %v2771 = vpack.c.b16 %v2741, %v2740
        %v2772 = vpack.c.b16 %v2743, %v2742
        %v2773 = vpack.c.b16 %v2745, %v2744
        %v2774 = vpack.c.b16 %v2747, %v2746
        %v2775 = vpack.c.b16 %v2749, %v2748
        %v2776 = vpack.c.b16 %v2751, %v2750
        %v2777 = vpack.c.b16 %v2753, %v2752
        %v2778 = vpack.c.b16 %v2755, %v2754
        %v2779 = vpack.c.b16 %v2757, %v2756
        %v2780 = vpack.c.b16 %v2759, %v2758
        %v2781 = vpack.c.b16 %v2761, %v2760
        %v2782 = vpack.c.b16 %v2763, %v2762
        %v2783 = vpack.c.b16 %v2765, %v2764
        %v2784 = vpack.c.b16 %v2767, %v2766
        %v2785 = vpack.c.b16 %v2769, %v2768
        %2802 = vmatprep.subr.bf16.mxu0 0
        %2803 = vmatpush1.bf16.msra.mxu0 %v2770
        %2804 = vmatprep.subr.bf16.mxu0 0
        %2805 = vmatpush1.bf16.msra.mxu0 %v2771
        %2806 = vmatprep.subr.bf16.mxu0 0
        %2807 = vmatpush1.bf16.msra.mxu0 %v2772
        %2808 = vmatprep.subr.bf16.mxu0 0
        %2809 = vmatpush1.bf16.msra.mxu0 %v2773
        %2810 = vmatprep.subr.bf16.mxu0 0
        %2811 = vmatpush1.bf16.msra.mxu0 %v2774
        %2812 = vmatprep.subr.bf16.mxu0 0
        %2813 = vmatpush1.bf16.msra.mxu0 %v2775
        %2814 = vmatprep.subr.bf16.mxu0 0
        %2815 = vmatpush1.bf16.msra.mxu0 %v2776
        %2816 = vmatprep.subr.bf16.mxu0 0
        %2817 = vmatpush1.bf16.msra.mxu0 %v2777
        %2818 = vmatprep.subr.bf16.mxu0 0
        %2819 = vmatpush1.bf16.msra.mxu0 %v2778
        %2820 = vmatprep.subr.bf16.mxu0 0
        %2821 = vmatpush1.bf16.msra.mxu0 %v2779
        %2822 = vmatprep.subr.bf16.mxu0 0
        %2823 = vmatpush1.bf16.msra.mxu0 %v2780
        %2824 = vmatprep.subr.bf16.mxu0 0
        %2825 = vmatpush1.bf16.msra.mxu0 %v2781
        %2826 = vmatprep.subr.bf16.mxu0 0
        %2827 = vmatpush1.bf16.msra.mxu0 %v2782
        %2828 = vmatprep.subr.bf16.mxu0 0
        %2829 = vmatpush1.bf16.msra.mxu0 %v2783
        %2830 = vmatprep.subr.bf16.mxu0 0
        %2831 = vmatpush1.bf16.msra.mxu0 %v2784
        %2832 = vmatprep.subr.bf16.mxu0 0
        %2833 = vmatpush1.bf16.msra.mxu0 %v2785
        %2834 = vmatprep.mubr.bf16.mxu0 %v2159
        %2835 = vmatmul.mubr.bf16.gmra.mrb[0].mxu0 %v2158
        %v2836 = vpop.f32.mrb[0].mxu0
        %v2837 = vadd.f32 %v2134, %v2836
        %v2838 = vpop.f32.mrb[0].mxu0
        %v2839 = vpop.f32.mrb[0].mxu0
        %v2840 = vpop.f32.mrb[0].mxu0
        %2841 = vdwg.mxu0
        %v2874 = vunpack.c.l.b16 %v2003
        %v2875 = vunpack.c.l.b16 %v2004
        %v2876 = vunpack.c.l.b16 %v2005
        %v2877 = vunpack.c.l.b16 %v2006
        %v2878 = vunpack.c.l.b16 %v2007
        %v2879 = vunpack.c.l.b16 %v2008
        %v2880 = vunpack.c.l.b16 %v2009
        %v2881 = vunpack.c.l.b16 %v2010
        %v2882 = vunpack.c.l.b16 %v2011
        %v2883 = vunpack.c.l.b16 %v2012
        %v2884 = vunpack.c.l.b16 %v2013
        %v2885 = vunpack.c.l.b16 %v2014
        %v2886 = vunpack.c.l.b16 %v2015
        %v2887 = vunpack.c.l.b16 %v2016
        %v2888 = vunpack.c.l.b16 %v2017
        %v2889 = vunpack.c.l.b16 %v2018
        %v2890 = vunpack.c.l.b16 %v2019
        %v2891 = vunpack.c.l.b16 %v2020
        %v2892 = vunpack.c.l.b16 %v2021
        %v2893 = vunpack.c.l.b16 %v2022
        %v2894 = vunpack.c.l.b16 %v2023
        %v2895 = vunpack.c.l.b16 %v2024
        %v2896 = vunpack.c.l.b16 %v2025
        %v2897 = vunpack.c.l.b16 %v2026
        %v2898 = vunpack.c.l.b16 %v2027
        %v2899 = vunpack.c.l.b16 %v2028
        %v2900 = vunpack.c.l.b16 %v2029
        %v2901 = vunpack.c.l.b16 %v2030
        %v2902 = vunpack.c.l.b16 %v2031
        %v2903 = vunpack.c.l.b16 %v2032
        %v2904 = vunpack.c.l.b16 %v2033
        %v2905 = vunpack.c.l.b16 %v2034
        %v2906 = vpack.c.b16 %v2875, %v2874
        %v2907 = vpack.c.b16 %v2877, %v2876
        %v2908 = vpack.c.b16 %v2879, %v2878
        %v2909 = vpack.c.b16 %v2881, %v2880
        %v2910 = vpack.c.b16 %v2883, %v2882
        %v2911 = vpack.c.b16 %v2885, %v2884
        %v2912 = vpack.c.b16 %v2887, %v2886
        %v2913 = vpack.c.b16 %v2889, %v2888
        %v2914 = vpack.c.b16 %v2891, %v2890
        %v2915 = vpack.c.b16 %v2893, %v2892
        %v2916 = vpack.c.b16 %v2895, %v2894
        %v2917 = vpack.c.b16 %v2897, %v2896
        %v2918 = vpack.c.b16 %v2899, %v2898
        %v2919 = vpack.c.b16 %v2901, %v2900
        %v2920 = vpack.c.b16 %v2903, %v2902
        %v2921 = vpack.c.b16 %v2905, %v2904
        %2938 = vmatprep.subr.bf16.mxu0 0
        %2939 = vmatpush1.bf16.msra.mxu0 %v2906
        %2940 = vmatprep.subr.bf16.mxu0 0
        %2941 = vmatpush1.bf16.msra.mxu0 %v2907
        %2942 = vmatprep.subr.bf16.mxu0 0
        %2943 = vmatpush1.bf16.msra.mxu0 %v2908
        %2944 = vmatprep.subr.bf16.mxu0 0
        %2945 = vmatpush1.bf16.msra.mxu0 %v2909
        %2946 = vmatprep.subr.bf16.mxu0 0
        %2947 = vmatpush1.bf16.msra.mxu0 %v2910
        %2948 = vmatprep.subr.bf16.mxu0 0
        %2949 = vmatpush1.bf16.msra.mxu0 %v2911
        %2950 = vmatprep.subr.bf16.mxu0 0
        %2951 = vmatpush1.bf16.msra.mxu0 %v2912
        %2952 = vmatprep.subr.bf16.mxu0 0
        %2953 = vmatpush1.bf16.msra.mxu0 %v2913
        %2954 = vmatprep.subr.bf16.mxu0 0
        %2955 = vmatpush1.bf16.msra.mxu0 %v2914
        %2956 = vmatprep.subr.bf16.mxu0 0
        %2957 = vmatpush1.bf16.msra.mxu0 %v2915
        %2958 = vmatprep.subr.bf16.mxu0 0
        %2959 = vmatpush1.bf16.msra.mxu0 %v2916
        %2960 = vmatprep.subr.bf16.mxu0 0
        %2961 = vmatpush1.bf16.msra.mxu0 %v2917
        %2962 = vmatprep.subr.bf16.mxu0 0
        %2963 = vmatpush1.bf16.msra.mxu0 %v2918
        %2964 = vmatprep.subr.bf16.mxu0 0
        %2965 = vmatpush1.bf16.msra.mxu0 %v2919
        %2966 = vmatprep.subr.bf16.mxu0 0
        %2967 = vmatpush1.bf16.msra.mxu0 %v2920
        %2968 = vmatprep.subr.bf16.mxu0 0
        %2969 = vmatpush1.bf16.msra.mxu0 %v2921
        %2970 = vmatprep.mubr.bf16.mxu0 %v2159
        %2971 = vmatmul.mubr.bf16.gmra.mrb[0].mxu0 %v2158
        %v2972 = vpop.f32.mrb[0].mxu0
        %v2973 = vadd.f32 %v2138, %v2972
        %v2974 = vpop.f32.mrb[0].mxu0
        %v2975 = vpop.f32.mrb[0].mxu0
        %v2976 = vpop.f32.mrb[0].mxu0
        %2977 = vdwg.mxu0
        %v3010 = vunpack.c.l.b16 %v2035
        %v3011 = vunpack.c.l.b16 %v2036
        %v3012 = vunpack.c.l.b16 %v2037
        %v3013 = vunpack.c.l.b16 %v2038
        %v3014 = vunpack.c.l.b16 %v2039
        %v3015 = vunpack.c.l.b16 %v2040
        %v3016 = vunpack.c.l.b16 %v2041
        %v3017 = vunpack.c.l.b16 %v2042
        %v3018 = vunpack.c.l.b16 %v2043
        %v3019 = vunpack.c.l.b16 %v2044
        %v3020 = vunpack.c.l.b16 %v2045
        %v3021 = vunpack.c.l.b16 %v2046
        %v3022 = vunpack.c.l.b16 %v2047
        %v3023 = vunpack.c.l.b16 %v2048
        %v3024 = vunpack.c.l.b16 %v2049
        %v3025 = vunpack.c.l.b16 %v2050
        %v3026 = vunpack.c.l.b16 %v2051
        %v3027 = vunpack.c.l.b16 %v2052
        %v3028 = vunpack.c.l.b16 %v2053
        %v3029 = vunpack.c.l.b16 %v2054
        %v3030 = vunpack.c.l.b16 %v2055
        %v3031 = vunpack.c.l.b16 %v2056
        %v3032 = vunpack.c.l.b16 %v2057
        %v3033 = vunpack.c.l.b16 %v2058
        %v3034 = vunpack.c.l.b16 %v2059
        %v3035 = vunpack.c.l.b16 %v2060
        %v3036 = vunpack.c.l.b16 %v2061
        %v3037 = vunpack.c.l.b16 %v2062
        %v3038 = vunpack.c.l.b16 %v2063
        %v3039 = vunpack.c.l.b16 %v2064
        %v3040 = vunpack.c.l.b16 %v2065
        %v3041 = vunpack.c.l.b16 %v2066
        %v3042 = vpack.c.b16 %v3011, %v3010
        %v3043 = vpack.c.b16 %v3013, %v3012
        %v3044 = vpack.c.b16 %v3015, %v3014
        %v3045 = vpack.c.b16 %v3017, %v3016
        %v3046 = vpack.c.b16 %v3019, %v3018
        %v3047 = vpack.c.b16 %v3021, %v3020
        %v3048 = vpack.c.b16 %v3023, %v3022
        %v3049 = vpack.c.b16 %v3025, %v3024
        %v3050 = vpack.c.b16 %v3027, %v3026
        %v3051 = vpack.c.b16 %v3029, %v3028
        %v3052 = vpack.c.b16 %v3031, %v3030
        %v3053 = vpack.c.b16 %v3033, %v3032
        %v3054 = vpack.c.b16 %v3035, %v3034
        %v3055 = vpack.c.b16 %v3037, %v3036
        %v3056 = vpack.c.b16 %v3039, %v3038
        %v3057 = vpack.c.b16 %v3041, %v3040
        %3074 = vmatprep.subr.bf16.mxu0 0
        %3075 = vmatpush1.bf16.msra.mxu0 %v3042
        %3076 = vmatprep.subr.bf16.mxu0 0
        %3077 = vmatpush1.bf16.msra.mxu0 %v3043
        %3078 = vmatprep.subr.bf16.mxu0 0
        %3079 = vmatpush1.bf16.msra.mxu0 %v3044
        %3080 = vmatprep.subr.bf16.mxu0 0
        %3081 = vmatpush1.bf16.msra.mxu0 %v3045
        %3082 = vmatprep.subr.bf16.mxu0 0
        %3083 = vmatpush1.bf16.msra.mxu0 %v3046
        %3084 = vmatprep.subr.bf16.mxu0 0
        %3085 = vmatpush1.bf16.msra.mxu0 %v3047
        %3086 = vmatprep.subr.bf16.mxu0 0
        %3087 = vmatpush1.bf16.msra.mxu0 %v3048
        %3088 = vmatprep.subr.bf16.mxu0 0
        %3089 = vmatpush1.bf16.msra.mxu0 %v3049
        %3090 = vmatprep.subr.bf16.mxu0 0
        %3091 = vmatpush1.bf16.msra.mxu0 %v3050
        %3092 = vmatprep.subr.bf16.mxu0 0
        %3093 = vmatpush1.bf16.msra.mxu0 %v3051
        %3094 = vmatprep.subr.bf16.mxu0 0
        %3095 = vmatpush1.bf16.msra.mxu0 %v3052
        %3096 = vmatprep.subr.bf16.mxu0 0
        %3097 = vmatpush1.bf16.msra.mxu0 %v3053
        %3098 = vmatprep.subr.bf16.mxu0 0
        %3099 = vmatpush1.bf16.msra.mxu0 %v3054
        %3100 = vmatprep.subr.bf16.mxu0 0
        %3101 = vmatpush1.bf16.msra.mxu0 %v3055
        %3102 = vmatprep.subr.bf16.mxu0 0
        %3103 = vmatpush1.bf16.msra.mxu0 %v3056
        %3104 = vmatprep.subr.bf16.mxu0 0
        %3105 = vmatpush1.bf16.msra.mxu0 %v3057
        %3106 = vmatprep.mubr.bf16.mxu0 %v2159
        %3107 = vmatmul.mubr.bf16.gmra.mrb[0].mxu0 %v2158
        %v3108 = vpop.f32.mrb[0].mxu0
        %v3109 = vadd.f32 %v2142, %v3108
        %v3110 = vpop.f32.mrb[0].mxu0
        %v3111 = vpop.f32.mrb[0].mxu0
        %v3112 = vpop.f32.mrb[0].mxu0
        %3113 = vdwg.mxu0
        %v3146 = vunpack.c.l.b16 %v2067
        %v3147 = vunpack.c.l.b16 %v2068
        %v3148 = vunpack.c.l.b16 %v2069
        %v3149 = vunpack.c.l.b16 %v2070
        %v3150 = vunpack.c.l.b16 %v2071
        %v3151 = vunpack.c.l.b16 %v2072
        %v3152 = vunpack.c.l.b16 %v2073
        %v3153 = vunpack.c.l.b16 %v2074
        %v3154 = vunpack.c.l.b16 %v2075
        %v3155 = vunpack.c.l.b16 %v2076
        %v3156 = vunpack.c.l.b16 %v2077
        %v3157 = vunpack.c.l.b16 %v2078
        %v3158 = vunpack.c.l.b16 %v2079
        %v3159 = vunpack.c.l.b16 %v2080
        %v3160 = vunpack.c.l.b16 %v2081
        %v3161 = vunpack.c.l.b16 %v2082
        %v3162 = vunpack.c.l.b16 %v2083
        %v3163 = vunpack.c.l.b16 %v2084
        %v3164 = vunpack.c.l.b16 %v2085
        %v3165 = vunpack.c.l.b16 %v2086
        %v3166 = vunpack.c.l.b16 %v2087
        %v3167 = vunpack.c.l.b16 %v2088
        %v3168 = vunpack.c.l.b16 %v2089
        %v3169 = vunpack.c.l.b16 %v2090
        %v3170 = vunpack.c.l.b16 %v2091
        %v3171 = vunpack.c.l.b16 %v2092
        %v3172 = vunpack.c.l.b16 %v2093
        %v3173 = vunpack.c.l.b16 %v2094
        %v3174 = vunpack.c.l.b16 %v2095
        %v3175 = vunpack.c.l.b16 %v2096
        %v3176 = vunpack.c.l.b16 %v2097
        %v3177 = vunpack.c.l.b16 %v2098
        %v3178 = vpack.c.b16 %v3147, %v3146
        %v3179 = vpack.c.b16 %v3149, %v3148
        %v3180 = vpack.c.b16 %v3151, %v3150
        %v3181 = vpack.c.b16 %v3153, %v3152
        %v3182 = vpack.c.b16 %v3155, %v3154
        %v3183 = vpack.c.b16 %v3157, %v3156
        %v3184 = vpack.c.b16 %v3159, %v3158
        %v3185 = vpack.c.b16 %v3161, %v3160
        %v3186 = vpack.c.b16 %v3163, %v3162
        %v3187 = vpack.c.b16 %v3165, %v3164
        %v3188 = vpack.c.b16 %v3167, %v3166
        %v3189 = vpack.c.b16 %v3169, %v3168
        %v3190 = vpack.c.b16 %v3171, %v3170
        %v3191 = vpack.c.b16 %v3173, %v3172
        %v3192 = vpack.c.b16 %v3175, %v3174
        %v3193 = vpack.c.b16 %v3177, %v3176
        %3210 = vmatprep.subr.bf16.mxu0 0
        %3211 = vmatpush1.bf16.msra.mxu0 %v3178
        %3212 = vmatprep.subr.bf16.mxu0 0
        %3213 = vmatpush1.bf16.msra.mxu0 %v3179
        %3214 = vmatprep.subr.bf16.mxu0 0
        %3215 = vmatpush1.bf16.msra.mxu0 %v3180
        %3216 = vmatprep.subr.bf16.mxu0 0
        %3217 = vmatpush1.bf16.msra.mxu0 %v3181
        %3218 = vmatprep.subr.bf16.mxu0 0
        %3219 = vmatpush1.bf16.msra.mxu0 %v3182
        %3220 = vmatprep.subr.bf16.mxu0 0
        %3221 = vmatpush1.bf16.msra.mxu0 %v3183
        %3222 = vmatprep.subr.bf16.mxu0 0
        %3223 = vmatpush1.bf16.msra.mxu0 %v3184
        %3224 = vmatprep.subr.bf16.mxu0 0
        %3225 = vmatpush1.bf16.msra.mxu0 %v3185
        %3226 = vmatprep.subr.bf16.mxu0 0
        %3227 = vmatpush1.bf16.msra.mxu0 %v3186
        %3228 = vmatprep.subr.bf16.mxu0 0
        %3229 = vmatpush1.bf16.msra.mxu0 %v3187
        %3230 = vmatprep.subr.bf16.mxu0 0
        %3231 = vmatpush1.bf16.msra.mxu0 %v3188
        %3232 = vmatprep.subr.bf16.mxu0 0
        %3233 = vmatpush1.bf16.msra.mxu0 %v3189
        %3234 = vmatprep.subr.bf16.mxu0 0
        %3235 = vmatpush1.bf16.msra.mxu0 %v3190
        %3236 = vmatprep.subr.bf16.mxu0 0
        %3237 = vmatpush1.bf16.msra.mxu0 %v3191
        %3238 = vmatprep.subr.bf16.mxu0 0
        %3239 = vmatpush1.bf16.msra.mxu0 %v3192
        %3240 = vmatprep.subr.bf16.mxu0 0
        %3241 = vmatpush1.bf16.msra.mxu0 %v3193
        %3242 = vmatprep.mubr.bf16.mxu0 %v2159
        %3243 = vmatmul.mubr.bf16.gmra.mrb[0].mxu0 %v2158
        %v3244 = vpop.f32.mrb[0].mxu0
        %v3245 = vadd.f32 %v2146, %v3244
        %v3246 = vpop.f32.mrb[0].mxu0
        %v3247 = vpop.f32.mrb[0].mxu0
        %v3248 = vpop.f32.mrb[0].mxu0
        %3249 = vdwg.mxu0
        %v3250 = vld [vmem:[%s424] sm:$0xff]
        %v3251 = vld [vmem:[%s5] sm:$0xf]
        %v3252 = vld [vmem:[%s5 + $0x4] sm:$0xf]
        %v3253 = vld [vmem:[%s5 + $0x8] sm:$0xf]
        %v3254 = vld [vmem:[%s5 + $0xc] sm:$0xf]
        %v3255 = vld [vmem:[%s5 + $0x10] sm:$0xf]
        %v3256 = vld [vmem:[%s5 + $0x14] sm:$0xf]
        %v3257 = vld [vmem:[%s5 + $0x18] sm:$0xf]
        %v3258 = vld [vmem:[%s5 + $0x1c] sm:$0xf]
        %v3259 = vld [vmem:[%s5 + $0x20] sm:$0xf]
        %v3260 = vld [vmem:[%s5 + $0x24] sm:$0xf]
        %v3261 = vld [vmem:[%s5 + $0x28] sm:$0xf]
        %v3262 = vld [vmem:[%s5 + $0x2c] sm:$0xf]
        %v3263 = vld [vmem:[%s5 + $0x30] sm:$0xf]
        %v3264 = vld [vmem:[%s5 + $0x34] sm:$0xf]
        %v3265 = vld [vmem:[%s5 + $0x38] sm:$0xf]
        %v3266 = vld [vmem:[%s5 + $0x3c] sm:$0xf]
        %v3267 = vld [vmem:[%s5 + $0x40] sm:$0xf]
        %v3268 = vld [vmem:[%s5 + $0x44] sm:$0xf]
        %v3269 = vld [vmem:[%s5 + $0x48] sm:$0xf]
        %v3270 = vld [vmem:[%s5 + $0x4c] sm:$0xf]
        %v3271 = vld [vmem:[%s5 + $0x50] sm:$0xf]
        %v3272 = vld [vmem:[%s5 + $0x54] sm:$0xf]
        %v3273 = vld [vmem:[%s5 + $0x58] sm:$0xf]
        %v3274 = vld [vmem:[%s5 + $0x5c] sm:$0xf]
        %v3275 = vld [vmem:[%s5 + $0x60] sm:$0xf]
        %v3276 = vld [vmem:[%s5 + $0x64] sm:$0xf]
        %v3277 = vld [vmem:[%s5 + $0x68] sm:$0xf]
        %v3278 = vld [vmem:[%s5 + $0x6c] sm:$0xf]
        %v3279 = vld [vmem:[%s5 + $0x70] sm:$0xf]
        %v3280 = vld [vmem:[%s5 + $0x74] sm:$0xf]
        %v3281 = vld [vmem:[%s5 + $0x78] sm:$0xf]
        %v3282 = vld [vmem:[%s5 + $0x7c] sm:$0xf]
        %v3283 = vld [vmem:[%s5 + $0x80] sm:$0xf]
        %v3284 = vld [vmem:[%s5 + $0x84] sm:$0xf]
        %v3285 = vld [vmem:[%s5 + $0x88] sm:$0xf]
        %v3286 = vld [vmem:[%s5 + $0x8c] sm:$0xf]
        %v3287 = vld [vmem:[%s5 + $0x90] sm:$0xf]
        %v3288 = vld [vmem:[%s5 + $0x94] sm:$0xf]
        %v3289 = vld [vmem:[%s5 + $0x98] sm:$0xf]
        %v3290 = vld [vmem:[%s5 + $0x9c] sm:$0xf]
        %v3291 = vld [vmem:[%s5 + $0xa0] sm:$0xf]
        %v3292 = vld [vmem:[%s5 + $0xa4] sm:$0xf]
        %v3293 = vld [vmem:[%s5 + $0xa8] sm:$0xf]
        %v3294 = vld [vmem:[%s5 + $0xac] sm:$0xf]
        %v3295 = vld [vmem:[%s5 + $0xb0] sm:$0xf]
        %v3296 = vld [vmem:[%s5 + $0xb4] sm:$0xf]
        %v3297 = vld [vmem:[%s5 + $0xb8] sm:$0xf]
        %v3298 = vld [vmem:[%s5 + $0xbc] sm:$0xf]
        %v3299 = vld [vmem:[%s5 + $0xc0] sm:$0xf]
        %v3300 = vld [vmem:[%s5 + $0xc4] sm:$0xf]
        %v3301 = vld [vmem:[%s5 + $0xc8] sm:$0xf]
        %v3302 = vld [vmem:[%s5 + $0xcc] sm:$0xf]
        %v3303 = vld [vmem:[%s5 + $0xd0] sm:$0xf]
        %v3304 = vld [vmem:[%s5 + $0xd4] sm:$0xf]
        %v3305 = vld [vmem:[%s5 + $0xd8] sm:$0xf]
        %v3306 = vld [vmem:[%s5 + $0xdc] sm:$0xf]
        %v3307 = vld [vmem:[%s5 + $0xe0] sm:$0xf]
        %v3308 = vld [vmem:[%s5 + $0xe4] sm:$0xf]
        %v3309 = vld [vmem:[%s5 + $0xe8] sm:$0xf]
        %v3310 = vld [vmem:[%s5 + $0xec] sm:$0xf]
        %v3311 = vld [vmem:[%s5 + $0xf0] sm:$0xf]
        %v3312 = vld [vmem:[%s5 + $0xf4] sm:$0xf]
        %v3313 = vld [vmem:[%s5 + $0xf8] sm:$0xf]
        %v3314 = vld [vmem:[%s5 + $0xfc] sm:$0xf]
        %v3315 = vld [vmem:[%s5 + $0x100] sm:$0xf]
        %v3316 = vld [vmem:[%s5 + $0x104] sm:$0xf]
        %v3317 = vld [vmem:[%s5 + $0x108] sm:$0xf]
        %v3318 = vld [vmem:[%s5 + $0x10c] sm:$0xf]
        %v3319 = vld [vmem:[%s5 + $0x110] sm:$0xf]
        %v3320 = vld [vmem:[%s5 + $0x114] sm:$0xf]
        %v3321 = vld [vmem:[%s5 + $0x118] sm:$0xf]
        %v3322 = vld [vmem:[%s5 + $0x11c] sm:$0xf]
        %v3323 = vld [vmem:[%s5 + $0x120] sm:$0xf]
        %v3324 = vld [vmem:[%s5 + $0x124] sm:$0xf]
        %v3325 = vld [vmem:[%s5 + $0x128] sm:$0xf]
        %v3326 = vld [vmem:[%s5 + $0x12c] sm:$0xf]
        %v3327 = vld [vmem:[%s5 + $0x130] sm:$0xf]
        %v3328 = vld [vmem:[%s5 + $0x134] sm:$0xf]
        %v3329 = vld [vmem:[%s5 + $0x138] sm:$0xf]
        %v3330 = vld [vmem:[%s5 + $0x13c] sm:$0xf]
        %v3331 = vld [vmem:[%s5 + $0x140] sm:$0xf]
        %v3332 = vld [vmem:[%s5 + $0x144] sm:$0xf]
        %v3333 = vld [vmem:[%s5 + $0x148] sm:$0xf]
        %v3334 = vld [vmem:[%s5 + $0x14c] sm:$0xf]
        %v3335 = vld [vmem:[%s5 + $0x150] sm:$0xf]
        %v3336 = vld [vmem:[%s5 + $0x154] sm:$0xf]
        %v3337 = vld [vmem:[%s5 + $0x158] sm:$0xf]
        %v3338 = vld [vmem:[%s5 + $0x15c] sm:$0xf]
        %v3339 = vld [vmem:[%s5 + $0x160] sm:$0xf]
        %v3340 = vld [vmem:[%s5 + $0x164] sm:$0xf]
        %v3341 = vld [vmem:[%s5 + $0x168] sm:$0xf]
        %v3342 = vld [vmem:[%s5 + $0x16c] sm:$0xf]
        %v3343 = vld [vmem:[%s5 + $0x170] sm:$0xf]
        %v3344 = vld [vmem:[%s5 + $0x174] sm:$0xf]
        %v3345 = vld [vmem:[%s5 + $0x178] sm:$0xf]
        %v3346 = vld [vmem:[%s5 + $0x17c] sm:$0xf]
        %v3347 = vld [vmem:[%s5 + $0x180] sm:$0xf]
        %v3348 = vld [vmem:[%s5 + $0x184] sm:$0xf]
        %v3349 = vld [vmem:[%s5 + $0x188] sm:$0xf]
        %v3350 = vld [vmem:[%s5 + $0x18c] sm:$0xf]
        %v3351 = vld [vmem:[%s5 + $0x190] sm:$0xf]
        %v3352 = vld [vmem:[%s5 + $0x194] sm:$0xf]
        %v3353 = vld [vmem:[%s5 + $0x198] sm:$0xf]
        %v3354 = vld [vmem:[%s5 + $0x19c] sm:$0xf]
        %v3355 = vld [vmem:[%s5 + $0x1a0] sm:$0xf]
        %v3356 = vld [vmem:[%s5 + $0x1a4] sm:$0xf]
        %v3357 = vld [vmem:[%s5 + $0x1a8] sm:$0xf]
        %v3358 = vld [vmem:[%s5 + $0x1ac] sm:$0xf]
        %v3359 = vld [vmem:[%s5 + $0x1b0] sm:$0xf]
        %v3360 = vld [vmem:[%s5 + $0x1b4] sm:$0xf]
        %v3361 = vld [vmem:[%s5 + $0x1b8] sm:$0xf]
        %v3362 = vld [vmem:[%s5 + $0x1bc] sm:$0xf]
        %v3363 = vld [vmem:[%s5 + $0x1c0] sm:$0xf]
        %v3364 = vld [vmem:[%s5 + $0x1c4] sm:$0xf]
        %v3365 = vld [vmem:[%s5 + $0x1c8] sm:$0xf]
        %v3366 = vld [vmem:[%s5 + $0x1cc] sm:$0xf]
        %v3367 = vld [vmem:[%s5 + $0x1d0] sm:$0xf]
        %v3368 = vld [vmem:[%s5 + $0x1d4] sm:$0xf]
        %v3369 = vld [vmem:[%s5 + $0x1d8] sm:$0xf]
        %v3370 = vld [vmem:[%s5 + $0x1dc] sm:$0xf]
        %v3371 = vld [vmem:[%s5 + $0x1e0] sm:$0xf]
        %v3372 = vld [vmem:[%s5 + $0x1e4] sm:$0xf]
        %v3373 = vld [vmem:[%s5 + $0x1e8] sm:$0xf]
        %v3374 = vld [vmem:[%s5 + $0x1ec] sm:$0xf]
        %v3375 = vld [vmem:[%s5 + $0x1f0] sm:$0xf]
        %v3376 = vld [vmem:[%s5 + $0x1f4] sm:$0xf]
        %v3377 = vld [vmem:[%s5 + $0x1f8] sm:$0xf]
        %v3378 = vld [vmem:[%s5 + $0x1fc] sm:$0xf]
        %v3379 = vld [vmem:[%s5 + $0x200] sm:$0xf]
        %v3380 = vld [vmem:[%s5 + $0x204] sm:$0xf]
        %v3381 = vld [vmem:[%s5 + $0x208] sm:$0xf]
        %v3382 = vld [vmem:[%s5 + $0x20c] sm:$0xf]
        %v3383 = vld [vmem:[%s5 + $0x210] sm:$0xf]
        %v3384 = vld [vmem:[%s5 + $0x214] sm:$0xf]
        %v3385 = vld [vmem:[%s5 + $0x218] sm:$0xf]
        %v3386 = vld [vmem:[%s5 + $0x21c] sm:$0xf]
        %v3387 = vld [vmem:[%s5 + $0x220] sm:$0xf]
        %v3388 = vld [vmem:[%s5 + $0x224] sm:$0xf]
        %v3389 = vld [vmem:[%s5 + $0x228] sm:$0xf]
        %v3390 = vld [vmem:[%s5 + $0x22c] sm:$0xf]
        %v3391 = vld [vmem:[%s5 + $0x230] sm:$0xf]
        %v3392 = vld [vmem:[%s5 + $0x234] sm:$0xf]
        %v3393 = vld [vmem:[%s5 + $0x238] sm:$0xf]
        %v3394 = vld [vmem:[%s5 + $0x23c] sm:$0xf]
        %v3395 = vld [vmem:[%s5 + $0x240] sm:$0xf]
        %v3396 = vld [vmem:[%s5 + $0x244] sm:$0xf]
        %v3397 = vld [vmem:[%s5 + $0x248] sm:$0xf]
        %v3398 = vld [vmem:[%s5 + $0x24c] sm:$0xf]
        %v3399 = vld [vmem:[%s5 + $0x250] sm:$0xf]
        %v3400 = vld [vmem:[%s5 + $0x254] sm:$0xf]
        %v3401 = vld [vmem:[%s5 + $0x258] sm:$0xf]
        %v3402 = vld [vmem:[%s5 + $0x25c] sm:$0xf]
        %v3403 = vld [vmem:[%s5 + $0x260] sm:$0xf]
        %v3404 = vld [vmem:[%s5 + $0x264] sm:$0xf]
        %v3405 = vld [vmem:[%s5 + $0x268] sm:$0xf]
        %v3406 = vld [vmem:[%s5 + $0x26c] sm:$0xf]
        %v3407 = vld [vmem:[%s5 + $0x270] sm:$0xf]
        %v3408 = vld [vmem:[%s5 + $0x274] sm:$0xf]
        %v3409 = vld [vmem:[%s5 + $0x278] sm:$0xf]
        %v3410 = vld [vmem:[%s5 + $0x27c] sm:$0xf]
        %v3411 = vld [vmem:[%s5 + $0x280] sm:$0xf]
        %v3412 = vld [vmem:[%s5 + $0x284] sm:$0xf]
        %v3413 = vld [vmem:[%s5 + $0x288] sm:$0xf]
        %v3414 = vld [vmem:[%s5 + $0x28c] sm:$0xf]
        %v3415 = vld [vmem:[%s5 + $0x290] sm:$0xf]
        %v3416 = vld [vmem:[%s5 + $0x294] sm:$0xf]
        %v3417 = vld [vmem:[%s5 + $0x298] sm:$0xf]
        %v3418 = vld [vmem:[%s5 + $0x29c] sm:$0xf]
        %v3419 = vld [vmem:[%s5 + $0x2a0] sm:$0xf]
        %v3420 = vld [vmem:[%s5 + $0x2a4] sm:$0xf]
        %v3421 = vld [vmem:[%s5 + $0x2a8] sm:$0xf]
        %v3422 = vld [vmem:[%s5 + $0x2ac] sm:$0xf]
        %v3423 = vld [vmem:[%s5 + $0x2b0] sm:$0xf]
        %v3424 = vld [vmem:[%s5 + $0x2b4] sm:$0xf]
        %v3425 = vld [vmem:[%s5 + $0x2b8] sm:$0xf]
        %v3426 = vld [vmem:[%s5 + $0x2bc] sm:$0xf]
        %v3427 = vld [vmem:[%s5 + $0x2c0] sm:$0xf]
        %v3428 = vld [vmem:[%s5 + $0x2c4] sm:$0xf]
        %v3429 = vld [vmem:[%s5 + $0x2c8] sm:$0xf]
        %v3430 = vld [vmem:[%s5 + $0x2cc] sm:$0xf]
        %v3431 = vld [vmem:[%s5 + $0x2d0] sm:$0xf]
        %v3432 = vld [vmem:[%s5 + $0x2d4] sm:$0xf]
        %v3433 = vld [vmem:[%s5 + $0x2d8] sm:$0xf]
        %v3434 = vld [vmem:[%s5 + $0x2dc] sm:$0xf]
        %v3435 = vld [vmem:[%s5 + $0x2e0] sm:$0xf]
        %v3436 = vld [vmem:[%s5 + $0x2e4] sm:$0xf]
        %v3437 = vld [vmem:[%s5 + $0x2e8] sm:$0xf]
        %v3438 = vld [vmem:[%s5 + $0x2ec] sm:$0xf]
        %v3439 = vld [vmem:[%s5 + $0x2f0] sm:$0xf]
        %v3440 = vld [vmem:[%s5 + $0x2f4] sm:$0xf]
        %v3441 = vld [vmem:[%s5 + $0x2f8] sm:$0xf]
        %v3442 = vld [vmem:[%s5 + $0x2fc] sm:$0xf]
        %v3443 = vld [vmem:[%s5 + $0x300] sm:$0xf]
        %v3444 = vld [vmem:[%s5 + $0x304] sm:$0xf]
        %v3445 = vld [vmem:[%s5 + $0x308] sm:$0xf]
        %v3446 = vld [vmem:[%s5 + $0x30c] sm:$0xf]
        %v3447 = vld [vmem:[%s5 + $0x310] sm:$0xf]
        %v3448 = vld [vmem:[%s5 + $0x314] sm:$0xf]
        %v3449 = vld [vmem:[%s5 + $0x318] sm:$0xf]
        %v3450 = vld [vmem:[%s5 + $0x31c] sm:$0xf]
        %v3451 = vld [vmem:[%s5 + $0x320] sm:$0xf]
        %v3452 = vld [vmem:[%s5 + $0x324] sm:$0xf]
        %v3453 = vld [vmem:[%s5 + $0x328] sm:$0xf]
        %v3454 = vld [vmem:[%s5 + $0x32c] sm:$0xf]
        %v3455 = vld [vmem:[%s5 + $0x330] sm:$0xf]
        %v3456 = vld [vmem:[%s5 + $0x334] sm:$0xf]
        %v3457 = vld [vmem:[%s5 + $0x338] sm:$0xf]
        %v3458 = vld [vmem:[%s5 + $0x33c] sm:$0xf]
        %v3459 = vld [vmem:[%s5 + $0x340] sm:$0xf]
        %v3460 = vld [vmem:[%s5 + $0x344] sm:$0xf]
        %v3461 = vld [vmem:[%s5 + $0x348] sm:$0xf]
        %v3462 = vld [vmem:[%s5 + $0x34c] sm:$0xf]
        %v3463 = vld [vmem:[%s5 + $0x350] sm:$0xf]
        %v3464 = vld [vmem:[%s5 + $0x354] sm:$0xf]
        %v3465 = vld [vmem:[%s5 + $0x358] sm:$0xf]
        %v3466 = vld [vmem:[%s5 + $0x35c] sm:$0xf]
        %v3467 = vld [vmem:[%s5 + $0x360] sm:$0xf]
        %v3468 = vld [vmem:[%s5 + $0x364] sm:$0xf]
        %v3469 = vld [vmem:[%s5 + $0x368] sm:$0xf]
        %v3470 = vld [vmem:[%s5 + $0x36c] sm:$0xf]
        %v3471 = vld [vmem:[%s5 + $0x370] sm:$0xf]
        %v3472 = vld [vmem:[%s5 + $0x374] sm:$0xf]
        %v3473 = vld [vmem:[%s5 + $0x378] sm:$0xf]
        %v3474 = vld [vmem:[%s5 + $0x37c] sm:$0xf]
        %v3475 = vld [vmem:[%s5 + $0x380] sm:$0xf]
        %v3476 = vld [vmem:[%s5 + $0x384] sm:$0xf]
        %v3477 = vld [vmem:[%s5 + $0x388] sm:$0xf]
        %v3478 = vld [vmem:[%s5 + $0x38c] sm:$0xf]
        %v3479 = vld [vmem:[%s5 + $0x390] sm:$0xf]
        %v3480 = vld [vmem:[%s5 + $0x394] sm:$0xf]
        %v3481 = vld [vmem:[%s5 + $0x398] sm:$0xf]
        %v3482 = vld [vmem:[%s5 + $0x39c] sm:$0xf]
        %v3483 = vld [vmem:[%s5 + $0x3a0] sm:$0xf]
        %v3484 = vld [vmem:[%s5 + $0x3a4] sm:$0xf]
        %v3485 = vld [vmem:[%s5 + $0x3a8] sm:$0xf]
        %v3486 = vld [vmem:[%s5 + $0x3ac] sm:$0xf]
        %v3487 = vld [vmem:[%s5 + $0x3b0] sm:$0xf]
        %v3488 = vld [vmem:[%s5 + $0x3b4] sm:$0xf]
        %v3489 = vld [vmem:[%s5 + $0x3b8] sm:$0xf]
        %v3490 = vld [vmem:[%s5 + $0x3bc] sm:$0xf]
        %v3491 = vld [vmem:[%s5 + $0x3c0] sm:$0xf]
        %v3492 = vld [vmem:[%s5 + $0x3c4] sm:$0xf]
        %v3493 = vld [vmem:[%s5 + $0x3c8] sm:$0xf]
        %v3494 = vld [vmem:[%s5 + $0x3cc] sm:$0xf]
        %v3495 = vld [vmem:[%s5 + $0x3d0] sm:$0xf]
        %v3496 = vld [vmem:[%s5 + $0x3d4] sm:$0xf]
        %v3497 = vld [vmem:[%s5 + $0x3d8] sm:$0xf]
        %v3498 = vld [vmem:[%s5 + $0x3dc] sm:$0xf]
        %v3499 = vld [vmem:[%s5 + $0x3e0] sm:$0xf]
        %v3500 = vld [vmem:[%s5 + $0x3e4] sm:$0xf]
        %v3501 = vld [vmem:[%s5 + $0x3e8] sm:$0xf]
        %v3502 = vld [vmem:[%s5 + $0x3ec] sm:$0xf]
        %v3503 = vld [vmem:[%s5 + $0x3f0] sm:$0xf]
        %v3504 = vld [vmem:[%s5 + $0x3f4] sm:$0xf]
        %v3505 = vld [vmem:[%s5 + $0x3f8] sm:$0xf]
        %v3506 = vld [vmem:[%s5 + $0x3fc] sm:$0xf]
        %v3507 = vld [vmem:[%s9] sm:$0x1]
        %v3508 = vld [vmem:[%s9 + $0x1] sm:$0x1]
        %v3509 = vld [vmem:[%s9 + $0x2] sm:$0x1]
        %v3510 = vld [vmem:[%s9 + $0x3] sm:$0x1]
        %v3511 = vld [vmem:[%s9 + $0x4] sm:$0x1]
        %v3512 = vld [vmem:[%s9 + $0x5] sm:$0x1]
        %v3513 = vld [vmem:[%s9 + $0x6] sm:$0x1]
        %v3514 = vld [vmem:[%s9 + $0x7] sm:$0x1]
        %v3523 = vlaneseq
        %v3524 = vshrl.u32 %v3523, 7
        %v3525 = vsub.s32 0, %v3524
        %v3526 = vrot.slane %v3507, %v3525
        %v3527 = vlaneseq
        %v3528 = vshrl.u32 %v3527, 7
        %v3529 = vsub.s32 0, %v3528
        %v3530 = vrot.slane %v3508, %v3529
        %v3531 = vlaneseq
        %v3532 = vshrl.u32 %v3531, 7
        %v3533 = vsub.s32 0, %v3532
        %v3534 = vrot.slane %v3509, %v3533
        %v3535 = vlaneseq
        %v3536 = vshrl.u32 %v3535, 7
        %v3537 = vsub.s32 0, %v3536
        %v3538 = vrot.slane %v3510, %v3537
        %v3539 = vlaneseq
        %v3540 = vshrl.u32 %v3539, 7
        %v3541 = vsub.s32 0, %v3540
        %v3542 = vrot.slane %v3511, %v3541
        %v3543 = vlaneseq
        %v3544 = vshrl.u32 %v3543, 7
        %v3545 = vsub.s32 0, %v3544
        %v3546 = vrot.slane %v3512, %v3545
        %v3547 = vlaneseq
        %v3548 = vshrl.u32 %v3547, 7
        %v3549 = vsub.s32 0, %v3548
        %v3550 = vrot.slane %v3513, %v3549
        %v3551 = vlaneseq
        %v3552 = vshrl.u32 %v3551, 7
        %v3553 = vsub.s32 0, %v3552
        %v3554 = vrot.slane %v3514, %v3553
        %v3564 = vunpack.c.l.b16 %v3250
        %v3565 = vunpack.c.h.b16 %v3250
        %v3566 = vpack.c.b16 %v3564, %v3564
        %v3567 = vpack.c.b16 %v3565, %v3565
        %v3602 = vunpack.c.l.b16 %v3251
        %v3603 = vunpack.c.l.b16 %v3252
        %v3604 = vunpack.c.l.b16 %v3253
        %v3605 = vunpack.c.l.b16 %v3254
        %v3606 = vunpack.c.l.b16 %v3255
        %v3607 = vunpack.c.l.b16 %v3256
        %v3608 = vunpack.c.l.b16 %v3257
        %v3609 = vunpack.c.l.b16 %v3258
        %v3610 = vunpack.c.l.b16 %v3259
        %v3611 = vunpack.c.l.b16 %v3260
        %v3612 = vunpack.c.l.b16 %v3261
        %v3613 = vunpack.c.l.b16 %v3262
        %v3614 = vunpack.c.l.b16 %v3263
        %v3615 = vunpack.c.l.b16 %v3264
        %v3616 = vunpack.c.l.b16 %v3265
        %v3617 = vunpack.c.l.b16 %v3266
        %v3618 = vunpack.c.l.b16 %v3267
        %v3619 = vunpack.c.l.b16 %v3268
        %v3620 = vunpack.c.l.b16 %v3269
        %v3621 = vunpack.c.l.b16 %v3270
        %v3622 = vunpack.c.l.b16 %v3271
        %v3623 = vunpack.c.l.b16 %v3272
        %v3624 = vunpack.c.l.b16 %v3273
        %v3625 = vunpack.c.l.b16 %v3274
        %v3626 = vunpack.c.l.b16 %v3275
        %v3627 = vunpack.c.l.b16 %v3276
        %v3628 = vunpack.c.l.b16 %v3277
        %v3629 = vunpack.c.l.b16 %v3278
        %v3630 = vunpack.c.l.b16 %v3279
        %v3631 = vunpack.c.l.b16 %v3280
        %v3632 = vunpack.c.l.b16 %v3281
        %v3633 = vunpack.c.l.b16 %v3282
        %v3634 = vpack.c.b16 %v3603, %v3602
        %v3635 = vpack.c.b16 %v3605, %v3604
        %v3636 = vpack.c.b16 %v3607, %v3606
        %v3637 = vpack.c.b16 %v3609, %v3608
        %v3638 = vpack.c.b16 %v3611, %v3610
        %v3639 = vpack.c.b16 %v3613, %v3612
        %v3640 = vpack.c.b16 %v3615, %v3614
        %v3641 = vpack.c.b16 %v3617, %v3616
        %v3642 = vpack.c.b16 %v3619, %v3618
        %v3643 = vpack.c.b16 %v3621, %v3620
        %v3644 = vpack.c.b16 %v3623, %v3622
        %v3645 = vpack.c.b16 %v3625, %v3624
        %v3646 = vpack.c.b16 %v3627, %v3626
        %v3647 = vpack.c.b16 %v3629, %v3628
        %v3648 = vpack.c.b16 %v3631, %v3630
        %v3649 = vpack.c.b16 %v3633, %v3632
        %3666 = vmatprep.subr.bf16.mxu0 0
        %3667 = vmatpush1.bf16.msra.mxu0 %v3634
        %3668 = vmatprep.subr.bf16.mxu0 0
        %3669 = vmatpush1.bf16.msra.mxu0 %v3635
        %3670 = vmatprep.subr.bf16.mxu0 0
        %3671 = vmatpush1.bf16.msra.mxu0 %v3636
        %3672 = vmatprep.subr.bf16.mxu0 0
        %3673 = vmatpush1.bf16.msra.mxu0 %v3637
        %3674 = vmatprep.subr.bf16.mxu0 0
        %3675 = vmatpush1.bf16.msra.mxu0 %v3638
        %3676 = vmatprep.subr.bf16.mxu0 0
        %3677 = vmatpush1.bf16.msra.mxu0 %v3639
        %3678 = vmatprep.subr.bf16.mxu0 0
        %3679 = vmatpush1.bf16.msra.mxu0 %v3640
        %3680 = vmatprep.subr.bf16.mxu0 0
        %3681 = vmatpush1.bf16.msra.mxu0 %v3641
        %3682 = vmatprep.subr.bf16.mxu0 0
        %3683 = vmatpush1.bf16.msra.mxu0 %v3642
        %3684 = vmatprep.subr.bf16.mxu0 0
        %3685 = vmatpush1.bf16.msra.mxu0 %v3643
        %3686 = vmatprep.subr.bf16.mxu0 0
        %3687 = vmatpush1.bf16.msra.mxu0 %v3644
        %3688 = vmatprep.subr.bf16.mxu0 0
        %3689 = vmatpush1.bf16.msra.mxu0 %v3645
        %3690 = vmatprep.subr.bf16.mxu0 0
        %3691 = vmatpush1.bf16.msra.mxu0 %v3646
        %3692 = vmatprep.subr.bf16.mxu0 0
        %3693 = vmatpush1.bf16.msra.mxu0 %v3647
        %3694 = vmatprep.subr.bf16.mxu0 0
        %3695 = vmatpush1.bf16.msra.mxu0 %v3648
        %3696 = vmatprep.subr.bf16.mxu0 0
        %3697 = vmatpush1.bf16.msra.mxu0 %v3649
        %3698 = vmatprep.mubr.bf16.mxu0 %v3567
        %3699 = vmatmul.mubr.bf16.gmra.mrb[0].mxu0 %v3566
        %v3700 = vpop.f32.mrb[0].mxu0
        %v3701 = vadd.f32 %v3526, %v3700
        %v3702 = vpop.f32.mrb[0].mxu0
        %v3703 = vpop.f32.mrb[0].mxu0
        %v3704 = vpop.f32.mrb[0].mxu0
        %3705 = vdwg.mxu0
        %v3738 = vunpack.c.l.b16 %v3283
        %v3739 = vunpack.c.l.b16 %v3284
        %v3740 = vunpack.c.l.b16 %v3285
        %v3741 = vunpack.c.l.b16 %v3286
        %v3742 = vunpack.c.l.b16 %v3287
        %v3743 = vunpack.c.l.b16 %v3288
        %v3744 = vunpack.c.l.b16 %v3289
        %v3745 = vunpack.c.l.b16 %v3290
        %v3746 = vunpack.c.l.b16 %v3291
        %v3747 = vunpack.c.l.b16 %v3292
        %v3748 = vunpack.c.l.b16 %v3293
        %v3749 = vunpack.c.l.b16 %v3294
        %v3750 = vunpack.c.l.b16 %v3295
        %v3751 = vunpack.c.l.b16 %v3296
        %v3752 = vunpack.c.l.b16 %v3297
        %v3753 = vunpack.c.l.b16 %v3298
        %v3754 = vunpack.c.l.b16 %v3299
        %v3755 = vunpack.c.l.b16 %v3300
        %v3756 = vunpack.c.l.b16 %v3301
        %v3757 = vunpack.c.l.b16 %v3302
        %v3758 = vunpack.c.l.b16 %v3303
        %v3759 = vunpack.c.l.b16 %v3304
        %v3760 = vunpack.c.l.b16 %v3305
        %v3761 = vunpack.c.l.b16 %v3306
        %v3762 = vunpack.c.l.b16 %v3307
        %v3763 = vunpack.c.l.b16 %v3308
        %v3764 = vunpack.c.l.b16 %v3309
        %v3765 = vunpack.c.l.b16 %v3310
        %v3766 = vunpack.c.l.b16 %v3311
        %v3767 = vunpack.c.l.b16 %v3312
        %v3768 = vunpack.c.l.b16 %v3313
        %v3769 = vunpack.c.l.b16 %v3314
        %v3770 = vpack.c.b16 %v3739, %v3738
        %v3771 = vpack.c.b16 %v3741, %v3740
        %v3772 = vpack.c.b16 %v3743, %v3742
        %v3773 = vpack.c.b16 %v3745, %v3744
        %v3774 = vpack.c.b16 %v3747, %v3746
        %v3775 = vpack.c.b16 %v3749, %v3748
        %v3776 = vpack.c.b16 %v3751, %v3750
        %v3777 = vpack.c.b16 %v3753, %v3752
        %v3778 = vpack.c.b16 %v3755, %v3754
        %v3779 = vpack.c.b16 %v3757, %v3756
        %v3780 = vpack.c.b16 %v3759, %v3758
        %v3781 = vpack.c.b16 %v3761, %v3760
        %v3782 = vpack.c.b16 %v3763, %v3762
        %v3783 = vpack.c.b16 %v3765, %v3764
        %v3784 = vpack.c.b16 %v3767, %v3766
        %v3785 = vpack.c.b16 %v3769, %v3768
        %3802 = vmatprep.subr.bf16.mxu0 0
        %3803 = vmatpush1.bf16.msra.mxu0 %v3770
        %3804 = vmatprep.subr.bf16.mxu0 0
        %3805 = vmatpush1.bf16.msra.mxu0 %v3771
        %3806 = vmatprep.subr.bf16.mxu0 0
        %3807 = vmatpush1.bf16.msra.mxu0 %v3772
        %3808 = vmatprep.subr.bf16.mxu0 0
        %3809 = vmatpush1.bf16.msra.mxu0 %v3773
        %3810 = vmatprep.subr.bf16.mxu0 0
        %3811 = vmatpush1.bf16.msra.mxu0 %v3774
        %3812 = vmatprep.subr.bf16.mxu0 0
        %3813 = vmatpush1.bf16.msra.mxu0 %v3775
        %3814 = vmatprep.subr.bf16.mxu0 0
        %3815 = vmatpush1.bf16.msra.mxu0 %v3776
        %3816 = vmatprep.subr.bf16.mxu0 0
        %3817 = vmatpush1.bf16.msra.mxu0 %v3777
        %3818 = vmatprep.subr.bf16.mxu0 0
        %3819 = vmatpush1.bf16.msra.mxu0 %v3778
        %3820 = vmatprep.subr.bf16.mxu0 0
        %3821 = vmatpush1.bf16.msra.mxu0 %v3779
        %3822 = vmatprep.subr.bf16.mxu0 0
        %3823 = vmatpush1.bf16.msra.mxu0 %v3780
        %3824 = vmatprep.subr.bf16.mxu0 0
        %3825 = vmatpush1.bf16.msra.mxu0 %v3781
        %3826 = vmatprep.subr.bf16.mxu0 0
        %3827 = vmatpush1.bf16.msra.mxu0 %v3782
        %3828 = vmatprep.subr.bf16.mxu0 0
        %3829 = vmatpush1.bf16.msra.mxu0 %v3783
        %3830 = vmatprep.subr.bf16.mxu0 0
        %3831 = vmatpush1.bf16.msra.mxu0 %v3784
        %3832 = vmatprep.subr.bf16.mxu0 0
        %3833 = vmatpush1.bf16.msra.mxu0 %v3785
        %3834 = vmatprep.mubr.bf16.mxu0 %v3567
        %3835 = vmatmul.mubr.bf16.gmra.mrb[0].mxu0 %v3566
        %v3836 = vpop.f32.mrb[0].mxu0
        %v3837 = vadd.f32 %v3530, %v3836
        %v3838 = vpop.f32.mrb[0].mxu0
        %v3839 = vpop.f32.mrb[0].mxu0
        %v3840 = vpop.f32.mrb[0].mxu0
        %3841 = vdwg.mxu0
        %v3874 = vunpack.c.l.b16 %v3315
        %v3875 = vunpack.c.l.b16 %v3316
        %v3876 = vunpack.c.l.b16 %v3317
        %v3877 = vunpack.c.l.b16 %v3318
        %v3878 = vunpack.c.l.b16 %v3319
        %v3879 = vunpack.c.l.b16 %v3320
        %v3880 = vunpack.c.l.b16 %v3321
        %v3881 = vunpack.c.l.b16 %v3322
        %v3882 = vunpack.c.l.b16 %v3323
        %v3883 = vunpack.c.l.b16 %v3324
        %v3884 = vunpack.c.l.b16 %v3325
        %v3885 = vunpack.c.l.b16 %v3326
        %v3886 = vunpack.c.l.b16 %v3327
        %v3887 = vunpack.c.l.b16 %v3328
        %v3888 = vunpack.c.l.b16 %v3329
        %v3889 = vunpack.c.l.b16 %v3330
        %v3890 = vunpack.c.l.b16 %v3331
        %v3891 = vunpack.c.l.b16 %v3332
        %v3892 = vunpack.c.l.b16 %v3333
        %v3893 = vunpack.c.l.b16 %v3334
        %v3894 = vunpack.c.l.b16 %v3335
        %v3895 = vunpack.c.l.b16 %v3336
        %v3896 = vunpack.c.l.b16 %v3337
        %v3897 = vunpack.c.l.b16 %v3338
        %v3898 = vunpack.c.l.b16 %v3339
        %v3899 = vunpack.c.l.b16 %v3340
        %v3900 = vunpack.c.l.b16 %v3341
        %v3901 = vunpack.c.l.b16 %v3342
        %v3902 = vunpack.c.l.b16 %v3343
        %v3903 = vunpack.c.l.b16 %v3344
        %v3904 = vunpack.c.l.b16 %v3345
        %v3905 = vunpack.c.l.b16 %v3346
        %v3906 = vpack.c.b16 %v3875, %v3874
        %v3907 = vpack.c.b16 %v3877, %v3876
        %v3908 = vpack.c.b16 %v3879, %v3878
        %v3909 = vpack.c.b16 %v3881, %v3880
        %v3910 = vpack.c.b16 %v3883, %v3882
        %v3911 = vpack.c.b16 %v3885, %v3884
        %v3912 = vpack.c.b16 %v3887, %v3886
        %v3913 = vpack.c.b16 %v3889, %v3888
        %v3914 = vpack.c.b16 %v3891, %v3890
        %v3915 = vpack.c.b16 %v3893, %v3892
        %v3916 = vpack.c.b16 %v3895, %v3894
        %v3917 = vpack.c.b16 %v3897, %v3896
        %v3918 = vpack.c.b16 %v3899, %v3898
        %v3919 = vpack.c.b16 %v3901, %v3900
        %v3920 = vpack.c.b16 %v3903, %v3902
        %v3921 = vpack.c.b16 %v3905, %v3904
        %3938 = vmatprep.subr.bf16.mxu0 0
        %3939 = vmatpush1.bf16.msra.mxu0 %v3906
        %3940 = vmatprep.subr.bf16.mxu0 0
        %3941 = vmatpush1.bf16.msra.mxu0 %v3907
        %3942 = vmatprep.subr.bf16.mxu0 0
        %3943 = vmatpush1.bf16.msra.mxu0 %v3908
        %3944 = vmatprep.subr.bf16.mxu0 0
        %3945 = vmatpush1.bf16.msra.mxu0 %v3909
        %3946 = vmatprep.subr.bf16.mxu0 0
        %3947 = vmatpush1.bf16.msra.mxu0 %v3910
        %3948 = vmatprep.subr.bf16.mxu0 0
        %3949 = vmatpush1.bf16.msra.mxu0 %v3911
        %3950 = vmatprep.subr.bf16.mxu0 0
        %3951 = vmatpush1.bf16.msra.mxu0 %v3912
        %3952 = vmatprep.subr.bf16.mxu0 0
        %3953 = vmatpush1.bf16.msra.mxu0 %v3913
        %3954 = vmatprep.subr.bf16.mxu0 0
        %3955 = vmatpush1.bf16.msra.mxu0 %v3914
        %3956 = vmatprep.subr.bf16.mxu0 0
        %3957 = vmatpush1.bf16.msra.mxu0 %v3915
        %3958 = vmatprep.subr.bf16.mxu0 0
        %3959 = vmatpush1.bf16.msra.mxu0 %v3916
        %3960 = vmatprep.subr.bf16.mxu0 0
        %3961 = vmatpush1.bf16.msra.mxu0 %v3917
        %3962 = vmatprep.subr.bf16.mxu0 0
        %3963 = vmatpush1.bf16.msra.mxu0 %v3918
        %3964 = vmatprep.subr.bf16.mxu0 0
        %3965 = vmatpush1.bf16.msra.mxu0 %v3919
        %3966 = vmatprep.subr.bf16.mxu0 0
        %3967 = vmatpush1.bf16.msra.mxu0 %v3920
        %3968 = vmatprep.subr.bf16.mxu0 0
        %3969 = vmatpush1.bf16.msra.mxu0 %v3921
        %3970 = vmatprep.mubr.bf16.mxu0 %v3567
        %3971 = vmatmul.mubr.bf16.gmra.mrb[0].mxu0 %v3566
        %v3972 = vpop.f32.mrb[0].mxu0
        %v3973 = vadd.f32 %v3534, %v3972
        %v3974 = vpop.f32.mrb[0].mxu0
        %v3975 = vpop.f32.mrb[0].mxu0
        %v3976 = vpop.f32.mrb[0].mxu0
        %3977 = vdwg.mxu0
        %v4010 = vunpack.c.l.b16 %v3347
        %v4011 = vunpack.c.l.b16 %v3348
        %v4012 = vunpack.c.l.b16 %v3349
        %v4013 = vunpack.c.l.b16 %v3350
        %v4014 = vunpack.c.l.b16 %v3351
        %v4015 = vunpack.c.l.b16 %v3352
        %v4016 = vunpack.c.l.b16 %v3353
        %v4017 = vunpack.c.l.b16 %v3354
        %v4018 = vunpack.c.l.b16 %v3355
        %v4019 = vunpack.c.l.b16 %v3356
        %v4020 = vunpack.c.l.b16 %v3357
        %v4021 = vunpack.c.l.b16 %v3358
        %v4022 = vunpack.c.l.b16 %v3359
        %v4023 = vunpack.c.l.b16 %v3360
        %v4024 = vunpack.c.l.b16 %v3361
        %v4025 = vunpack.c.l.b16 %v3362
        %v4026 = vunpack.c.l.b16 %v3363
        %v4027 = vunpack.c.l.b16 %v3364
        %v4028 = vunpack.c.l.b16 %v3365
        %v4029 = vunpack.c.l.b16 %v3366
        %v4030 = vunpack.c.l.b16 %v3367
        %v4031 = vunpack.c.l.b16 %v3368
        %v4032 = vunpack.c.l.b16 %v3369
        %v4033 = vunpack.c.l.b16 %v3370
        %v4034 = vunpack.c.l.b16 %v3371
        %v4035 = vunpack.c.l.b16 %v3372
        %v4036 = vunpack.c.l.b16 %v3373
        %v4037 = vunpack.c.l.b16 %v3374
        %v4038 = vunpack.c.l.b16 %v3375
        %v4039 = vunpack.c.l.b16 %v3376
        %v4040 = vunpack.c.l.b16 %v3377
        %v4041 = vunpack.c.l.b16 %v3378
        %v4042 = vpack.c.b16 %v4011, %v4010
        %v4043 = vpack.c.b16 %v4013, %v4012
        %v4044 = vpack.c.b16 %v4015, %v4014
        %v4045 = vpack.c.b16 %v4017, %v4016
        %v4046 = vpack.c.b16 %v4019, %v4018
        %v4047 = vpack.c.b16 %v4021, %v4020
        %v4048 = vpack.c.b16 %v4023, %v4022
        %v4049 = vpack.c.b16 %v4025, %v4024
        %v4050 = vpack.c.b16 %v4027, %v4026
        %v4051 = vpack.c.b16 %v4029, %v4028
        %v4052 = vpack.c.b16 %v4031, %v4030
        %v4053 = vpack.c.b16 %v4033, %v4032
        %v4054 = vpack.c.b16 %v4035, %v4034
        %v4055 = vpack.c.b16 %v4037, %v4036
        %v4056 = vpack.c.b16 %v4039, %v4038
        %v4057 = vpack.c.b16 %v4041, %v4040
        %4074 = vmatprep.subr.bf16.mxu0 0
        %4075 = vmatpush1.bf16.msra.mxu0 %v4042
        %4076 = vmatprep.subr.bf16.mxu0 0
        %4077 = vmatpush1.bf16.msra.mxu0 %v4043
        %4078 = vmatprep.subr.bf16.mxu0 0
        %4079 = vmatpush1.bf16.msra.mxu0 %v4044
        %4080 = vmatprep.subr.bf16.mxu0 0
        %4081 = vmatpush1.bf16.msra.mxu0 %v4045
        %4082 = vmatprep.subr.bf16.mxu0 0
        %4083 = vmatpush1.bf16.msra.mxu0 %v4046
        %4084 = vmatprep.subr.bf16.mxu0 0
        %4085 = vmatpush1.bf16.msra.mxu0 %v4047
        %4086 = vmatprep.subr.bf16.mxu0 0
        %4087 = vmatpush1.bf16.msra.mxu0 %v4048
        %4088 = vmatprep.subr.bf16.mxu0 0
        %4089 = vmatpush1.bf16.msra.mxu0 %v4049
        %4090 = vmatprep.subr.bf16.mxu0 0
        %4091 = vmatpush1.bf16.msra.mxu0 %v4050
        %4092 = vmatprep.subr.bf16.mxu0 0
        %4093 = vmatpush1.bf16.msra.mxu0 %v4051
        %4094 = vmatprep.subr.bf16.mxu0 0
        %4095 = vmatpush1.bf16.msra.mxu0 %v4052
        %4096 = vmatprep.subr.bf16.mxu0 0
        %4097 = vmatpush1.bf16.msra.mxu0 %v4053
        %4098 = vmatprep.subr.bf16.mxu0 0
        %4099 = vmatpush1.bf16.msra.mxu0 %v4054
        %4100 = vmatprep.subr.bf16.mxu0 0
        %4101 = vmatpush1.bf16.msra.mxu0 %v4055
        %4102 = vmatprep.subr.bf16.mxu0 0
        %4103 = vmatpush1.bf16.msra.mxu0 %v4056
        %4104 = vmatprep.subr.bf16.mxu0 0
        %4105 = vmatpush1.bf16.msra.mxu0 %v4057
        %4106 = vmatprep.mubr.bf16.mxu0 %v3567
        %4107 = vmatmul.mubr.bf16.gmra.mrb[0].mxu0 %v3566
        %v4108 = vpop.f32.mrb[0].mxu0
        %v4109 = vadd.f32 %v3538, %v4108
        %v4110 = vpop.f32.mrb[0].mxu0
        %v4111 = vpop.f32.mrb[0].mxu0
        %v4112 = vpop.f32.mrb[0].mxu0
        %4113 = vdwg.mxu0
        %v4146 = vunpack.c.l.b16 %v3379
        %v4147 = vunpack.c.l.b16 %v3380
        %v4148 = vunpack.c.l.b16 %v3381
        %v4149 = vunpack.c.l.b16 %v3382
        %v4150 = vunpack.c.l.b16 %v3383
        %v4151 = vunpack.c.l.b16 %v3384
        %v4152 = vunpack.c.l.b16 %v3385
        %v4153 = vunpack.c.l.b16 %v3386
        %v4154 = vunpack.c.l.b16 %v3387
        %v4155 = vunpack.c.l.b16 %v3388
        %v4156 = vunpack.c.l.b16 %v3389
        %v4157 = vunpack.c.l.b16 %v3390
        %v4158 = vunpack.c.l.b16 %v3391
        %v4159 = vunpack.c.l.b16 %v3392
        %v4160 = vunpack.c.l.b16 %v3393
        %v4161 = vunpack.c.l.b16 %v3394
        %v4162 = vunpack.c.l.b16 %v3395
        %v4163 = vunpack.c.l.b16 %v3396
        %v4164 = vunpack.c.l.b16 %v3397
        %v4165 = vunpack.c.l.b16 %v3398
        %v4166 = vunpack.c.l.b16 %v3399
        %v4167 = vunpack.c.l.b16 %v3400
        %v4168 = vunpack.c.l.b16 %v3401
        %v4169 = vunpack.c.l.b16 %v3402
        %v4170 = vunpack.c.l.b16 %v3403
        %v4171 = vunpack.c.l.b16 %v3404
        %v4172 = vunpack.c.l.b16 %v3405
        %v4173 = vunpack.c.l.b16 %v3406
        %v4174 = vunpack.c.l.b16 %v3407
        %v4175 = vunpack.c.l.b16 %v3408
        %v4176 = vunpack.c.l.b16 %v3409
        %v4177 = vunpack.c.l.b16 %v3410
        %v4178 = vpack.c.b16 %v4147, %v4146
        %v4179 = vpack.c.b16 %v4149, %v4148
        %v4180 = vpack.c.b16 %v4151, %v4150
        %v4181 = vpack.c.b16 %v4153, %v4152
        %v4182 = vpack.c.b16 %v4155, %v4154
        %v4183 = vpack.c.b16 %v4157, %v4156
        %v4184 = vpack.c.b16 %v4159, %v4158
        %v4185 = vpack.c.b16 %v4161, %v4160
        %v4186 = vpack.c.b16 %v4163, %v4162
        %v4187 = vpack.c.b16 %v4165, %v4164
        %v4188 = vpack.c.b16 %v4167, %v4166
        %v4189 = vpack.c.b16 %v4169, %v4168
        %v4190 = vpack.c.b16 %v4171, %v4170
        %v4191 = vpack.c.b16 %v4173, %v4172
        %v4192 = vpack.c.b16 %v4175, %v4174
        %v4193 = vpack.c.b16 %v4177, %v4176
        %4210 = vmatprep.subr.bf16.mxu0 0
        %4211 = vmatpush1.bf16.msra.mxu0 %v4178
        %4212 = vmatprep.subr.bf16.mxu0 0
        %4213 = vmatpush1.bf16.msra.mxu0 %v4179
        %4214 = vmatprep.subr.bf16.mxu0 0
        %4215 = vmatpush1.bf16.msra.mxu0 %v4180
        %4216 = vmatprep.subr.bf16.mxu0 0
        %4217 = vmatpush1.bf16.msra.mxu0 %v4181
        %4218 = vmatprep.subr.bf16.mxu0 0
        %4219 = vmatpush1.bf16.msra.mxu0 %v4182
        %4220 = vmatprep.subr.bf16.mxu0 0
        %4221 = vmatpush1.bf16.msra.mxu0 %v4183
        %4222 = vmatprep.subr.bf16.mxu0 0
        %4223 = vmatpush1.bf16.msra.mxu0 %v4184
        %4224 = vmatprep.subr.bf16.mxu0 0
        %4225 = vmatpush1.bf16.msra.mxu0 %v4185
        %4226 = vmatprep.subr.bf16.mxu0 0
        %4227 = vmatpush1.bf16.msra.mxu0 %v4186
        %4228 = vmatprep.subr.bf16.mxu0 0
        %4229 = vmatpush1.bf16.msra.mxu0 %v4187
        %4230 = vmatprep.subr.bf16.mxu0 0
        %4231 = vmatpush1.bf16.msra.mxu0 %v4188
        %4232 = vmatprep.subr.bf16.mxu0 0
        %4233 = vmatpush1.bf16.msra.mxu0 %v4189
        %4234 = vmatprep.subr.bf16.mxu0 0
        %4235 = vmatpush1.bf16.msra.mxu0 %v4190
        %4236 = vmatprep.subr.bf16.mxu0 0
        %4237 = vmatpush1.bf16.msra.mxu0 %v4191
        %4238 = vmatprep.subr.bf16.mxu0 0
        %4239 = vmatpush1.bf16.msra.mxu0 %v4192
        %4240 = vmatprep.subr.bf16.mxu0 0
        %4241 = vmatpush1.bf16.msra.mxu0 %v4193
        %4242 = vmatprep.mubr.bf16.mxu0 %v3567
        %4243 = vmatmul.mubr.bf16.gmra.mrb[0].mxu0 %v3566
        %v4244 = vpop.f32.mrb[0].mxu0
        %v4245 = vadd.f32 %v3542, %v4244
        %v4246 = vpop.f32.mrb[0].mxu0
        %v4247 = vpop.f32.mrb[0].mxu0
        %v4248 = vpop.f32.mrb[0].mxu0
        %4249 = vdwg.mxu0
        %v4282 = vunpack.c.l.b16 %v3411
        %v4283 = vunpack.c.l.b16 %v3412
        %v4284 = vunpack.c.l.b16 %v3413
        %v4285 = vunpack.c.l.b16 %v3414
        %v4286 = vunpack.c.l.b16 %v3415
        %v4287 = vunpack.c.l.b16 %v3416
        %v4288 = vunpack.c.l.b16 %v3417
        %v4289 = vunpack.c.l.b16 %v3418
        %v4290 = vunpack.c.l.b16 %v3419
        %v4291 = vunpack.c.l.b16 %v3420
        %v4292 = vunpack.c.l.b16 %v3421
        %v4293 = vunpack.c.l.b16 %v3422
        %v4294 = vunpack.c.l.b16 %v3423
        %v4295 = vunpack.c.l.b16 %v3424
        %v4296 = vunpack.c.l.b16 %v3425
        %v4297 = vunpack.c.l.b16 %v3426
        %v4298 = vunpack.c.l.b16 %v3427
        %v4299 = vunpack.c.l.b16 %v3428
        %v4300 = vunpack.c.l.b16 %v3429
        %v4301 = vunpack.c.l.b16 %v3430
        %v4302 = vunpack.c.l.b16 %v3431
        %v4303 = vunpack.c.l.b16 %v3432
        %v4304 = vunpack.c.l.b16 %v3433
        %v4305 = vunpack.c.l.b16 %v3434
        %v4306 = vunpack.c.l.b16 %v3435
        %v4307 = vunpack.c.l.b16 %v3436
        %v4308 = vunpack.c.l.b16 %v3437
        %v4309 = vunpack.c.l.b16 %v3438
        %v4310 = vunpack.c.l.b16 %v3439
        %v4311 = vunpack.c.l.b16 %v3440
        %v4312 = vunpack.c.l.b16 %v3441
        %v4313 = vunpack.c.l.b16 %v3442
        %v4314 = vpack.c.b16 %v4283, %v4282
        %v4315 = vpack.c.b16 %v4285, %v4284
        %v4316 = vpack.c.b16 %v4287, %v4286
        %v4317 = vpack.c.b16 %v4289, %v4288
        %v4318 = vpack.c.b16 %v4291, %v4290
        %v4319 = vpack.c.b16 %v4293, %v4292
        %v4320 = vpack.c.b16 %v4295, %v4294
        %v4321 = vpack.c.b16 %v4297, %v4296
        %v4322 = vpack.c.b16 %v4299, %v4298
        %v4323 = vpack.c.b16 %v4301, %v4300
        %v4324 = vpack.c.b16 %v4303, %v4302
        %v4325 = vpack.c.b16 %v4305, %v4304
        %v4326 = vpack.c.b16 %v4307, %v4306
        %v4327 = vpack.c.b16 %v4309, %v4308
        %v4328 = vpack.c.b16 %v4311, %v4310
        %v4329 = vpack.c.b16 %v4313, %v4312
        %4346 = vmatprep.subr.bf16.mxu0 0
        %4347 = vmatpush1.bf16.msra.mxu0 %v4314
        %4348 = vmatprep.subr.bf16.mxu0 0
        %4349 = vmatpush1.bf16.msra.mxu0 %v4315
        %4350 = vmatprep.subr.bf16.mxu0 0
        %4351 = vmatpush1.bf16.msra.mxu0 %v4316
        %4352 = vmatprep.subr.bf16.mxu0 0
        %4353 = vmatpush1.bf16.msra.mxu0 %v4317
        %4354 = vmatprep.subr.bf16.mxu0 0
        %4355 = vmatpush1.bf16.msra.mxu0 %v4318
        %4356 = vmatprep.subr.bf16.mxu0 0
        %4357 = vmatpush1.bf16.msra.mxu0 %v4319
        %4358 = vmatprep.subr.bf16.mxu0 0
        %4359 = vmatpush1.bf16.msra.mxu0 %v4320
        %4360 = vmatprep.subr.bf16.mxu0 0
        %4361 = vmatpush1.bf16.msra.mxu0 %v4321
        %4362 = vmatprep.subr.bf16.mxu0 0
        %4363 = vmatpush1.bf16.msra.mxu0 %v4322
        %4364 = vmatprep.subr.bf16.mxu0 0
        %4365 = vmatpush1.bf16.msra.mxu0 %v4323
        %4366 = vmatprep.subr.bf16.mxu0 0
        %4367 = vmatpush1.bf16.msra.mxu0 %v4324
        %4368 = vmatprep.subr.bf16.mxu0 0
        %4369 = vmatpush1.bf16.msra.mxu0 %v4325
        %4370 = vmatprep.subr.bf16.mxu0 0
        %4371 = vmatpush1.bf16.msra.mxu0 %v4326
        %4372 = vmatprep.subr.bf16.mxu0 0
        %4373 = vmatpush1.bf16.msra.mxu0 %v4327
        %4374 = vmatprep.subr.bf16.mxu0 0
        %4375 = vmatpush1.bf16.msra.mxu0 %v4328
        %4376 = vmatprep.subr.bf16.mxu0 0
        %4377 = vmatpush1.bf16.msra.mxu0 %v4329
        %4378 = vmatprep.mubr.bf16.mxu0 %v3567
        %4379 = vmatmul.mubr.bf16.gmra.mrb[0].mxu0 %v3566
        %v4380 = vpop.f32.mrb[0].mxu0
        %v4381 = vadd.f32 %v3546, %v4380
        %v4382 = vpop.f32.mrb[0].mxu0
        %v4383 = vpop.f32.mrb[0].mxu0
        %v4384 = vpop.f32.mrb[0].mxu0
        %4385 = vdwg.mxu0
        %v4418 = vunpack.c.l.b16 %v3443
        %v4419 = vunpack.c.l.b16 %v3444
        %v4420 = vunpack.c.l.b16 %v3445
        %v4421 = vunpack.c.l.b16 %v3446
        %v4422 = vunpack.c.l.b16 %v3447
        %v4423 = vunpack.c.l.b16 %v3448
        %v4424 = vunpack.c.l.b16 %v3449
        %v4425 = vunpack.c.l.b16 %v3450
        %v4426 = vunpack.c.l.b16 %v3451
        %v4427 = vunpack.c.l.b16 %v3452
        %v4428 = vunpack.c.l.b16 %v3453
        %v4429 = vunpack.c.l.b16 %v3454
        %v4430 = vunpack.c.l.b16 %v3455
        %v4431 = vunpack.c.l.b16 %v3456
        %v4432 = vunpack.c.l.b16 %v3457
        %v4433 = vunpack.c.l.b16 %v3458
        %v4434 = vunpack.c.l.b16 %v3459
        %v4435 = vunpack.c.l.b16 %v3460
        %v4436 = vunpack.c.l.b16 %v3461
        %v4437 = vunpack.c.l.b16 %v3462
        %v4438 = vunpack.c.l.b16 %v3463
        %v4439 = vunpack.c.l.b16 %v3464
        %v4440 = vunpack.c.l.b16 %v3465
        %v4441 = vunpack.c.l.b16 %v3466
        %v4442 = vunpack.c.l.b16 %v3467
        %v4443 = vunpack.c.l.b16 %v3468
        %v4444 = vunpack.c.l.b16 %v3469
        %v4445 = vunpack.c.l.b16 %v3470
        %v4446 = vunpack.c.l.b16 %v3471
        %v4447 = vunpack.c.l.b16 %v3472
        %v4448 = vunpack.c.l.b16 %v3473
        %v4449 = vunpack.c.l.b16 %v3474
        %v4450 = vpack.c.b16 %v4419, %v4418
        %v4451 = vpack.c.b16 %v4421, %v4420
        %v4452 = vpack.c.b16 %v4423, %v4422
        %v4453 = vpack.c.b16 %v4425, %v4424
        %v4454 = vpack.c.b16 %v4427, %v4426
        %v4455 = vpack.c.b16 %v4429, %v4428
        %v4456 = vpack.c.b16 %v4431, %v4430
        %v4457 = vpack.c.b16 %v4433, %v4432
        %v4458 = vpack.c.b16 %v4435, %v4434
        %v4459 = vpack.c.b16 %v4437, %v4436
        %v4460 = vpack.c.b16 %v4439, %v4438
        %v4461 = vpack.c.b16 %v4441, %v4440
        %v4462 = vpack.c.b16 %v4443, %v4442
        %v4463 = vpack.c.b16 %v4445, %v4444
        %v4464 = vpack.c.b16 %v4447, %v4446
        %v4465 = vpack.c.b16 %v4449, %v4448
        %4482 = vmatprep.subr.bf16.mxu0 0
        %4483 = vmatpush1.bf16.msra.mxu0 %v4450
        %4484 = vmatprep.subr.bf16.mxu0 0
        %4485 = vmatpush1.bf16.msra.mxu0 %v4451
        %4486 = vmatprep.subr.bf16.mxu0 0
        %4487 = vmatpush1.bf16.msra.mxu0 %v4452
        %4488 = vmatprep.subr.bf16.mxu0 0
        %4489 = vmatpush1.bf16.msra.mxu0 %v4453
        %4490 = vmatprep.subr.bf16.mxu0 0
        %4491 = vmatpush1.bf16.msra.mxu0 %v4454
        %4492 = vmatprep.subr.bf16.mxu0 0
        %4493 = vmatpush1.bf16.msra.mxu0 %v4455
        %4494 = vmatprep.subr.bf16.mxu0 0
        %4495 = vmatpush1.bf16.msra.mxu0 %v4456
        %4496 = vmatprep.subr.bf16.mxu0 0
        %4497 = vmatpush1.bf16.msra.mxu0 %v4457
        %4498 = vmatprep.subr.bf16.mxu0 0
        %4499 = vmatpush1.bf16.msra.mxu0 %v4458
        %4500 = vmatprep.subr.bf16.mxu0 0
        %4501 = vmatpush1.bf16.msra.mxu0 %v4459
        %4502 = vmatprep.subr.bf16.mxu0 0
        %4503 = vmatpush1.bf16.msra.mxu0 %v4460
        %4504 = vmatprep.subr.bf16.mxu0 0
        %4505 = vmatpush1.bf16.msra.mxu0 %v4461
        %4506 = vmatprep.subr.bf16.mxu0 0
        %4507 = vmatpush1.bf16.msra.mxu0 %v4462
        %4508 = vmatprep.subr.bf16.mxu0 0
        %4509 = vmatpush1.bf16.msra.mxu0 %v4463
        %4510 = vmatprep.subr.bf16.mxu0 0
        %4511 = vmatpush1.bf16.msra.mxu0 %v4464
        %4512 = vmatprep.subr.bf16.mxu0 0
        %4513 = vmatpush1.bf16.msra.mxu0 %v4465
        %4514 = vmatprep.mubr.bf16.mxu0 %v3567
        %4515 = vmatmul.mubr.bf16.gmra.mrb[0].mxu0 %v3566
        %v4516 = vpop.f32.mrb[0].mxu0
        %v4517 = vadd.f32 %v3550, %v4516
        %v4518 = vpop.f32.mrb[0].mxu0
        %v4519 = vpop.f32.mrb[0].mxu0
        %v4520 = vpop.f32.mrb[0].mxu0
        %4521 = vdwg.mxu0
        %v4554 = vunpack.c.l.b16 %v3475
        %v4555 = vunpack.c.l.b16 %v3476
        %v4556 = vunpack.c.l.b16 %v3477
        %v4557 = vunpack.c.l.b16 %v3478
        %v4558 = vunpack.c.l.b16 %v3479
        %v4559 = vunpack.c.l.b16 %v3480
        %v4560 = vunpack.c.l.b16 %v3481
        %v4561 = vunpack.c.l.b16 %v3482
        %v4562 = vunpack.c.l.b16 %v3483
        %v4563 = vunpack.c.l.b16 %v3484
        %v4564 = vunpack.c.l.b16 %v3485
        %v4565 = vunpack.c.l.b16 %v3486
        %v4566 = vunpack.c.l.b16 %v3487
        %v4567 = vunpack.c.l.b16 %v3488
        %v4568 = vunpack.c.l.b16 %v3489
        %v4569 = vunpack.c.l.b16 %v3490
        %v4570 = vunpack.c.l.b16 %v3491
        %v4571 = vunpack.c.l.b16 %v3492
        %v4572 = vunpack.c.l.b16 %v3493
        %v4573 = vunpack.c.l.b16 %v3494
        %v4574 = vunpack.c.l.b16 %v3495
        %v4575 = vunpack.c.l.b16 %v3496
        %v4576 = vunpack.c.l.b16 %v3497
        %v4577 = vunpack.c.l.b16 %v3498
        %v4578 = vunpack.c.l.b16 %v3499
        %v4579 = vunpack.c.l.b16 %v3500
        %v4580 = vunpack.c.l.b16 %v3501
        %v4581 = vunpack.c.l.b16 %v3502
        %v4582 = vunpack.c.l.b16 %v3503
        %v4583 = vunpack.c.l.b16 %v3504
        %v4584 = vunpack.c.l.b16 %v3505
        %v4585 = vunpack.c.l.b16 %v3506
        %v4586 = vpack.c.b16 %v4555, %v4554
        %v4587 = vpack.c.b16 %v4557, %v4556
        %v4588 = vpack.c.b16 %v4559, %v4558
        %v4589 = vpack.c.b16 %v4561, %v4560
        %v4590 = vpack.c.b16 %v4563, %v4562
        %v4591 = vpack.c.b16 %v4565, %v4564
        %v4592 = vpack.c.b16 %v4567, %v4566
        %v4593 = vpack.c.b16 %v4569, %v4568
        %v4594 = vpack.c.b16 %v4571, %v4570
        %v4595 = vpack.c.b16 %v4573, %v4572
        %v4596 = vpack.c.b16 %v4575, %v4574
        %v4597 = vpack.c.b16 %v4577, %v4576
        %v4598 = vpack.c.b16 %v4579, %v4578
        %v4599 = vpack.c.b16 %v4581, %v4580
        %v4600 = vpack.c.b16 %v4583, %v4582
        %v4601 = vpack.c.b16 %v4585, %v4584
        %4618 = vmatprep.subr.bf16.mxu0 0
        %4619 = vmatpush1.bf16.msra.mxu0 %v4586
        %4620 = vmatprep.subr.bf16.mxu0 0
        %4621 = vmatpush1.bf16.msra.mxu0 %v4587
        %4622 = vmatprep.subr.bf16.mxu0 0
        %4623 = vmatpush1.bf16.msra.mxu0 %v4588
        %4624 = vmatprep.subr.bf16.mxu0 0
        %4625 = vmatpush1.bf16.msra.mxu0 %v4589
        %4626 = vmatprep.subr.bf16.mxu0 0
        %4627 = vmatpush1.bf16.msra.mxu0 %v4590
        %4628 = vmatprep.subr.bf16.mxu0 0
        %4629 = vmatpush1.bf16.msra.mxu0 %v4591
        %4630 = vmatprep.subr.bf16.mxu0 0
        %4631 = vmatpush1.bf16.msra.mxu0 %v4592
        %4632 = vmatprep.subr.bf16.mxu0 0
        %4633 = vmatpush1.bf16.msra.mxu0 %v4593
        %4634 = vmatprep.subr.bf16.mxu0 0
        %4635 = vmatpush1.bf16.msra.mxu0 %v4594
        %4636 = vmatprep.subr.bf16.mxu0 0
        %4637 = vmatpush1.bf16.msra.mxu0 %v4595
        %4638 = vmatprep.subr.bf16.mxu0 0
        %4639 = vmatpush1.bf16.msra.mxu0 %v4596
        %4640 = vmatprep.subr.bf16.mxu0 0
        %4641 = vmatpush1.bf16.msra.mxu0 %v4597
        %4642 = vmatprep.subr.bf16.mxu0 0
        %4643 = vmatpush1.bf16.msra.mxu0 %v4598
        %4644 = vmatprep.subr.bf16.mxu0 0
        %4645 = vmatpush1.bf16.msra.mxu0 %v4599
        %4646 = vmatprep.subr.bf16.mxu0 0
        %4647 = vmatpush1.bf16.msra.mxu0 %v4600
        %4648 = vmatprep.subr.bf16.mxu0 0
        %4649 = vmatpush1.bf16.msra.mxu0 %v4601
        %4650 = vmatprep.mubr.bf16.mxu0 %v3567
        %4651 = vmatmul.mubr.bf16.gmra.mrb[0].mxu0 %v3566
        %v4652 = vpop.f32.mrb[0].mxu0
        %v4653 = vadd.f32 %v3554, %v4652
        %v4654 = vpop.f32.mrb[0].mxu0
        %v4655 = vpop.f32.mrb[0].mxu0
        %v4656 = vpop.f32.mrb[0].mxu0
        %4657 = vdwg.mxu0
        %v4658 = vpack.c.bf16 %v1834, %v1834
        %v4659 = vpack.c.bf16 %v1835, %v1835
        %v4660 = vpack.c.bf16 %v1836, %v1836
        %v4661 = vpack.c.bf16 %v1837, %v1837
        %v4662 = vpack.c.bf16 %v1838, %v1838
        %v4663 = vpack.c.bf16 %v1839, %v1839
        %v4664 = vpack.c.bf16 %v1840, %v1840
        %v4665 = vpack.c.bf16 %v1841, %v1841
        %v4666 = vpack.c.bf16 %v2293, %v2293
        %v4667 = vpack.c.bf16 %v2429, %v2429
        %v4668 = vpack.c.bf16 %v2565, %v2565
        %v4669 = vpack.c.bf16 %v2701, %v2701
        %v4670 = vpack.c.bf16 %v2837, %v2837
        %v4671 = vpack.c.bf16 %v2973, %v2973
        %v4672 = vpack.c.bf16 %v3109, %v3109
        %v4673 = vpack.c.bf16 %v3245, %v3245
        %vm4674 = vcmask 261120
        %v4676 = vsel %vm4674, %v4658, 0
        %v4679 = vsel %vm4674, %v4666, 0
        %4681 = vmatprep.subr.bf16.mxu0 0
        %4682 = vmatpush1.bf16.xpose.msra.mxu0 %v4679
        %4683 = vmatprep.subr.bf16.mxu0 0
        %4684 = vmatpush1.bf16.xpose.msra.mxu0 0
        %4685 = vmatprep.subr.bf16.mxu0 0
        %4686 = vmatpush1.bf16.xpose.msra.mxu0 0
        %4687 = vmatprep.subr.bf16.mxu0 0
        %4688 = vmatpush1.bf16.xpose.msra.mxu0 0
        %4689 = vmatprep.subr.bf16.mxu0 0
        %4690 = vmatpush1.bf16.xpose.msra.mxu0 0
        %4691 = vmatprep.subr.bf16.mxu0 0
        %4692 = vmatpush1.bf16.xpose.msra.mxu0 0
        %4693 = vmatprep.subr.bf16.mxu0 0
        %4694 = vmatpush1.bf16.xpose.msra.mxu0 0
        %4695 = vmatprep.subr.bf16.mxu0 0
        %4696 = vmatpush1.bf16.xpose.msra.mxu0 0
        %4697 = vmatprep.subr.bf16.mxu0 0
        %4698 = vmatpush1.bf16.xpose.msra.mxu0 0
        %4699 = vmatprep.subr.bf16.mxu0 0
        %4700 = vmatpush1.bf16.xpose.msra.mxu0 0
        %4701 = vmatprep.subr.bf16.mxu0 0
        %4702 = vmatpush1.bf16.xpose.msra.mxu0 0
        %4703 = vmatprep.subr.bf16.mxu0 0
        %4704 = vmatpush1.bf16.xpose.msra.mxu0 0
        %4705 = vmatprep.subr.bf16.mxu0 0
        %4706 = vmatpush1.bf16.xpose.msra.mxu0 0
        %4707 = vmatprep.subr.bf16.mxu0 0
        %4708 = vmatpush1.bf16.xpose.msra.mxu0 0
        %4709 = vmatprep.subr.bf16.mxu0 0
        %4710 = vmatpush1.bf16.xpose.msra.mxu0 0
        %4711 = vmatprep.subr.bf16.mxu0 0
        %4712 = vmatpush1.bf16.xpose.msra.mxu0 0
        %4713 = vmatprep.mubr.bf16.mxu0 0
        %4714 = vmatmul.mubr.bf16.gmra.mrb[0].mxu0 %v4676
        %v4715 = vpop.f32.mrb[0].mxu0
        %v4716 = vadd.f32 0.0, %v4715
        %v4717 = vpop.f32.mrb[0].mxu0
        %v4718 = vpop.f32.mrb[0].mxu0
        %v4719 = vpop.f32.mrb[0].mxu0
        %4720 = vdwg.mxu0
        %v4722 = vsel %vm4674, %v4659, 0
        %v4725 = vsel %vm4674, %v4667, 0
        %4727 = vmatprep.subr.bf16.mxu0 0
        %4728 = vmatpush1.bf16.xpose.msra.mxu0 %v4725
        %4729 = vmatprep.subr.bf16.mxu0 0
        %4730 = vmatpush1.bf16.xpose.msra.mxu0 0
        %4731 = vmatprep.subr.bf16.mxu0 0
        %4732 = vmatpush1.bf16.xpose.msra.mxu0 0
        %4733 = vmatprep.subr.bf16.mxu0 0
        %4734 = vmatpush1.bf16.xpose.msra.mxu0 0
        %4735 = vmatprep.subr.bf16.mxu0 0
        %4736 = vmatpush1.bf16.xpose.msra.mxu0 0
        %4737 = vmatprep.subr.bf16.mxu0 0
        %4738 = vmatpush1.bf16.xpose.msra.mxu0 0
        %4739 = vmatprep.subr.bf16.mxu0 0
        %4740 = vmatpush1.bf16.xpose.msra.mxu0 0
        %4741 = vmatprep.subr.bf16.mxu0 0
        %4742 = vmatpush1.bf16.xpose.msra.mxu0 0
        %4743 = vmatprep.subr.bf16.mxu0 0
        %4744 = vmatpush1.bf16.xpose.msra.mxu0 0
        %4745 = vmatprep.subr.bf16.mxu0 0
        %4746 = vmatpush1.bf16.xpose.msra.mxu0 0
        %4747 = vmatprep.subr.bf16.mxu0 0
        %4748 = vmatpush1.bf16.xpose.msra.mxu0 0
        %4749 = vmatprep.subr.bf16.mxu0 0
        %4750 = vmatpush1.bf16.xpose.msra.mxu0 0
        %4751 = vmatprep.subr.bf16.mxu0 0
        %4752 = vmatpush1.bf16.xpose.msra.mxu0 0
        %4753 = vmatprep.subr.bf16.mxu0 0
        %4754 = vmatpush1.bf16.xpose.msra.mxu0 0
        %4755 = vmatprep.subr.bf16.mxu0 0
        %4756 = vmatpush1.bf16.xpose.msra.mxu0 0
        %4757 = vmatprep.subr.bf16.mxu0 0
        %4758 = vmatpush1.bf16.xpose.msra.mxu0 0
        %4759 = vmatprep.mubr.bf16.mxu0 0
        %4760 = vmatmul.mubr.bf16.gmra.mrb[0].mxu0 %v4722
        %v4761 = vpop.f32.mrb[0].mxu0
        %v4762 = vadd.f32 0.0, %v4761
        %v4763 = vpop.f32.mrb[0].mxu0
        %v4764 = vpop.f32.mrb[0].mxu0
        %v4765 = vpop.f32.mrb[0].mxu0
        %4766 = vdwg.mxu0
        %v4768 = vsel %vm4674, %v4660, 0
        %v4771 = vsel %vm4674, %v4668, 0
        %4773 = vmatprep.subr.bf16.mxu0 0
        %4774 = vmatpush1.bf16.xpose.msra.mxu0 %v4771
        %4775 = vmatprep.subr.bf16.mxu0 0
        %4776 = vmatpush1.bf16.xpose.msra.mxu0 0
        %4777 = vmatprep.subr.bf16.mxu0 0
        %4778 = vmatpush1.bf16.xpose.msra.mxu0 0
        %4779 = vmatprep.subr.bf16.mxu0 0
        %4780 = vmatpush1.bf16.xpose.msra.mxu0 0
        %4781 = vmatprep.subr.bf16.mxu0 0
        %4782 = vmatpush1.bf16.xpose.msra.mxu0 0
        %4783 = vmatprep.subr.bf16.mxu0 0
        %4784 = vmatpush1.bf16.xpose.msra.mxu0 0
        %4785 = vmatprep.subr.bf16.mxu0 0
        %4786 = vmatpush1.bf16.xpose.msra.mxu0 0
        %4787 = vmatprep.subr.bf16.mxu0 0
        %4788 = vmatpush1.bf16.xpose.msra.mxu0 0
        %4789 = vmatprep.subr.bf16.mxu0 0
        %4790 = vmatpush1.bf16.xpose.msra.mxu0 0
        %4791 = vmatprep.subr.bf16.mxu0 0
        %4792 = vmatpush1.bf16.xpose.msra.mxu0 0
        %4793 = vmatprep.subr.bf16.mxu0 0
        %4794 = vmatpush1.bf16.xpose.msra.mxu0 0
        %4795 = vmatprep.subr.bf16.mxu0 0
        %4796 = vmatpush1.bf16.xpose.msra.mxu0 0
        %4797 = vmatprep.subr.bf16.mxu0 0
        %4798 = vmatpush1.bf16.xpose.msra.mxu0 0
        %4799 = vmatprep.subr.bf16.mxu0 0
        %4800 = vmatpush1.bf16.xpose.msra.mxu0 0
        %4801 = vmatprep.subr.bf16.mxu0 0
        %4802 = vmatpush1.bf16.xpose.msra.mxu0 0
        %4803 = vmatprep.subr.bf16.mxu0 0
        %4804 = vmatpush1.bf16.xpose.msra.mxu0 0
        %4805 = vmatprep.mubr.bf16.mxu0 0
        %4806 = vmatmul.mubr.bf16.gmra.mrb[0].mxu0 %v4768
        %v4807 = vpop.f32.mrb[0].mxu0
        %v4808 = vadd.f32 0.0, %v4807
        %v4809 = vpop.f32.mrb[0].mxu0
        %v4810 = vpop.f32.mrb[0].mxu0
        %v4811 = vpop.f32.mrb[0].mxu0
        %4812 = vdwg.mxu0
        %v4814 = vsel %vm4674, %v4661, 0
        %v4817 = vsel %vm4674, %v4669, 0
        %4819 = vmatprep.subr.bf16.mxu0 0
        %4820 = vmatpush1.bf16.xpose.msra.mxu0 %v4817
        %4821 = vmatprep.subr.bf16.mxu0 0
        %4822 = vmatpush1.bf16.xpose.msra.mxu0 0
        %4823 = vmatprep.subr.bf16.mxu0 0
        %4824 = vmatpush1.bf16.xpose.msra.mxu0 0
        %4825 = vmatprep.subr.bf16.mxu0 0
        %4826 = vmatpush1.bf16.xpose.msra.mxu0 0
        %4827 = vmatprep.subr.bf16.mxu0 0
        %4828 = vmatpush1.bf16.xpose.msra.mxu0 0
        %4829 = vmatprep.subr.bf16.mxu0 0
        %4830 = vmatpush1.bf16.xpose.msra.mxu0 0
        %4831 = vmatprep.subr.bf16.mxu0 0
        %4832 = vmatpush1.bf16.xpose.msra.mxu0 0
        %4833 = vmatprep.subr.bf16.mxu0 0
        %4834 = vmatpush1.bf16.xpose.msra.mxu0 0
        %4835 = vmatprep.subr.bf16.mxu0 0
        %4836 = vmatpush1.bf16.xpose.msra.mxu0 0
        %4837 = vmatprep.subr.bf16.mxu0 0
        %4838 = vmatpush1.bf16.xpose.msra.mxu0 0
        %4839 = vmatprep.subr.bf16.mxu0 0
        %4840 = vmatpush1.bf16.xpose.msra.mxu0 0
        %4841 = vmatprep.subr.bf16.mxu0 0
        %4842 = vmatpush1.bf16.xpose.msra.mxu0 0
        %4843 = vmatprep.subr.bf16.mxu0 0
        %4844 = vmatpush1.bf16.xpose.msra.mxu0 0
        %4845 = vmatprep.subr.bf16.mxu0 0
        %4846 = vmatpush1.bf16.xpose.msra.mxu0 0
        %4847 = vmatprep.subr.bf16.mxu0 0
        %4848 = vmatpush1.bf16.xpose.msra.mxu0 0
        %4849 = vmatprep.subr.bf16.mxu0 0
        %4850 = vmatpush1.bf16.xpose.msra.mxu0 0
        %4851 = vmatprep.mubr.bf16.mxu0 0
        %4852 = vmatmul.mubr.bf16.gmra.mrb[0].mxu0 %v4814
        %v4853 = vpop.f32.mrb[0].mxu0
        %v4854 = vadd.f32 0.0, %v4853
        %v4855 = vpop.f32.mrb[0].mxu0
        %v4856 = vpop.f32.mrb[0].mxu0
        %v4857 = vpop.f32.mrb[0].mxu0
        %4858 = vdwg.mxu0
        %v4860 = vsel %vm4674, %v4662, 0
        %v4863 = vsel %vm4674, %v4670, 0
        %4865 = vmatprep.subr.bf16.mxu0 0
        %4866 = vmatpush1.bf16.xpose.msra.mxu0 %v4863
        %4867 = vmatprep.subr.bf16.mxu0 0
        %4868 = vmatpush1.bf16.xpose.msra.mxu0 0
        %4869 = vmatprep.subr.bf16.mxu0 0
        %4870 = vmatpush1.bf16.xpose.msra.mxu0 0
        %4871 = vmatprep.subr.bf16.mxu0 0
        %4872 = vmatpush1.bf16.xpose.msra.mxu0 0
        %4873 = vmatprep.subr.bf16.mxu0 0
        %4874 = vmatpush1.bf16.xpose.msra.mxu0 0
        %4875 = vmatprep.subr.bf16.mxu0 0
        %4876 = vmatpush1.bf16.xpose.msra.mxu0 0
        %4877 = vmatprep.subr.bf16.mxu0 0
        %4878 = vmatpush1.bf16.xpose.msra.mxu0 0
        %4879 = vmatprep.subr.bf16.mxu0 0
        %4880 = vmatpush1.bf16.xpose.msra.mxu0 0
        %4881 = vmatprep.subr.bf16.mxu0 0
        %4882 = vmatpush1.bf16.xpose.msra.mxu0 0
        %4883 = vmatprep.subr.bf16.mxu0 0
        %4884 = vmatpush1.bf16.xpose.msra.mxu0 0
        %4885 = vmatprep.subr.bf16.mxu0 0
        %4886 = vmatpush1.bf16.xpose.msra.mxu0 0
        %4887 = vmatprep.subr.bf16.mxu0 0
        %4888 = vmatpush1.bf16.xpose.msra.mxu0 0
        %4889 = vmatprep.subr.bf16.mxu0 0
        %4890 = vmatpush1.bf16.xpose.msra.mxu0 0
        %4891 = vmatprep.subr.bf16.mxu0 0
        %4892 = vmatpush1.bf16.xpose.msra.mxu0 0
        %4893 = vmatprep.subr.bf16.mxu0 0
        %4894 = vmatpush1.bf16.xpose.msra.mxu0 0
        %4895 = vmatprep.subr.bf16.mxu0 0
        %4896 = vmatpush1.bf16.xpose.msra.mxu0 0
        %4897 = vmatprep.mubr.bf16.mxu0 0
        %4898 = vmatmul.mubr.bf16.gmra.mrb[0].mxu0 %v4860
        %v4899 = vpop.f32.mrb[0].mxu0
        %v4900 = vadd.f32 0.0, %v4899
        %v4901 = vpop.f32.mrb[0].mxu0
        %v4902 = vpop.f32.mrb[0].mxu0
        %v4903 = vpop.f32.mrb[0].mxu0
        %4904 = vdwg.mxu0
        %v4906 = vsel %vm4674, %v4663, 0
        %v4909 = vsel %vm4674, %v4671, 0
        %4911 = vmatprep.subr.bf16.mxu0 0
        %4912 = vmatpush1.bf16.xpose.msra.mxu0 %v4909
        %4913 = vmatprep.subr.bf16.mxu0 0
        %4914 = vmatpush1.bf16.xpose.msra.mxu0 0
        %4915 = vmatprep.subr.bf16.mxu0 0
        %4916 = vmatpush1.bf16.xpose.msra.mxu0 0
        %4917 = vmatprep.subr.bf16.mxu0 0
        %4918 = vmatpush1.bf16.xpose.msra.mxu0 0
        %4919 = vmatprep.subr.bf16.mxu0 0
        %4920 = vmatpush1.bf16.xpose.msra.mxu0 0
        %4921 = vmatprep.subr.bf16.mxu0 0
        %4922 = vmatpush1.bf16.xpose.msra.mxu0 0
        %4923 = vmatprep.subr.bf16.mxu0 0
        %4924 = vmatpush1.bf16.xpose.msra.mxu0 0
        %4925 = vmatprep.subr.bf16.mxu0 0
        %4926 = vmatpush1.bf16.xpose.msra.mxu0 0
        %4927 = vmatprep.subr.bf16.mxu0 0
        %4928 = vmatpush1.bf16.xpose.msra.mxu0 0
        %4929 = vmatprep.subr.bf16.mxu0 0
        %4930 = vmatpush1.bf16.xpose.msra.mxu0 0
        %4931 = vmatprep.subr.bf16.mxu0 0
        %4932 = vmatpush1.bf16.xpose.msra.mxu0 0
        %4933 = vmatprep.subr.bf16.mxu0 0
        %4934 = vmatpush1.bf16.xpose.msra.mxu0 0
        %4935 = vmatprep.subr.bf16.mxu0 0
        %4936 = vmatpush1.bf16.xpose.msra.mxu0 0
        %4937 = vmatprep.subr.bf16.mxu0 0
        %4938 = vmatpush1.bf16.xpose.msra.mxu0 0
        %4939 = vmatprep.subr.bf16.mxu0 0
        %4940 = vmatpush1.bf16.xpose.msra.mxu0 0
        %4941 = vmatprep.subr.bf16.mxu0 0
        %4942 = vmatpush1.bf16.xpose.msra.mxu0 0
        %4943 = vmatprep.mubr.bf16.mxu0 0
        %4944 = vmatmul.mubr.bf16.gmra.mrb[0].mxu0 %v4906
        %v4945 = vpop.f32.mrb[0].mxu0
        %v4946 = vadd.f32 0.0, %v4945
        %v4947 = vpop.f32.mrb[0].mxu0
        %v4948 = vpop.f32.mrb[0].mxu0
        %v4949 = vpop.f32.mrb[0].mxu0
        %4950 = vdwg.mxu0
        %v4952 = vsel %vm4674, %v4664, 0
        %v4955 = vsel %vm4674, %v4672, 0
        %4957 = vmatprep.subr.bf16.mxu0 0
        %4958 = vmatpush1.bf16.xpose.msra.mxu0 %v4955
        %4959 = vmatprep.subr.bf16.mxu0 0
        %4960 = vmatpush1.bf16.xpose.msra.mxu0 0
        %4961 = vmatprep.subr.bf16.mxu0 0
        %4962 = vmatpush1.bf16.xpose.msra.mxu0 0
        %4963 = vmatprep.subr.bf16.mxu0 0
        %4964 = vmatpush1.bf16.xpose.msra.mxu0 0
        %4965 = vmatprep.subr.bf16.mxu0 0
        %4966 = vmatpush1.bf16.xpose.msra.mxu0 0
        %4967 = vmatprep.subr.bf16.mxu0 0
        %4968 = vmatpush1.bf16.xpose.msra.mxu0 0
        %4969 = vmatprep.subr.bf16.mxu0 0
        %4970 = vmatpush1.bf16.xpose.msra.mxu0 0
        %4971 = vmatprep.subr.bf16.mxu0 0
        %4972 = vmatpush1.bf16.xpose.msra.mxu0 0
        %4973 = vmatprep.subr.bf16.mxu0 0
        %4974 = vmatpush1.bf16.xpose.msra.mxu0 0
        %4975 = vmatprep.subr.bf16.mxu0 0
        %4976 = vmatpush1.bf16.xpose.msra.mxu0 0
        %4977 = vmatprep.subr.bf16.mxu0 0
        %4978 = vmatpush1.bf16.xpose.msra.mxu0 0
        %4979 = vmatprep.subr.bf16.mxu0 0
        %4980 = vmatpush1.bf16.xpose.msra.mxu0 0
        %4981 = vmatprep.subr.bf16.mxu0 0
        %4982 = vmatpush1.bf16.xpose.msra.mxu0 0
        %4983 = vmatprep.subr.bf16.mxu0 0
        %4984 = vmatpush1.bf16.xpose.msra.mxu0 0
        %4985 = vmatprep.subr.bf16.mxu0 0
        %4986 = vmatpush1.bf16.xpose.msra.mxu0 0
        %4987 = vmatprep.subr.bf16.mxu0 0
        %4988 = vmatpush1.bf16.xpose.msra.mxu0 0
        %4989 = vmatprep.mubr.bf16.mxu0 0
        %4990 = vmatmul.mubr.bf16.gmra.mrb[0].mxu0 %v4952
        %v4991 = vpop.f32.mrb[0].mxu0
        %v4992 = vadd.f32 0.0, %v4991
        %v4993 = vpop.f32.mrb[0].mxu0
        %v4994 = vpop.f32.mrb[0].mxu0
        %v4995 = vpop.f32.mrb[0].mxu0
        %4996 = vdwg.mxu0
        %v4998 = vsel %vm4674, %v4665, 0
        %v5001 = vsel %vm4674, %v4673, 0
        %5003 = vmatprep.subr.bf16.mxu0 0
        %5004 = vmatpush1.bf16.xpose.msra.mxu0 %v5001
        %5005 = vmatprep.subr.bf16.mxu0 0
        %5006 = vmatpush1.bf16.xpose.msra.mxu0 0
        %5007 = vmatprep.subr.bf16.mxu0 0
        %5008 = vmatpush1.bf16.xpose.msra.mxu0 0
        %5009 = vmatprep.subr.bf16.mxu0 0
        %5010 = vmatpush1.bf16.xpose.msra.mxu0 0
        %5011 = vmatprep.subr.bf16.mxu0 0
        %5012 = vmatpush1.bf16.xpose.msra.mxu0 0
        %5013 = vmatprep.subr.bf16.mxu0 0
        %5014 = vmatpush1.bf16.xpose.msra.mxu0 0
        %5015 = vmatprep.subr.bf16.mxu0 0
        %5016 = vmatpush1.bf16.xpose.msra.mxu0 0
        %5017 = vmatprep.subr.bf16.mxu0 0
        %5018 = vmatpush1.bf16.xpose.msra.mxu0 0
        %5019 = vmatprep.subr.bf16.mxu0 0
        %5020 = vmatpush1.bf16.xpose.msra.mxu0 0
        %5021 = vmatprep.subr.bf16.mxu0 0
        %5022 = vmatpush1.bf16.xpose.msra.mxu0 0
        %5023 = vmatprep.subr.bf16.mxu0 0
        %5024 = vmatpush1.bf16.xpose.msra.mxu0 0
        %5025 = vmatprep.subr.bf16.mxu0 0
        %5026 = vmatpush1.bf16.xpose.msra.mxu0 0
        %5027 = vmatprep.subr.bf16.mxu0 0
        %5028 = vmatpush1.bf16.xpose.msra.mxu0 0
        %5029 = vmatprep.subr.bf16.mxu0 0
        %5030 = vmatpush1.bf16.xpose.msra.mxu0 0
        %5031 = vmatprep.subr.bf16.mxu0 0
        %5032 = vmatpush1.bf16.xpose.msra.mxu0 0
        %5033 = vmatprep.subr.bf16.mxu0 0
        %5034 = vmatpush1.bf16.xpose.msra.mxu0 0
        %5035 = vmatprep.mubr.bf16.mxu0 0
        %5036 = vmatmul.mubr.bf16.gmra.mrb[0].mxu0 %v4998
        %v5037 = vpop.f32.mrb[0].mxu0
        %v5038 = vadd.f32 0.0, %v5037
        %v5039 = vpop.f32.mrb[0].mxu0
        %v5040 = vpop.f32.mrb[0].mxu0
        %v5041 = vpop.f32.mrb[0].mxu0
        %5042 = vdwg.mxu0
        %vm5043 = vcmask 64512
        %v5044 = vsel %vm5043, %v4716, -inf
        %5045 = vmax.xlane.f32.xlu0 %v5044
        %v5046 = vpop.xlane.xlu0 %5045
        %v5047 = vsel %vm5043, %v4762, -inf
        %5048 = vmax.xlane.f32.xlu0 %v5047
        %v5049 = vpop.xlane.xlu0 %5048
        %v5050 = vsel %vm5043, %v4808, -inf
        %5051 = vmax.xlane.f32.xlu0 %v5050
        %v5052 = vpop.xlane.xlu0 %5051
        %v5053 = vsel %vm5043, %v4854, -inf
        %5054 = vmax.xlane.f32.xlu0 %v5053
        %v5055 = vpop.xlane.xlu0 %5054
        %v5056 = vsel %vm5043, %v4900, -inf
        %5057 = vmax.xlane.f32.xlu0 %v5056
        %v5058 = vpop.xlane.xlu0 %5057
        %v5059 = vsel %vm5043, %v4946, -inf
        %5060 = vmax.xlane.f32.xlu0 %v5059
        %v5061 = vpop.xlane.xlu0 %5060
        %v5062 = vsel %vm5043, %v4992, -inf
        %5063 = vmax.xlane.f32.xlu0 %v5062
        %v5064 = vpop.xlane.xlu0 %5063
        %v5065 = vsel %vm5043, %v5038, -inf
        %5066 = vmax.xlane.f32.xlu0 %v5065
        %v5067 = vpop.xlane.xlu0 %5066
        %v5068 = vsub.f32 %v4716, %v5046
        %v5069 = vsub.f32 %v4762, %v5049
        %v5070 = vsub.f32 %v4808, %v5052
        %v5071 = vsub.f32 %v4854, %v5055
        %v5072 = vsub.f32 %v4900, %v5058
        %v5073 = vsub.f32 %v4946, %v5061
        %v5074 = vsub.f32 %v4992, %v5064
        %v5075 = vsub.f32 %v5038, %v5067
        %v5076 = vmul.f32 %v5068, 1.442695
        %v5077 = vpow.pop %v5076
        %v5078 = vmul.f32 %v5069, 1.442695
        %v5079 = vpow.pop %v5078
        %v5080 = vmul.f32 %v5070, 1.442695
        %v5081 = vpow.pop %v5080
        %v5082 = vmul.f32 %v5071, 1.442695
        %v5083 = vpow.pop %v5082
        %v5084 = vmul.f32 %v5072, 1.442695
        %v5085 = vpow.pop %v5084
        %v5086 = vmul.f32 %v5073, 1.442695
        %v5087 = vpow.pop %v5086
        %v5088 = vmul.f32 %v5074, 1.442695
        %v5089 = vpow.pop %v5088
        %v5090 = vmul.f32 %v5075, 1.442695
        %v5091 = vpow.pop %v5090
        %v5092 = vsel %vm5043, %v5077, 0.0
        %5093 = vadd.xlane.f32.xlu0 %v5092
        %v5094 = vpop.xlane.xlu0 %5093
        %v5095 = vsel %vm5043, %v5079, 0.0
        %5096 = vadd.xlane.f32.xlu0 %v5095
        %v5097 = vpop.xlane.xlu0 %5096
        %v5098 = vsel %vm5043, %v5081, 0.0
        %5099 = vadd.xlane.f32.xlu0 %v5098
        %v5100 = vpop.xlane.xlu0 %5099
        %v5101 = vsel %vm5043, %v5083, 0.0
        %5102 = vadd.xlane.f32.xlu0 %v5101
        %v5103 = vpop.xlane.xlu0 %5102
        %v5104 = vsel %vm5043, %v5085, 0.0
        %5105 = vadd.xlane.f32.xlu0 %v5104
        %v5106 = vpop.xlane.xlu0 %5105
        %v5107 = vsel %vm5043, %v5087, 0.0
        %5108 = vadd.xlane.f32.xlu0 %v5107
        %v5109 = vpop.xlane.xlu0 %5108
        %v5110 = vsel %vm5043, %v5089, 0.0
        %5111 = vadd.xlane.f32.xlu0 %v5110
        %v5112 = vpop.xlane.xlu0 %5111
        %v5113 = vsel %vm5043, %v5091, 0.0
        %5114 = vadd.xlane.f32.xlu0 %v5113
        %v5115 = vpop.xlane.xlu0 %5114
        %v5116 = vrcp.pop %v5094
        %v5117 = vrcp.pop %v5097
        %v5118 = vrcp.pop %v5100
        %v5119 = vrcp.pop %v5103
        %v5120 = vrcp.pop %v5106
        %v5121 = vrcp.pop %v5109
        %v5122 = vrcp.pop %v5112
        %v5123 = vrcp.pop %v5115
        %v5124 = vmul.f32 %v5077, %v5116
        %v5125 = vmul.f32 %v5079, %v5117
        %v5126 = vmul.f32 %v5081, %v5118
        %v5127 = vmul.f32 %v5083, %v5119
        %v5128 = vmul.f32 %v5085, %v5120
        %v5129 = vmul.f32 %v5087, %v5121
        %v5130 = vmul.f32 %v5089, %v5122
        %v5131 = vmul.f32 %v5091, %v5123
        %v5132 = vpack.c.bf16 %v5124, %v5124
        %v5133 = vpack.c.bf16 %v5125, %v5125
        %v5134 = vpack.c.bf16 %v5126, %v5126
        %v5135 = vpack.c.bf16 %v5127, %v5127
        %v5136 = vpack.c.bf16 %v5128, %v5128
        %v5137 = vpack.c.bf16 %v5129, %v5129
        %v5138 = vpack.c.bf16 %v5130, %v5130
        %v5139 = vpack.c.bf16 %v5131, %v5131
        %v5140 = vpack.c.bf16 %v3701, %v3701
        %v5141 = vpack.c.bf16 %v3837, %v3837
        %v5142 = vpack.c.bf16 %v3973, %v3973
        %v5143 = vpack.c.bf16 %v4109, %v4109
        %v5144 = vpack.c.bf16 %v4245, %v4245
        %v5145 = vpack.c.bf16 %v4381, %v4381
        %v5146 = vpack.c.bf16 %v4517, %v4517
        %v5147 = vpack.c.bf16 %v4653, %v4653
        %v5149 = vsel %vm5043, %v5132, 0
        %vm5151 = vcmask 1043456
        %v5153 = vsel %vm5151, %v5140, 0
        %5155 = vmatprep.subr.bf16.mxu0 0
        %5156 = vmatpush1.bf16.msra.mxu0 %v5153
        %5157 = vmatprep.subr.bf16.mxu0 0
        %5158 = vmatpush1.bf16.msra.mxu0 0
        %5159 = vmatprep.subr.bf16.mxu0 0
        %5160 = vmatpush1.bf16.msra.mxu0 0
        %5161 = vmatprep.subr.bf16.mxu0 0
        %5162 = vmatpush1.bf16.msra.mxu0 0
        %5163 = vmatprep.subr.bf16.mxu0 0
        %5164 = vmatpush1.bf16.msra.mxu0 0
        %5165 = vmatprep.subr.bf16.mxu0 0
        %5166 = vmatpush1.bf16.msra.mxu0 0
        %5167 = vmatprep.subr.bf16.mxu0 0
        %5168 = vmatpush1.bf16.msra.mxu0 0
        %5169 = vmatprep.subr.bf16.mxu0 0
        %5170 = vmatpush1.bf16.msra.mxu0 0
        %5171 = vmatprep.subr.bf16.mxu0 0
        %5172 = vmatpush1.bf16.msra.mxu0 0
        %5173 = vmatprep.subr.bf16.mxu0 0
        %5174 = vmatpush1.bf16.msra.mxu0 0
        %5175 = vmatprep.subr.bf16.mxu0 0
        %5176 = vmatpush1.bf16.msra.mxu0 0
        %5177 = vmatprep.subr.bf16.mxu0 0
        %5178 = vmatpush1.bf16.msra.mxu0 0
        %5179 = vmatprep.subr.bf16.mxu0 0
        %5180 = vmatpush1.bf16.msra.mxu0 0
        %5181 = vmatprep.subr.bf16.mxu0 0
        %5182 = vmatpush1.bf16.msra.mxu0 0
        %5183 = vmatprep.subr.bf16.mxu0 0
        %5184 = vmatpush1.bf16.msra.mxu0 0
        %5185 = vmatprep.subr.bf16.mxu0 0
        %5186 = vmatpush1.bf16.msra.mxu0 0
        %5187 = vmatprep.mubr.bf16.mxu0 0
        %5188 = vmatmul.mubr.bf16.gmra.mrb[0].mxu0 %v5149
        %v5189 = vpop.f32.mrb[0].mxu0
        %v5190 = vadd.f32 0.0, %v5189
        %v5191 = vpop.f32.mrb[0].mxu0
        %v5192 = vpop.f32.mrb[0].mxu0
        %v5193 = vpop.f32.mrb[0].mxu0
        %5194 = vdwg.mxu0
        %v5196 = vsel %vm5043, %v5133, 0
        %v5199 = vsel %vm5151, %v5141, 0
        %5201 = vmatprep.subr.bf16.mxu0 0
        %5202 = vmatpush1.bf16.msra.mxu0 %v5199
        %5203 = vmatprep.subr.bf16.mxu0 0
        %5204 = vmatpush1.bf16.msra.mxu0 0
        %5205 = vmatprep.subr.bf16.mxu0 0
        %5206 = vmatpush1.bf16.msra.mxu0 0
        %5207 = vmatprep.subr.bf16.mxu0 0
        %5208 = vmatpush1.bf16.msra.mxu0 0
        %5209 = vmatprep.subr.bf16.mxu0 0
        %5210 = vmatpush1.bf16.msra.mxu0 0
        %5211 = vmatprep.subr.bf16.mxu0 0
        %5212 = vmatpush1.bf16.msra.mxu0 0
        %5213 = vmatprep.subr.bf16.mxu0 0
        %5214 = vmatpush1.bf16.msra.mxu0 0
        %5215 = vmatprep.subr.bf16.mxu0 0
        %5216 = vmatpush1.bf16.msra.mxu0 0
        %5217 = vmatprep.subr.bf16.mxu0 0
        %5218 = vmatpush1.bf16.msra.mxu0 0
        %5219 = vmatprep.subr.bf16.mxu0 0
        %5220 = vmatpush1.bf16.msra.mxu0 0
        %5221 = vmatprep.subr.bf16.mxu0 0
        %5222 = vmatpush1.bf16.msra.mxu0 0
        %5223 = vmatprep.subr.bf16.mxu0 0
        %5224 = vmatpush1.bf16.msra.mxu0 0
        %5225 = vmatprep.subr.bf16.mxu0 0
        %5226 = vmatpush1.bf16.msra.mxu0 0
        %5227 = vmatprep.subr.bf16.mxu0 0
        %5228 = vmatpush1.bf16.msra.mxu0 0
        %5229 = vmatprep.subr.bf16.mxu0 0
        %5230 = vmatpush1.bf16.msra.mxu0 0
        %5231 = vmatprep.subr.bf16.mxu0 0
        %5232 = vmatpush1.bf16.msra.mxu0 0
        %5233 = vmatprep.mubr.bf16.mxu0 0
        %5234 = vmatmul.mubr.bf16.gmra.mrb[0].mxu0 %v5196
        %v5235 = vpop.f32.mrb[0].mxu0
        %v5236 = vadd.f32 0.0, %v5235
        %v5237 = vpop.f32.mrb[0].mxu0
        %v5238 = vpop.f32.mrb[0].mxu0
        %v5239 = vpop.f32.mrb[0].mxu0
        %5240 = vdwg.mxu0
        %v5242 = vsel %vm5043, %v5134, 0
        %v5245 = vsel %vm5151, %v5142, 0
        %5247 = vmatprep.subr.bf16.mxu0 0
        %5248 = vmatpush1.bf16.msra.mxu0 %v5245
        %5249 = vmatprep.subr.bf16.mxu0 0
        %5250 = vmatpush1.bf16.msra.mxu0 0
        %5251 = vmatprep.subr.bf16.mxu0 0
        %5252 = vmatpush1.bf16.msra.mxu0 0
        %5253 = vmatprep.subr.bf16.mxu0 0
        %5254 = vmatpush1.bf16.msra.mxu0 0
        %5255 = vmatprep.subr.bf16.mxu0 0
        %5256 = vmatpush1.bf16.msra.mxu0 0
        %5257 = vmatprep.subr.bf16.mxu0 0
        %5258 = vmatpush1.bf16.msra.mxu0 0
        %5259 = vmatprep.subr.bf16.mxu0 0
        %5260 = vmatpush1.bf16.msra.mxu0 0
        %5261 = vmatprep.subr.bf16.mxu0 0
        %5262 = vmatpush1.bf16.msra.mxu0 0
        %5263 = vmatprep.subr.bf16.mxu0 0
        %5264 = vmatpush1.bf16.msra.mxu0 0
        %5265 = vmatprep.subr.bf16.mxu0 0
        %5266 = vmatpush1.bf16.msra.mxu0 0
        %5267 = vmatprep.subr.bf16.mxu0 0
        %5268 = vmatpush1.bf16.msra.mxu0 0
        %5269 = vmatprep.subr.bf16.mxu0 0
        %5270 = vmatpush1.bf16.msra.mxu0 0
        %5271 = vmatprep.subr.bf16.mxu0 0
        %5272 = vmatpush1.bf16.msra.mxu0 0
        %5273 = vmatprep.subr.bf16.mxu0 0
        %5274 = vmatpush1.bf16.msra.mxu0 0
        %5275 = vmatprep.subr.bf16.mxu0 0
        %5276 = vmatpush1.bf16.msra.mxu0 0
        %5277 = vmatprep.subr.bf16.mxu0 0
        %5278 = vmatpush1.bf16.msra.mxu0 0
        %5279 = vmatprep.mubr.bf16.mxu0 0
        %5280 = vmatmul.mubr.bf16.gmra.mrb[0].mxu0 %v5242
        %v5281 = vpop.f32.mrb[0].mxu0
        %v5282 = vadd.f32 0.0, %v5281
        %v5283 = vpop.f32.mrb[0].mxu0
        %v5284 = vpop.f32.mrb[0].mxu0
        %v5285 = vpop.f32.mrb[0].mxu0
        %5286 = vdwg.mxu0
        %v5288 = vsel %vm5043, %v5135, 0
        %v5291 = vsel %vm5151, %v5143, 0
        %5293 = vmatprep.subr.bf16.mxu0 0
        %5294 = vmatpush1.bf16.msra.mxu0 %v5291
        %5295 = vmatprep.subr.bf16.mxu0 0
        %5296 = vmatpush1.bf16.msra.mxu0 0
        %5297 = vmatprep.subr.bf16.mxu0 0
        %5298 = vmatpush1.bf16.msra.mxu0 0
        %5299 = vmatprep.subr.bf16.mxu0 0
        %5300 = vmatpush1.bf16.msra.mxu0 0
        %5301 = vmatprep.subr.bf16.mxu0 0
        %5302 = vmatpush1.bf16.msra.mxu0 0
        %5303 = vmatprep.subr.bf16.mxu0 0
        %5304 = vmatpush1.bf16.msra.mxu0 0
        %5305 = vmatprep.subr.bf16.mxu0 0
        %5306 = vmatpush1.bf16.msra.mxu0 0
        %5307 = vmatprep.subr.bf16.mxu0 0
        %5308 = vmatpush1.bf16.msra.mxu0 0
        %5309 = vmatprep.subr.bf16.mxu0 0
        %5310 = vmatpush1.bf16.msra.mxu0 0
        %5311 = vmatprep.subr.bf16.mxu0 0
        %5312 = vmatpush1.bf16.msra.mxu0 0
        %5313 = vmatprep.subr.bf16.mxu0 0
        %5314 = vmatpush1.bf16.msra.mxu0 0
        %5315 = vmatprep.subr.bf16.mxu0 0
        %5316 = vmatpush1.bf16.msra.mxu0 0
        %5317 = vmatprep.subr.bf16.mxu0 0
        %5318 = vmatpush1.bf16.msra.mxu0 0
        %5319 = vmatprep.subr.bf16.mxu0 0
        %5320 = vmatpush1.bf16.msra.mxu0 0
        %5321 = vmatprep.subr.bf16.mxu0 0
        %5322 = vmatpush1.bf16.msra.mxu0 0
        %5323 = vmatprep.subr.bf16.mxu0 0
        %5324 = vmatpush1.bf16.msra.mxu0 0
        %5325 = vmatprep.mubr.bf16.mxu0 0
        %5326 = vmatmul.mubr.bf16.gmra.mrb[0].mxu0 %v5288
        %v5327 = vpop.f32.mrb[0].mxu0
        %v5328 = vadd.f32 0.0, %v5327
        %v5329 = vpop.f32.mrb[0].mxu0
        %v5330 = vpop.f32.mrb[0].mxu0
        %v5331 = vpop.f32.mrb[0].mxu0
        %5332 = vdwg.mxu0
        %v5334 = vsel %vm5043, %v5136, 0
        %v5337 = vsel %vm5151, %v5144, 0
        %5339 = vmatprep.subr.bf16.mxu0 0
        %5340 = vmatpush1.bf16.msra.mxu0 %v5337
        %5341 = vmatprep.subr.bf16.mxu0 0
        %5342 = vmatpush1.bf16.msra.mxu0 0
        %5343 = vmatprep.subr.bf16.mxu0 0
        %5344 = vmatpush1.bf16.msra.mxu0 0
        %5345 = vmatprep.subr.bf16.mxu0 0
        %5346 = vmatpush1.bf16.msra.mxu0 0
        %5347 = vmatprep.subr.bf16.mxu0 0
        %5348 = vmatpush1.bf16.msra.mxu0 0
        %5349 = vmatprep.subr.bf16.mxu0 0
        %5350 = vmatpush1.bf16.msra.mxu0 0
        %5351 = vmatprep.subr.bf16.mxu0 0
        %5352 = vmatpush1.bf16.msra.mxu0 0
        %5353 = vmatprep.subr.bf16.mxu0 0
        %5354 = vmatpush1.bf16.msra.mxu0 0
        %5355 = vmatprep.subr.bf16.mxu0 0
        %5356 = vmatpush1.bf16.msra.mxu0 0
        %5357 = vmatprep.subr.bf16.mxu0 0
        %5358 = vmatpush1.bf16.msra.mxu0 0
        %5359 = vmatprep.subr.bf16.mxu0 0
        %5360 = vmatpush1.bf16.msra.mxu0 0
        %5361 = vmatprep.subr.bf16.mxu0 0
        %5362 = vmatpush1.bf16.msra.mxu0 0
        %5363 = vmatprep.subr.bf16.mxu0 0
        %5364 = vmatpush1.bf16.msra.mxu0 0
        %5365 = vmatprep.subr.bf16.mxu0 0
        %5366 = vmatpush1.bf16.msra.mxu0 0
        %5367 = vmatprep.subr.bf16.mxu0 0
        %5368 = vmatpush1.bf16.msra.mxu0 0
        %5369 = vmatprep.subr.bf16.mxu0 0
        %5370 = vmatpush1.bf16.msra.mxu0 0
        %5371 = vmatprep.mubr.bf16.mxu0 0
        %5372 = vmatmul.mubr.bf16.gmra.mrb[0].mxu0 %v5334
        %v5373 = vpop.f32.mrb[0].mxu0
        %v5374 = vadd.f32 0.0, %v5373
        %v5375 = vpop.f32.mrb[0].mxu0
        %v5376 = vpop.f32.mrb[0].mxu0
        %v5377 = vpop.f32.mrb[0].mxu0
        %5378 = vdwg.mxu0
        %v5380 = vsel %vm5043, %v5137, 0
        %v5383 = vsel %vm5151, %v5145, 0
        %5385 = vmatprep.subr.bf16.mxu0 0
        %5386 = vmatpush1.bf16.msra.mxu0 %v5383
        %5387 = vmatprep.subr.bf16.mxu0 0
        %5388 = vmatpush1.bf16.msra.mxu0 0
        %5389 = vmatprep.subr.bf16.mxu0 0
        %5390 = vmatpush1.bf16.msra.mxu0 0
        %5391 = vmatprep.subr.bf16.mxu0 0
        %5392 = vmatpush1.bf16.msra.mxu0 0
        %5393 = vmatprep.subr.bf16.mxu0 0
        %5394 = vmatpush1.bf16.msra.mxu0 0
        %5395 = vmatprep.subr.bf16.mxu0 0
        %5396 = vmatpush1.bf16.msra.mxu0 0
        %5397 = vmatprep.subr.bf16.mxu0 0
        %5398 = vmatpush1.bf16.msra.mxu0 0
        %5399 = vmatprep.subr.bf16.mxu0 0
        %5400 = vmatpush1.bf16.msra.mxu0 0
        %5401 = vmatprep.subr.bf16.mxu0 0
        %5402 = vmatpush1.bf16.msra.mxu0 0
        %5403 = vmatprep.subr.bf16.mxu0 0
        %5404 = vmatpush1.bf16.msra.mxu0 0
        %5405 = vmatprep.subr.bf16.mxu0 0
        %5406 = vmatpush1.bf16.msra.mxu0 0
        %5407 = vmatprep.subr.bf16.mxu0 0
        %5408 = vmatpush1.bf16.msra.mxu0 0
        %5409 = vmatprep.subr.bf16.mxu0 0
        %5410 = vmatpush1.bf16.msra.mxu0 0
        %5411 = vmatprep.subr.bf16.mxu0 0
        %5412 = vmatpush1.bf16.msra.mxu0 0
        %5413 = vmatprep.subr.bf16.mxu0 0
        %5414 = vmatpush1.bf16.msra.mxu0 0
        %5415 = vmatprep.subr.bf16.mxu0 0
        %5416 = vmatpush1.bf16.msra.mxu0 0
        %5417 = vmatprep.mubr.bf16.mxu0 0
        %5418 = vmatmul.mubr.bf16.gmra.mrb[0].mxu0 %v5380
        %v5419 = vpop.f32.mrb[0].mxu0
        %v5420 = vadd.f32 0.0, %v5419
        %v5421 = vpop.f32.mrb[0].mxu0
        %v5422 = vpop.f32.mrb[0].mxu0
        %v5423 = vpop.f32.mrb[0].mxu0
        %5424 = vdwg.mxu0
        %v5426 = vsel %vm5043, %v5138, 0
        %v5429 = vsel %vm5151, %v5146, 0
        %5431 = vmatprep.subr.bf16.mxu0 0
        %5432 = vmatpush1.bf16.msra.mxu0 %v5429
        %5433 = vmatprep.subr.bf16.mxu0 0
        %5434 = vmatpush1.bf16.msra.mxu0 0
        %5435 = vmatprep.subr.bf16.mxu0 0
        %5436 = vmatpush1.bf16.msra.mxu0 0
        %5437 = vmatprep.subr.bf16.mxu0 0
        %5438 = vmatpush1.bf16.msra.mxu0 0
        %5439 = vmatprep.subr.bf16.mxu0 0
        %5440 = vmatpush1.bf16.msra.mxu0 0
        %5441 = vmatprep.subr.bf16.mxu0 0
        %5442 = vmatpush1.bf16.msra.mxu0 0
        %5443 = vmatprep.subr.bf16.mxu0 0
        %5444 = vmatpush1.bf16.msra.mxu0 0
        %5445 = vmatprep.subr.bf16.mxu0 0
        %5446 = vmatpush1.bf16.msra.mxu0 0
        %5447 = vmatprep.subr.bf16.mxu0 0
        %5448 = vmatpush1.bf16.msra.mxu0 0
        %5449 = vmatprep.subr.bf16.mxu0 0
        %5450 = vmatpush1.bf16.msra.mxu0 0
        %5451 = vmatprep.subr.bf16.mxu0 0
        %5452 = vmatpush1.bf16.msra.mxu0 0
        %5453 = vmatprep.subr.bf16.mxu0 0
        %5454 = vmatpush1.bf16.msra.mxu0 0
        %5455 = vmatprep.subr.bf16.mxu0 0
        %5456 = vmatpush1.bf16.msra.mxu0 0
        %5457 = vmatprep.subr.bf16.mxu0 0
        %5458 = vmatpush1.bf16.msra.mxu0 0
        %5459 = vmatprep.subr.bf16.mxu0 0
        %5460 = vmatpush1.bf16.msra.mxu0 0
        %5461 = vmatprep.subr.bf16.mxu0 0
        %5462 = vmatpush1.bf16.msra.mxu0 0
        %5463 = vmatprep.mubr.bf16.mxu0 0
        %5464 = vmatmul.mubr.bf16.gmra.mrb[0].mxu0 %v5426
        %v5465 = vpop.f32.mrb[0].mxu0
        %v5466 = vadd.f32 0.0, %v5465
        %v5467 = vpop.f32.mrb[0].mxu0
        %v5468 = vpop.f32.mrb[0].mxu0
        %v5469 = vpop.f32.mrb[0].mxu0
        %5470 = vdwg.mxu0
        %v5472 = vsel %vm5043, %v5139, 0
        %v5475 = vsel %vm5151, %v5147, 0
        %5477 = vmatprep.subr.bf16.mxu0 0
        %5478 = vmatpush1.bf16.msra.mxu0 %v5475
        %5479 = vmatprep.subr.bf16.mxu0 0
        %5480 = vmatpush1.bf16.msra.mxu0 0
        %5481 = vmatprep.subr.bf16.mxu0 0
        %5482 = vmatpush1.bf16.msra.mxu0 0
        %5483 = vmatprep.subr.bf16.mxu0 0
        %5484 = vmatpush1.bf16.msra.mxu0 0
        %5485 = vmatprep.subr.bf16.mxu0 0
        %5486 = vmatpush1.bf16.msra.mxu0 0
        %5487 = vmatprep.subr.bf16.mxu0 0
        %5488 = vmatpush1.bf16.msra.mxu0 0
        %5489 = vmatprep.subr.bf16.mxu0 0
        %5490 = vmatpush1.bf16.msra.mxu0 0
        %5491 = vmatprep.subr.bf16.mxu0 0
        %5492 = vmatpush1.bf16.msra.mxu0 0
        %5493 = vmatprep.subr.bf16.mxu0 0
        %5494 = vmatpush1.bf16.msra.mxu0 0
        %5495 = vmatprep.subr.bf16.mxu0 0
        %5496 = vmatpush1.bf16.msra.mxu0 0
        %5497 = vmatprep.subr.bf16.mxu0 0
        %5498 = vmatpush1.bf16.msra.mxu0 0
        %5499 = vmatprep.subr.bf16.mxu0 0
        %5500 = vmatpush1.bf16.msra.mxu0 0
        %5501 = vmatprep.subr.bf16.mxu0 0
        %5502 = vmatpush1.bf16.msra.mxu0 0
        %5503 = vmatprep.subr.bf16.mxu0 0
        %5504 = vmatpush1.bf16.msra.mxu0 0
        %5505 = vmatprep.subr.bf16.mxu0 0
        %5506 = vmatpush1.bf16.msra.mxu0 0
        %5507 = vmatprep.subr.bf16.mxu0 0
        %5508 = vmatpush1.bf16.msra.mxu0 0
        %5509 = vmatprep.mubr.bf16.mxu0 0
        %5510 = vmatmul.mubr.bf16.gmra.mrb[0].mxu0 %v5472
        %v5511 = vpop.f32.mrb[0].mxu0
        %v5512 = vadd.f32 0.0, %v5511
        %v5513 = vpop.f32.mrb[0].mxu0
        %v5514 = vpop.f32.mrb[0].mxu0
        %v5515 = vpop.f32.mrb[0].mxu0
        %5516 = vdwg.mxu0
        %v5517 = vpack.c.bf16 %v5190, %v5190
        %v5518 = vpack.c.bf16 %v5236, %v5236
        %v5519 = vpack.c.bf16 %v5282, %v5282
        %v5520 = vpack.c.bf16 %v5328, %v5328
        %v5521 = vpack.c.bf16 %v5374, %v5374
        %v5522 = vpack.c.bf16 %v5420, %v5420
        %v5523 = vpack.c.bf16 %v5466, %v5466
        %v5524 = vpack.c.bf16 %v5512, %v5512
        %v5525 = vld [vmem:[%s6] sm:$0xff]
        %v5526 = vld [vmem:[%s6 + $0x8] sm:$0xff]
        %v5527 = vld [vmem:[%s6 + $0x10] sm:$0xff]
        %v5528 = vld [vmem:[%s6 + $0x18] sm:$0xff]
        %v5529 = vld [vmem:[%s6 + $0x20] sm:$0xff]
        %v5530 = vld [vmem:[%s6 + $0x28] sm:$0xff]
        %v5531 = vld [vmem:[%s6 + $0x30] sm:$0xff]
        %v5532 = vld [vmem:[%s6 + $0x38] sm:$0xff]
        %v5533 = vld [vmem:[%s6 + $0x40] sm:$0xff]
        %v5534 = vld [vmem:[%s6 + $0x48] sm:$0xff]
        %v5535 = vld [vmem:[%s6 + $0x50] sm:$0xff]
        %v5536 = vld [vmem:[%s6 + $0x58] sm:$0xff]
        %v5537 = vld [vmem:[%s6 + $0x60] sm:$0xff]
        %v5538 = vld [vmem:[%s6 + $0x68] sm:$0xff]
        %v5539 = vld [vmem:[%s6 + $0x70] sm:$0xff]
        %v5540 = vld [vmem:[%s6 + $0x78] sm:$0xff]
        %v5541 = vld [vmem:[%s6 + $0x80] sm:$0xff]
        %v5542 = vld [vmem:[%s6 + $0x88] sm:$0xff]
        %v5543 = vld [vmem:[%s6 + $0x90] sm:$0xff]
        %v5544 = vld [vmem:[%s6 + $0x98] sm:$0xff]
        %v5545 = vld [vmem:[%s6 + $0xa0] sm:$0xff]
        %v5546 = vld [vmem:[%s6 + $0xa8] sm:$0xff]
        %v5547 = vld [vmem:[%s6 + $0xb0] sm:$0xff]
        %v5548 = vld [vmem:[%s6 + $0xb8] sm:$0xff]
        %v5549 = vld [vmem:[%s6 + $0xc0] sm:$0xff]
        %v5550 = vld [vmem:[%s6 + $0xc8] sm:$0xff]
        %v5551 = vld [vmem:[%s6 + $0xd0] sm:$0xff]
        %v5552 = vld [vmem:[%s6 + $0xd8] sm:$0xff]
        %v5553 = vld [vmem:[%s6 + $0xe0] sm:$0xff]
        %v5554 = vld [vmem:[%s6 + $0xe8] sm:$0xff]
        %v5555 = vld [vmem:[%s6 + $0xf0] sm:$0xff]
        %v5556 = vld [vmem:[%s6 + $0xf8] sm:$0xff]
        %v5561 = vunpack.c.l.b16 %v5525
        %v5562 = vunpack.c.h.b16 %v5525
        %v5563 = vunpack.c.l.b16 %v5526
        %v5564 = vunpack.c.h.b16 %v5526
        %v5565 = vunpack.c.l.b16 %v5527
        %v5566 = vunpack.c.h.b16 %v5527
        %v5567 = vunpack.c.l.b16 %v5528
        %v5568 = vunpack.c.h.b16 %v5528
        %v5569 = vpack.c.b16 %v5563, %v5561
        %v5570 = vpack.c.b16 %v5564, %v5562
        %v5571 = vpack.c.b16 %v5567, %v5565
        %v5572 = vpack.c.b16 %v5568, %v5566
        %v5578 = vsel %vm4674, %v5517, 0
        %5580 = vmatprep.subr.bf16.mxu0 %v5570
        %5581 = vmatpush1.bf16.msra.mxu0 %v5569
        %5582 = vmatprep.subr.bf16.mxu0 %v5572
        %5583 = vmatpush1.bf16.msra.mxu0 %v5571
        %5584 = vmatprep.subr.bf16.mxu0 0
        %5585 = vmatpush1.bf16.msra.mxu0 0
        %5586 = vmatprep.subr.bf16.mxu0 0
        %5587 = vmatpush1.bf16.msra.mxu0 0
        %5588 = vmatprep.subr.bf16.mxu0 0
        %5589 = vmatpush1.bf16.msra.mxu0 0
        %5590 = vmatprep.subr.bf16.mxu0 0
        %5591 = vmatpush1.bf16.msra.mxu0 0
        %5592 = vmatprep.subr.bf16.mxu0 0
        %5593 = vmatpush1.bf16.msra.mxu0 0
        %5594 = vmatprep.subr.bf16.mxu0 0
        %5595 = vmatpush1.bf16.msra.mxu0 0
        %5596 = vmatprep.subr.bf16.mxu0 0
        %5597 = vmatpush1.bf16.msra.mxu0 0
        %5598 = vmatprep.subr.bf16.mxu0 0
        %5599 = vmatpush1.bf16.msra.mxu0 0
        %5600 = vmatprep.subr.bf16.mxu0 0
        %5601 = vmatpush1.bf16.msra.mxu0 0
        %5602 = vmatprep.subr.bf16.mxu0 0
        %5603 = vmatpush1.bf16.msra.mxu0 0
        %5604 = vmatprep.subr.bf16.mxu0 0
        %5605 = vmatpush1.bf16.msra.mxu0 0
        %5606 = vmatprep.subr.bf16.mxu0 0
        %5607 = vmatpush1.bf16.msra.mxu0 0
        %5608 = vmatprep.subr.bf16.mxu0 0
        %5609 = vmatpush1.bf16.msra.mxu0 0
        %5610 = vmatprep.subr.bf16.mxu0 0
        %5611 = vmatpush1.bf16.msra.mxu0 0
        %5612 = vmatprep.mubr.bf16.mxu0 0
        %5613 = vmatmul.mubr.bf16.gmra.mrb[0].mxu0 %v5578
        %v5614 = vpop.f32.mrb[0].mxu0
        %v5615 = vadd.f32 0.0, %v5614
        %v5616 = vpop.f32.mrb[0].mxu0
        %v5617 = vadd.f32 0.0, %v5616
        %v5618 = vpop.f32.mrb[0].mxu0
        %v5619 = vpop.f32.mrb[0].mxu0
        %5620 = vdwg.mxu0
        %v5625 = vunpack.c.l.b16 %v5529
        %v5626 = vunpack.c.h.b16 %v5529
        %v5627 = vunpack.c.l.b16 %v5530
        %v5628 = vunpack.c.h.b16 %v5530
        %v5629 = vunpack.c.l.b16 %v5531
        %v5630 = vunpack.c.h.b16 %v5531
        %v5631 = vunpack.c.l.b16 %v5532
        %v5632 = vunpack.c.h.b16 %v5532
        %v5633 = vpack.c.b16 %v5627, %v5625
        %v5634 = vpack.c.b16 %v5628, %v5626
        %v5635 = vpack.c.b16 %v5631, %v5629
        %v5636 = vpack.c.b16 %v5632, %v5630
        %v5642 = vsel %vm4674, %v5518, 0
        %5644 = vmatprep.subr.bf16.mxu0 %v5634
        %5645 = vmatpush1.bf16.msra.mxu0 %v5633
        %5646 = vmatprep.subr.bf16.mxu0 %v5636
        %5647 = vmatpush1.bf16.msra.mxu0 %v5635
        %5648 = vmatprep.subr.bf16.mxu0 0
        %5649 = vmatpush1.bf16.msra.mxu0 0
        %5650 = vmatprep.subr.bf16.mxu0 0
        %5651 = vmatpush1.bf16.msra.mxu0 0
        %5652 = vmatprep.subr.bf16.mxu0 0
        %5653 = vmatpush1.bf16.msra.mxu0 0
        %5654 = vmatprep.subr.bf16.mxu0 0
        %5655 = vmatpush1.bf16.msra.mxu0 0
        %5656 = vmatprep.subr.bf16.mxu0 0
        %5657 = vmatpush1.bf16.msra.mxu0 0
        %5658 = vmatprep.subr.bf16.mxu0 0
        %5659 = vmatpush1.bf16.msra.mxu0 0
        %5660 = vmatprep.subr.bf16.mxu0 0
        %5661 = vmatpush1.bf16.msra.mxu0 0
        %5662 = vmatprep.subr.bf16.mxu0 0
        %5663 = vmatpush1.bf16.msra.mxu0 0
        %5664 = vmatprep.subr.bf16.mxu0 0
        %5665 = vmatpush1.bf16.msra.mxu0 0
        %5666 = vmatprep.subr.bf16.mxu0 0
        %5667 = vmatpush1.bf16.msra.mxu0 0
        %5668 = vmatprep.subr.bf16.mxu0 0
        %5669 = vmatpush1.bf16.msra.mxu0 0
        %5670 = vmatprep.subr.bf16.mxu0 0
        %5671 = vmatpush1.bf16.msra.mxu0 0
        %5672 = vmatprep.subr.bf16.mxu0 0
        %5673 = vmatpush1.bf16.msra.mxu0 0
        %5674 = vmatprep.subr.bf16.mxu0 0
        %5675 = vmatpush1.bf16.msra.mxu0 0
        %5676 = vmatprep.mubr.bf16.mxu0 0
        %5677 = vmatmul.mubr.bf16.gmra.mrb[0].mxu0 %v5642
        %v5678 = vpop.f32.mrb[0].mxu0
        %v5679 = vadd.f32 0.0, %v5678
        %v5680 = vpop.f32.mrb[0].mxu0
        %v5681 = vadd.f32 0.0, %v5680
        %v5682 = vpop.f32.mrb[0].mxu0
        %v5683 = vpop.f32.mrb[0].mxu0
        %5684 = vdwg.mxu0
        %v5689 = vunpack.c.l.b16 %v5533
        %v5690 = vunpack.c.h.b16 %v5533
        %v5691 = vunpack.c.l.b16 %v5534
        %v5692 = vunpack.c.h.b16 %v5534
        %v5693 = vunpack.c.l.b16 %v5535
        %v5694 = vunpack.c.h.b16 %v5535
        %v5695 = vunpack.c.l.b16 %v5536
        %v5696 = vunpack.c.h.b16 %v5536
        %v5697 = vpack.c.b16 %v5691, %v5689
        %v5698 = vpack.c.b16 %v5692, %v5690
        %v5699 = vpack.c.b16 %v5695, %v5693
        %v5700 = vpack.c.b16 %v5696, %v5694
        %v5706 = vsel %vm4674, %v5519, 0
        %5708 = vmatprep.subr.bf16.mxu0 %v5698
        %5709 = vmatpush1.bf16.msra.mxu0 %v5697
        %5710 = vmatprep.subr.bf16.mxu0 %v5700
        %5711 = vmatpush1.bf16.msra.mxu0 %v5699
        %5712 = vmatprep.subr.bf16.mxu0 0
        %5713 = vmatpush1.bf16.msra.mxu0 0
        %5714 = vmatprep.subr.bf16.mxu0 0
        %5715 = vmatpush1.bf16.msra.mxu0 0
        %5716 = vmatprep.subr.bf16.mxu0 0
        %5717 = vmatpush1.bf16.msra.mxu0 0
        %5718 = vmatprep.subr.bf16.mxu0 0
        %5719 = vmatpush1.bf16.msra.mxu0 0
        %5720 = vmatprep.subr.bf16.mxu0 0
        %5721 = vmatpush1.bf16.msra.mxu0 0
        %5722 = vmatprep.subr.bf16.mxu0 0
        %5723 = vmatpush1.bf16.msra.mxu0 0
        %5724 = vmatprep.subr.bf16.mxu0 0
        %5725 = vmatpush1.bf16.msra.mxu0 0
        %5726 = vmatprep.subr.bf16.mxu0 0
        %5727 = vmatpush1.bf16.msra.mxu0 0
        %5728 = vmatprep.subr.bf16.mxu0 0
        %5729 = vmatpush1.bf16.msra.mxu0 0
        %5730 = vmatprep.subr.bf16.mxu0 0
        %5731 = vmatpush1.bf16.msra.mxu0 0
        %5732 = vmatprep.subr.bf16.mxu0 0
        %5733 = vmatpush1.bf16.msra.mxu0 0
        %5734 = vmatprep.subr.bf16.mxu0 0
        %5735 = vmatpush1.bf16.msra.mxu0 0
        %5736 = vmatprep.subr.bf16.mxu0 0
        %5737 = vmatpush1.bf16.msra.mxu0 0
        %5738 = vmatprep.subr.bf16.mxu0 0
        %5739 = vmatpush1.bf16.msra.mxu0 0
        %5740 = vmatprep.mubr.bf16.mxu0 0
        %5741 = vmatmul.mubr.bf16.gmra.mrb[0].mxu0 %v5706
        %v5742 = vpop.f32.mrb[0].mxu0
        %v5743 = vadd.f32 0.0, %v5742
        %v5744 = vpop.f32.mrb[0].mxu0
        %v5745 = vadd.f32 0.0, %v5744
        %v5746 = vpop.f32.mrb[0].mxu0
        %v5747 = vpop.f32.mrb[0].mxu0
        %5748 = vdwg.mxu0
        %v5753 = vunpack.c.l.b16 %v5537
        %v5754 = vunpack.c.h.b16 %v5537
        %v5755 = vunpack.c.l.b16 %v5538
        %v5756 = vunpack.c.h.b16 %v5538
        %v5757 = vunpack.c.l.b16 %v5539
        %v5758 = vunpack.c.h.b16 %v5539
        %v5759 = vunpack.c.l.b16 %v5540
        %v5760 = vunpack.c.h.b16 %v5540
        %v5761 = vpack.c.b16 %v5755, %v5753
        %v5762 = vpack.c.b16 %v5756, %v5754
        %v5763 = vpack.c.b16 %v5759, %v5757
        %v5764 = vpack.c.b16 %v5760, %v5758
        %v5770 = vsel %vm4674, %v5520, 0
        %5772 = vmatprep.subr.bf16.mxu0 %v5762
        %5773 = vmatpush1.bf16.msra.mxu0 %v5761
        %5774 = vmatprep.subr.bf16.mxu0 %v5764
        %5775 = vmatpush1.bf16.msra.mxu0 %v5763
        %5776 = vmatprep.subr.bf16.mxu0 0
        %5777 = vmatpush1.bf16.msra.mxu0 0
        %5778 = vmatprep.subr.bf16.mxu0 0
        %5779 = vmatpush1.bf16.msra.mxu0 0
        %5780 = vmatprep.subr.bf16.mxu0 0
        %5781 = vmatpush1.bf16.msra.mxu0 0
        %5782 = vmatprep.subr.bf16.mxu0 0
        %5783 = vmatpush1.bf16.msra.mxu0 0
        %5784 = vmatprep.subr.bf16.mxu0 0
        %5785 = vmatpush1.bf16.msra.mxu0 0
        %5786 = vmatprep.subr.bf16.mxu0 0
        %5787 = vmatpush1.bf16.msra.mxu0 0
        %5788 = vmatprep.subr.bf16.mxu0 0
        %5789 = vmatpush1.bf16.msra.mxu0 0
        %5790 = vmatprep.subr.bf16.mxu0 0
        %5791 = vmatpush1.bf16.msra.mxu0 0
        %5792 = vmatprep.subr.bf16.mxu0 0
        %5793 = vmatpush1.bf16.msra.mxu0 0
        %5794 = vmatprep.subr.bf16.mxu0 0
        %5795 = vmatpush1.bf16.msra.mxu0 0
        %5796 = vmatprep.subr.bf16.mxu0 0
        %5797 = vmatpush1.bf16.msra.mxu0 0
        %5798 = vmatprep.subr.bf16.mxu0 0
        %5799 = vmatpush1.bf16.msra.mxu0 0
        %5800 = vmatprep.subr.bf16.mxu0 0
        %5801 = vmatpush1.bf16.msra.mxu0 0
        %5802 = vmatprep.subr.bf16.mxu0 0
        %5803 = vmatpush1.bf16.msra.mxu0 0
        %5804 = vmatprep.mubr.bf16.mxu0 0
        %5805 = vmatmul.mubr.bf16.gmra.mrb[0].mxu0 %v5770
        %v5806 = vpop.f32.mrb[0].mxu0
        %v5807 = vadd.f32 0.0, %v5806
        %v5808 = vpop.f32.mrb[0].mxu0
        %v5809 = vadd.f32 0.0, %v5808
        %v5810 = vpop.f32.mrb[0].mxu0
        %v5811 = vpop.f32.mrb[0].mxu0
        %5812 = vdwg.mxu0
        %v5817 = vunpack.c.l.b16 %v5541
        %v5818 = vunpack.c.h.b16 %v5541
        %v5819 = vunpack.c.l.b16 %v5542
        %v5820 = vunpack.c.h.b16 %v5542
        %v5821 = vunpack.c.l.b16 %v5543
        %v5822 = vunpack.c.h.b16 %v5543
        %v5823 = vunpack.c.l.b16 %v5544
        %v5824 = vunpack.c.h.b16 %v5544
        %v5825 = vpack.c.b16 %v5819, %v5817
        %v5826 = vpack.c.b16 %v5820, %v5818
        %v5827 = vpack.c.b16 %v5823, %v5821
        %v5828 = vpack.c.b16 %v5824, %v5822
        %v5834 = vsel %vm4674, %v5521, 0
        %5836 = vmatprep.subr.bf16.mxu0 %v5826
        %5837 = vmatpush1.bf16.msra.mxu0 %v5825
        %5838 = vmatprep.subr.bf16.mxu0 %v5828
        %5839 = vmatpush1.bf16.msra.mxu0 %v5827
        %5840 = vmatprep.subr.bf16.mxu0 0
        %5841 = vmatpush1.bf16.msra.mxu0 0
        %5842 = vmatprep.subr.bf16.mxu0 0
        %5843 = vmatpush1.bf16.msra.mxu0 0
        %5844 = vmatprep.subr.bf16.mxu0 0
        %5845 = vmatpush1.bf16.msra.mxu0 0
        %5846 = vmatprep.subr.bf16.mxu0 0
        %5847 = vmatpush1.bf16.msra.mxu0 0
        %5848 = vmatprep.subr.bf16.mxu0 0
        %5849 = vmatpush1.bf16.msra.mxu0 0
        %5850 = vmatprep.subr.bf16.mxu0 0
        %5851 = vmatpush1.bf16.msra.mxu0 0
        %5852 = vmatprep.subr.bf16.mxu0 0
        %5853 = vmatpush1.bf16.msra.mxu0 0
        %5854 = vmatprep.subr.bf16.mxu0 0
        %5855 = vmatpush1.bf16.msra.mxu0 0
        %5856 = vmatprep.subr.bf16.mxu0 0
        %5857 = vmatpush1.bf16.msra.mxu0 0
        %5858 = vmatprep.subr.bf16.mxu0 0
        %5859 = vmatpush1.bf16.msra.mxu0 0
        %5860 = vmatprep.subr.bf16.mxu0 0
        %5861 = vmatpush1.bf16.msra.mxu0 0
        %5862 = vmatprep.subr.bf16.mxu0 0
        %5863 = vmatpush1.bf16.msra.mxu0 0
        %5864 = vmatprep.subr.bf16.mxu0 0
        %5865 = vmatpush1.bf16.msra.mxu0 0
        %5866 = vmatprep.subr.bf16.mxu0 0
        %5867 = vmatpush1.bf16.msra.mxu0 0
        %5868 = vmatprep.mubr.bf16.mxu0 0
        %5869 = vmatmul.mubr.bf16.gmra.mrb[0].mxu0 %v5834
        %v5870 = vpop.f32.mrb[0].mxu0
        %v5871 = vadd.f32 0.0, %v5870
        %v5872 = vpop.f32.mrb[0].mxu0
        %v5873 = vadd.f32 0.0, %v5872
        %v5874 = vpop.f32.mrb[0].mxu0
        %v5875 = vpop.f32.mrb[0].mxu0
        %5876 = vdwg.mxu0
        %v5881 = vunpack.c.l.b16 %v5545
        %v5882 = vunpack.c.h.b16 %v5545
        %v5883 = vunpack.c.l.b16 %v5546
        %v5884 = vunpack.c.h.b16 %v5546
        %v5885 = vunpack.c.l.b16 %v5547
        %v5886 = vunpack.c.h.b16 %v5547
        %v5887 = vunpack.c.l.b16 %v5548
        %v5888 = vunpack.c.h.b16 %v5548
        %v5889 = vpack.c.b16 %v5883, %v5881
        %v5890 = vpack.c.b16 %v5884, %v5882
        %v5891 = vpack.c.b16 %v5887, %v5885
        %v5892 = vpack.c.b16 %v5888, %v5886
        %v5898 = vsel %vm4674, %v5522, 0
        %5900 = vmatprep.subr.bf16.mxu0 %v5890
        %5901 = vmatpush1.bf16.msra.mxu0 %v5889
        %5902 = vmatprep.subr.bf16.mxu0 %v5892
        %5903 = vmatpush1.bf16.msra.mxu0 %v5891
        %5904 = vmatprep.subr.bf16.mxu0 0
        %5905 = vmatpush1.bf16.msra.mxu0 0
        %5906 = vmatprep.subr.bf16.mxu0 0
        %5907 = vmatpush1.bf16.msra.mxu0 0
        %5908 = vmatprep.subr.bf16.mxu0 0
        %5909 = vmatpush1.bf16.msra.mxu0 0
        %5910 = vmatprep.subr.bf16.mxu0 0
        %5911 = vmatpush1.bf16.msra.mxu0 0
        %5912 = vmatprep.subr.bf16.mxu0 0
        %5913 = vmatpush1.bf16.msra.mxu0 0
        %5914 = vmatprep.subr.bf16.mxu0 0
        %5915 = vmatpush1.bf16.msra.mxu0 0
        %5916 = vmatprep.subr.bf16.mxu0 0
        %5917 = vmatpush1.bf16.msra.mxu0 0
        %5918 = vmatprep.subr.bf16.mxu0 0
        %5919 = vmatpush1.bf16.msra.mxu0 0
        %5920 = vmatprep.subr.bf16.mxu0 0
        %5921 = vmatpush1.bf16.msra.mxu0 0
        %5922 = vmatprep.subr.bf16.mxu0 0
        %5923 = vmatpush1.bf16.msra.mxu0 0
        %5924 = vmatprep.subr.bf16.mxu0 0
        %5925 = vmatpush1.bf16.msra.mxu0 0
        %5926 = vmatprep.subr.bf16.mxu0 0
        %5927 = vmatpush1.bf16.msra.mxu0 0
        %5928 = vmatprep.subr.bf16.mxu0 0
        %5929 = vmatpush1.bf16.msra.mxu0 0
        %5930 = vmatprep.subr.bf16.mxu0 0
        %5931 = vmatpush1.bf16.msra.mxu0 0
        %5932 = vmatprep.mubr.bf16.mxu0 0
        %5933 = vmatmul.mubr.bf16.gmra.mrb[0].mxu0 %v5898
        %v5934 = vpop.f32.mrb[0].mxu0
        %v5935 = vadd.f32 0.0, %v5934
        %v5936 = vpop.f32.mrb[0].mxu0
        %v5937 = vadd.f32 0.0, %v5936
        %v5938 = vpop.f32.mrb[0].mxu0
        %v5939 = vpop.f32.mrb[0].mxu0
        %5940 = vdwg.mxu0
        %v5945 = vunpack.c.l.b16 %v5549
        %v5946 = vunpack.c.h.b16 %v5549
        %v5947 = vunpack.c.l.b16 %v5550
        %v5948 = vunpack.c.h.b16 %v5550
        %v5949 = vunpack.c.l.b16 %v5551
        %v5950 = vunpack.c.h.b16 %v5551
        %v5951 = vunpack.c.l.b16 %v5552
        %v5952 = vunpack.c.h.b16 %v5552
        %v5953 = vpack.c.b16 %v5947, %v5945
        %v5954 = vpack.c.b16 %v5948, %v5946
        %v5955 = vpack.c.b16 %v5951, %v5949
        %v5956 = vpack.c.b16 %v5952, %v5950
        %v5962 = vsel %vm4674, %v5523, 0
        %5964 = vmatprep.subr.bf16.mxu0 %v5954
        %5965 = vmatpush1.bf16.msra.mxu0 %v5953
        %5966 = vmatprep.subr.bf16.mxu0 %v5956
        %5967 = vmatpush1.bf16.msra.mxu0 %v5955
        %5968 = vmatprep.subr.bf16.mxu0 0
        %5969 = vmatpush1.bf16.msra.mxu0 0
        %5970 = vmatprep.subr.bf16.mxu0 0
        %5971 = vmatpush1.bf16.msra.mxu0 0
        %5972 = vmatprep.subr.bf16.mxu0 0
        %5973 = vmatpush1.bf16.msra.mxu0 0
        %5974 = vmatprep.subr.bf16.mxu0 0
        %5975 = vmatpush1.bf16.msra.mxu0 0
        %5976 = vmatprep.subr.bf16.mxu0 0
        %5977 = vmatpush1.bf16.msra.mxu0 0
        %5978 = vmatprep.subr.bf16.mxu0 0
        %5979 = vmatpush1.bf16.msra.mxu0 0
        %5980 = vmatprep.subr.bf16.mxu0 0
        %5981 = vmatpush1.bf16.msra.mxu0 0
        %5982 = vmatprep.subr.bf16.mxu0 0
        %5983 = vmatpush1.bf16.msra.mxu0 0
        %5984 = vmatprep.subr.bf16.mxu0 0
        %5985 = vmatpush1.bf16.msra.mxu0 0
        %5986 = vmatprep.subr.bf16.mxu0 0
        %5987 = vmatpush1.bf16.msra.mxu0 0
        %5988 = vmatprep.subr.bf16.mxu0 0
        %5989 = vmatpush1.bf16.msra.mxu0 0
        %5990 = vmatprep.subr.bf16.mxu0 0
        %5991 = vmatpush1.bf16.msra.mxu0 0
        %5992 = vmatprep.subr.bf16.mxu0 0
        %5993 = vmatpush1.bf16.msra.mxu0 0
        %5994 = vmatprep.subr.bf16.mxu0 0
        %5995 = vmatpush1.bf16.msra.mxu0 0
        %5996 = vmatprep.mubr.bf16.mxu0 0
        %5997 = vmatmul.mubr.bf16.gmra.mrb[0].mxu0 %v5962
        %v5998 = vpop.f32.mrb[0].mxu0
        %v5999 = vadd.f32 0.0, %v5998
        %v6000 = vpop.f32.mrb[0].mxu0
        %v6001 = vadd.f32 0.0, %v6000
        %v6002 = vpop.f32.mrb[0].mxu0
        %v6003 = vpop.f32.mrb[0].mxu0
        %6004 = vdwg.mxu0
        %v6009 = vunpack.c.l.b16 %v5553
        %v6010 = vunpack.c.h.b16 %v5553
        %v6011 = vunpack.c.l.b16 %v5554
        %v6012 = vunpack.c.h.b16 %v5554
        %v6013 = vunpack.c.l.b16 %v5555
        %v6014 = vunpack.c.h.b16 %v5555
        %v6015 = vunpack.c.l.b16 %v5556
        %v6016 = vunpack.c.h.b16 %v5556
        %v6017 = vpack.c.b16 %v6011, %v6009
        %v6018 = vpack.c.b16 %v6012, %v6010
        %v6019 = vpack.c.b16 %v6015, %v6013
        %v6020 = vpack.c.b16 %v6016, %v6014
        %v6026 = vsel %vm4674, %v5524, 0
        %6028 = vmatprep.subr.bf16.mxu0 %v6018
        %6029 = vmatpush1.bf16.msra.mxu0 %v6017
        %6030 = vmatprep.subr.bf16.mxu0 %v6020
        %6031 = vmatpush1.bf16.msra.mxu0 %v6019
        %6032 = vmatprep.subr.bf16.mxu0 0
        %6033 = vmatpush1.bf16.msra.mxu0 0
        %6034 = vmatprep.subr.bf16.mxu0 0
        %6035 = vmatpush1.bf16.msra.mxu0 0
        %6036 = vmatprep.subr.bf16.mxu0 0
        %6037 = vmatpush1.bf16.msra.mxu0 0
        %6038 = vmatprep.subr.bf16.mxu0 0
        %6039 = vmatpush1.bf16.msra.mxu0 0
        %6040 = vmatprep.subr.bf16.mxu0 0
        %6041 = vmatpush1.bf16.msra.mxu0 0
        %6042 = vmatprep.subr.bf16.mxu0 0
        %6043 = vmatpush1.bf16.msra.mxu0 0
        %6044 = vmatprep.subr.bf16.mxu0 0
        %6045 = vmatpush1.bf16.msra.mxu0 0
        %6046 = vmatprep.subr.bf16.mxu0 0
        %6047 = vmatpush1.bf16.msra.mxu0 0
        %6048 = vmatprep.subr.bf16.mxu0 0
        %6049 = vmatpush1.bf16.msra.mxu0 0
        %6050 = vmatprep.subr.bf16.mxu0 0
        %6051 = vmatpush1.bf16.msra.mxu0 0
        %6052 = vmatprep.subr.bf16.mxu0 0
        %6053 = vmatpush1.bf16.msra.mxu0 0
        %6054 = vmatprep.subr.bf16.mxu0 0
        %6055 = vmatpush1.bf16.msra.mxu0 0
        %6056 = vmatprep.subr.bf16.mxu0 0
        %6057 = vmatpush1.bf16.msra.mxu0 0
        %6058 = vmatprep.subr.bf16.mxu0 0
        %6059 = vmatpush1.bf16.msra.mxu0 0
        %6060 = vmatprep.mubr.bf16.mxu0 0
        %6061 = vmatmul.mubr.bf16.gmra.mrb[0].mxu0 %v6026
        %v6062 = vpop.f32.mrb[0].mxu0
        %v6063 = vadd.f32 0.0, %v6062
        %v6064 = vpop.f32.mrb[0].mxu0
        %v6065 = vadd.f32 0.0, %v6064
        %v6066 = vpop.f32.mrb[0].mxu0
        %v6067 = vpop.f32.mrb[0].mxu0
        %6068 = vdwg.mxu0
        %v6069 = vadd.f32 %v5615, %v5679
        %v6070 = vadd.f32 %v6069, %v5743
        %v6071 = vadd.f32 %v6070, %v5807
        %v6072 = vadd.f32 %v6071, %v5871
        %v6073 = vadd.f32 %v6072, %v5935
        %v6074 = vadd.f32 %v6073, %v5999
        %v6075 = vadd.f32 %v6074, %v6063
        %v6076 = vadd.f32 %v5617, %v5681
        %v6077 = vadd.f32 %v6076, %v5745
        %v6078 = vadd.f32 %v6077, %v5809
        %v6079 = vadd.f32 %v6078, %v5873
        %v6080 = vadd.f32 %v6079, %v5937
        %v6081 = vadd.f32 %v6080, %v6001
        %v6082 = vadd.f32 %v6081, %v6065
        %v6083 = vld [vmem:[%s10] sm:$0x3]
        %v6085 = vlaneseq
        %v6086 = vshrl.u32 %v6085, 7
        %v6087 = vsub.s32 0, %v6086
        %v6088 = vrot.slane %v6083, %v6087
        %v6089 = vlaneseq
        %v6090 = vshrl.u32 %v6089, 7
        %v6091 = vsub.s32 1, %v6090
        %v6092 = vrot.slane %v6083, %v6091
        %v6095 = vadd.f32 %v6075, %v6088
        %v6096 = vadd.f32 %v6082, %v6092
        %6097 = vst [vmem:[%s409] sm:$0xff] %v6095
        %6098 = vst [vmem:[%s409 + $0x8] sm:$0xff] %v6096
        %s6099 = sand.u32 %s279, 1
        %s6100 = scalar_lea.sflag [#allocation3], %s6099
        %s6101 = sand.u32 %s279, 1
        %s6102 = smul.addr %s6101, 16
        %s6103 = scalar_lea.vmem [#allocation2], %s6102
        // Predicated region
        $region65: #{multi_head_attention.1} parent=63 // pred_check
          %p6104 = pneg %p289
        $region66: #{multi_head_attention.1} parent=63 // pred_check_branch
          %6106 = sbr.rel (%p6104) target = $region68
        $region67: #{multi_head_attention.1} parent=63 // pred_region
          %s6108 = ssub.s32 256, 256
          %6109 = vsyncadd %s6100, %s6108
          %s6110 = smul.addr %s25, 2
          %s6111 = smul.addr %s6110, 128
          %s6112 = scalar_lea.hbm %s11, %s6111
          %s6114 = sshll.u32 %s6103, 4
          %s6115 = int_to_ptr.vmem [resolvable:$true] %s6114
          %6117 = dma.vmem_to_hbm [thread:$0]  %s6115, 256, %s6112, %s6100
        $region68: #{multi_head_attention.1} parent=63 // pred_fallthru
          _
      $region64: #{multi_head_attention.1} parent=5 // pred_fallthru
        _
      %p6118 = scmp.le.s32.totalorder 2, %s20
      // Predicated region
      $region69: #{multi_head_attention.1} parent=5 // pred_check
        %p6119 = pneg %p6118
      $region70: #{multi_head_attention.1} parent=5 // pred_check_branch
        %6121 = sbr.rel (%p6119) target = $region72
      $region71: #{multi_head_attention.1} parent=5 // pred_region
        %s6122 = ssub.s32 %s20, 2
        // Predicated region
        $region73: #{multi_head_attention.1} parent=71 // pred_check
          %p6123 = pneg %p295
        $region74: #{multi_head_attention.1} parent=71 // pred_check_branch
          %6125 = sbr.rel (%p6123) target = $region76
        $region75: #{multi_head_attention.1} parent=71 // pred_region
          %s6126 = sand.u32 %s280, 1
          %s6127 = scalar_lea.sflag [#allocation3], %s6126
          %s6128 = sand.u32 %s280, 1
          %s6129 = smul.addr %s6128, 16
          %s6130 = scalar_lea.vmem [#allocation2], %s6129
          %6131 = dma.done %s6127, 256
        $region76: #{multi_head_attention.1} parent=71 // pred_fallthru
          _
      $region72: #{multi_head_attention.1} parent=5 // pred_fallthru
        _
    $region6: #{multi_head_attention.1} parent=1 // loop_footer
      %s24 = sadd.s32 1, %s20
    $region7: #{multi_head_attention.1} parent=1 // loop_footer_branch
      %19 = sbr.rel target = $region3
    $region8: #{multi_head_attention.1} parent=1 // loop_exit
      _
    %6132 = vsyncpa [#allocation3], 1
    %s6133 = scalar_lea.sflag [#allocation3], 1
    %6134 = vsyncpa %s6133, 1

</llo_original>
